<compile_context>
chip_gen: v7x
topology: tpu7x:2x2x1
jax: 0.10.0
libtpu: 0.0.40
codegen_flags: <defaults>
</compile_context>

<pallas_src>
import functools

import jax
import jax.numpy as jnp
from jax.experimental import pallas as pl
from jax.experimental.pallas import tpu as pltpu


# ----------------------------------------------------------------------------
# Shared math helpers (usable inside and outside Pallas kernels)
# ----------------------------------------------------------------------------
def _mish(x):
    # mish(x) = x * tanh(softplus(x)); numerically stable softplus
    return x * jnp.tanh(jnp.logaddexp(x, 0.0))


def _film_embed(cond, cw, cb, out_c):
    """cond_encoder: Mish -> Linear, computed for the whole batch in XLA."""
    cm = _mish(cond.astype(jnp.float32)).astype(jnp.bfloat16)
    emb = jnp.einsum("bd,cd->bc", cm, cw.astype(jnp.bfloat16),
                     preferred_element_type=jnp.float32) + cb[None, :]
    return emb[:, :out_c], emb[:, out_c:]          # scale, bias  (B, out_c) each


# ----------------------------------------------------------------------------
# Fused residual-block kernel (one batch element per grid step)
# ----------------------------------------------------------------------------
def _crb_kernel(*refs, K, use_res_conv):
    if use_res_conv:
        (x_ref, s_ref, w0_ref, b0_ref, g0_ref, bt0_ref, sc_ref, bi_ref,
         w1_ref, b1_ref, g1_ref, bt1_ref, gm_ref, rw_ref, rb_ref, o_ref) = refs
    else:
        (x_ref, s_ref, w0_ref, b0_ref, g0_ref, bt0_ref, sc_ref, bi_ref,
         w1_ref, b1_ref, g1_ref, bt1_ref, gm_ref, o_ref) = refs
        rw_ref = rb_ref = None

    f32 = jnp.float32
    bf16 = jnp.bfloat16
    gm = gm_ref[...]                               # (C, C) f32 group-avg matrix

    def conv(inp_bf16, w_ref, b_ref):
        """Same-padded Conv1d on a (T, Cin) bf16 tile -> (T, Cout) f32."""
        cout = w_ref.shape[2]
        acc = jnp.zeros((inp_bf16.shape[0], cout), f32)
        for k in range(K):                         # K small, unrolled
            # Exact zero-padded row shift via 0/1 matrix (MXU), stays bf16-exact.
            shifted = jnp.dot(s_ref[k], inp_bf16,
                              preferred_element_type=f32).astype(bf16)
            acc = acc + jnp.dot(shifted, w_ref[k], preferred_element_type=f32)
        return acc + b_ref[...]                    # (1, Cout) broadcast

    def gnorm(a, gamma_ref, beta_ref):
        """GroupNorm over (T, channels-in-group), f32, centered two-pass."""
        mean = jnp.sum(jnp.dot(a, gm, preferred_element_type=f32),
                       axis=0, keepdims=True)                       # (1, C)
        cent = a - mean
        var = jnp.sum(jnp.dot(cent * cent, gm, preferred_element_type=f32),
                      axis=0, keepdims=True)
        return cent * jax.lax.rsqrt(var + 1e-5) * gamma_ref[...] + beta_ref[...]

    x = x_ref[0]                                   # (T, Cin) f32
    xb = x.astype(bf16)

    # block 0: conv -> GN -> Mish
    h = _mish(gnorm(conv(xb, w0_ref, b0_ref), g0_ref, bt0_ref))
    # FiLM epilogue (cond_predict_scale=True): scale * h + bias
    h = sc_ref[0] * h + bi_ref[0]
    # block 1: conv -> GN -> Mish
    y = _mish(gnorm(conv(h.astype(bf16), w1_ref, b1_ref), g1_ref, bt1_ref))

    # residual connection
    if use_res_conv:
        res = jnp.dot(xb, rw_ref[...], preferred_element_type=f32) + rb_ref[...]
    else:
        res = x                                    # identity (Cin == Cout)

    o_ref[0] = (y + res).astype(o_ref.dtype)


# ----------------------------------------------------------------------------
# Wrapper: PyTorch-style NCL in / NCL out, one pallas_call per block
# ----------------------------------------------------------------------------
def cond_res_block_1d(x, cond, params, *, n_groups=8):
    """x: (B, in_c, T), cond: (B, cond_dim) -> (B, out_c, T)."""
    w0, w1 = params["w0"], params["w1"]
    B, Cin, T = x.shape
    Cout, _, K = w0.shape
    pad = K // 2
    cpg = Cout // n_groups
    bf16 = jnp.bfloat16

    # ---- layout plumbing (constant-folded under jit) ----
    x_nlc = jnp.swapaxes(x, 1, 2).astype(jnp.float32)          # (B, T, Cin)

    # tap-shift matrices: S[k, t, t'] = 1 iff t' == t + k - pad (zero-pad conv)
    t_idx = jnp.arange(T)
    s = jnp.stack([(t_idx[:, None] + (k - pad)) == t_idx[None, :]
                   for k in range(K)], axis=0).astype(bf16)    # (K, T, T)

    # group-averaging matrix: gm[j, i] = [group(j) == group(i)] / (cpg * T)
    gid = jnp.arange(Cout) // cpg
    gm = (gid[:, None] == gid[None, :]).astype(jnp.float32) / float(cpg * T)

    w0k = jnp.transpose(w0, (2, 1, 0)).astype(bf16)            # (K, Cin, Cout)
    w1k = jnp.transpose(w1, (2, 1, 0)).astype(bf16)            # (K, Cout, Cout)

    scale, bias = _film_embed(cond, params["cw"], params["cb"], Cout)
    scale = scale.reshape(B, 1, Cout)
    bias = bias.reshape(B, 1, Cout)

    def row(v):
        return jnp.asarray(v, jnp.float32).reshape(1, Cout)

    args = [x_nlc, s, w0k, row(params["b0"]), row(params["g0"]), row(params["bt0"]),
            scale, bias, w1k, row(params["b1"]), row(params["g1"]), row(params["bt1"]),
            gm]
    in_specs = [
        pl.BlockSpec((1, T, Cin), lambda i: (i, 0, 0)),        # x
        pl.BlockSpec((K, T, T), lambda i: (0, 0, 0)),          # tap shifts
        pl.BlockSpec((K, Cin, Cout), lambda i: (0, 0, 0)),     # w0
        pl.BlockSpec((1, Cout), lambda i: (0, 0)),             # b0
        pl.BlockSpec((1, Cout), lambda i: (0, 0)),             # g0
        pl.BlockSpec((1, Cout), lambda i: (0, 0)),             # bt0
        pl.BlockSpec((1, 1, Cout), lambda i: (i, 0, 0)),       # FiLM scale
        pl.BlockSpec((1, 1, Cout), lambda i: (i, 0, 0)),       # FiLM bias
        pl.BlockSpec((K, Cout, Cout), lambda i: (0, 0, 0)),    # w1
        pl.BlockSpec((1, Cout), lambda i: (0, 0)),             # b1
        pl.BlockSpec((1, Cout), lambda i: (0, 0)),             # g1
        pl.BlockSpec((1, Cout), lambda i: (0, 0)),             # bt1
        pl.BlockSpec((Cout, Cout), lambda i: (0, 0)),          # group-avg matrix
    ]

    use_res_conv = params.get("rw", None) is not None
    if use_res_conv:
        args += [params["rw"][:, :, 0].T.astype(bf16),         # (Cin, Cout)
                 row(params["rb"])]
        in_specs += [pl.BlockSpec((Cin, Cout), lambda i: (0, 0)),
                     pl.BlockSpec((1, Cout), lambda i: (0, 0))]

    out_nlc = pl.pallas_call(
        functools.partial(_crb_kernel, K=K, use_res_conv=use_res_conv),
        out_shape=jax.ShapeDtypeStruct((B, T, Cout), jnp.float32),
        grid=(B,),
        in_specs=in_specs,
        out_specs=pl.BlockSpec((1, T, Cout), lambda i: (i, 0, 0)),
        compiler_params=pltpu.CompilerParams(
            dimension_semantics=("parallel",),
            # headroom for real diffusion-policy widths; re-derive / tile Cout
            # if 2 * (K, C, C) bf16 weights stop fitting the 64 MiB v7x budget.
            vmem_limit_bytes=32 * 1024 * 1024),
    )(*args)
    return jnp.swapaxes(out_nlc, 1, 2)                         # back to NCL


# ----------------------------------------------------------------------------
# Pure-JAX reference (same bf16 cast points) for verification
# ----------------------------------------------------------------------------
def cond_res_block_1d_reference(x, cond, params, *, n_groups=8):
    w0 = params["w0"]
    Cout, _, K = w0.shape
    pad = K // 2
    bf16 = jnp.bfloat16
    B, _, T = x.shape
    xl = jnp.swapaxes(x, 1, 2).astype(jnp.float32)             # (B, T, Cin)
    xb = xl.astype(bf16)

    def conv(inp_b, w, b):
        wk = jnp.transpose(w, (2, 1, 0)).astype(bf16)          # (K, C, Cout)
        padded = jnp.pad(inp_b, ((0, 0), (pad, pad), (0, 0)))
        acc = jnp.zeros((B, T, w.shape[0]), jnp.float32)
        for k in range(K):
            acc = acc + jnp.einsum("btc,cd->btd", padded[:, k:k + T, :], wk[k],
                                   preferred_element_type=jnp.float32)
        return acc + b.reshape(1, 1, -1)

    def gnorm(a, gamma, beta):
        C = a.shape[-1]
        g = a.reshape(B, T, n_groups, C // n_groups)
        mean = jnp.mean(g, axis=(1, 3), keepdims=True)
        cent = g - mean
        var = jnp.mean(cent * cent, axis=(1, 3), keepdims=True)
        out = (cent * jax.lax.rsqrt(var + 1e-5)).reshape(B, T, C)
        return out * gamma.reshape(1, 1, C) + beta.reshape(1, 1, C)

    h = _mish(gnorm(conv(xb, params["w0"], params["b0"]), params["g0"], params["bt0"]))
    scale, bias = _film_embed(cond, params["cw"], params["cb"], Cout)
    h = scale[:, None, :] * h + bias[:, None, :]
    y = _mish(gnorm(conv(h.astype(bf16), params["w1"], params["b1"]),
                    params["g1"], params["bt1"]))
    if params.get("rw", None) is not None:
        res = jnp.einsum("btc,dc->btd", xb, params["rw"][:, :, 0].astype(bf16),
                         preferred_element_type=jnp.float32) + params["rb"].reshape(1, 1, -1)
    else:
        res = xl
    return jnp.swapaxes(y + res, 1, 2)


# ----------------------------------------------------------------------------
# Deterministic synthetic parameters
# ----------------------------------------------------------------------------
def init_block_params(key, in_c, out_c, cond_dim, K, scale=0.05):
    ks = jax.random.split(key, 10)
    p = {
        "w0": scale * jax.random.normal(ks[0], (out_c, in_c, K), jnp.float32),
        "b0": scale * jax.random.normal(ks[1], (out_c,), jnp.float32),
        "g0": 1.0 + 0.1 * jax.random.normal(ks[2], (out_c,), jnp.float32),
        "bt0": 0.1 * jax.random.normal(ks[3], (out_c,), jnp.float32),
        "w1": scale * jax.random.normal(ks[4], (out_c, out_c, K), jnp.float32),
        "b1": scale * jax.random.normal(ks[5], (out_c,), jnp.float32),
        "g1": 1.0 + 0.1 * jax.random.normal(ks[6], (out_c,), jnp.float32),
        "bt1": 0.1 * jax.random.normal(ks[7], (out_c,), jnp.float32),
        "cw": scale * jax.random.normal(ks[8], (2 * out_c, cond_dim), jnp.float32),
        "cb": scale * jax.random.normal(ks[9], (2 * out_c,), jnp.float32),
    }
    if in_c != out_c:
        kr = jax.random.fold_in(key, 123)
        p["rw"] = scale * jax.random.normal(kr, (out_c, in_c, 1), jnp.float32)
        p["rb"] = scale * jax.random.normal(jax.random.fold_in(kr, 1), (out_c,), jnp.float32)
    else:
        p["rw"], p["rb"] = None, None
    return p


# ----------------------------------------------------------------------------
if __name__ == "__main__":
    B, T = 2, 16
    in_c, out_c, cond_dim, K, n_groups = 4, 32, 16, 5, 8

    key = jax.random.PRNGKey(0)
    k1, k2, k3, k4 = jax.random.split(key, 4)
    p1 = init_block_params(k1, in_c, out_c, cond_dim, K)       # 4 -> 32 (res conv)
    p2 = init_block_params(k2, out_c, out_c, cond_dim, K)      # 32 -> 32 (identity)
    x = jax.random.normal(k3, (B, in_c, T), jnp.float32)
    cond = jax.random.normal(k4, (B, cond_dim), jnp.float32)

    fwd = jax.jit(lambda xx, cc: cond_res_block_1d(
        cond_res_block_1d(xx, cc, p1, n_groups=n_groups), cc, p2, n_groups=n_groups))
    ref = jax.jit(lambda xx, cc: cond_res_block_1d_reference(
        cond_res_block_1d_reference(xx, cc, p1, n_groups=n_groups), cc, p2,
        n_groups=n_groups))

    out = fwd(x, cond)
    jax.block_until_ready(out)
    expect = ref(x, cond)
    jax.block_until_ready(expect)

    assert out.shape == (B, out_c, T), out.shape
    assert bool(jnp.all(jnp.isfinite(out)))
    max_err = float(jnp.max(jnp.abs(out - expect)))
    assert max_err < 3e-2, f"mismatch vs reference: max abs err {max_err}"
    print("KERNEL_OK")
</pallas_src>

<mosaic_0001>
module attributes {stable_mosaic.version = 11 : i64} {
  func.func @_crb_kernel(%arg0: i32, %arg1: memref<1x16x32xf32, #tpu.memory_space<vmem>>, %arg2: memref<5x16x16xbf16, #tpu.memory_space<vmem>>, %arg3: memref<5x32x32xbf16, #tpu.memory_space<vmem>>, %arg4: memref<1x32xf32, #tpu.memory_space<vmem>>, %arg5: memref<1x32xf32, #tpu.memory_space<vmem>>, %arg6: memref<1x32xf32, #tpu.memory_space<vmem>>, %arg7: memref<1x1x32xf32, #tpu.memory_space<vmem>>, %arg8: memref<1x1x32xf32, #tpu.memory_space<vmem>>, %arg9: memref<5x32x32xbf16, #tpu.memory_space<vmem>>, %arg10: memref<1x32xf32, #tpu.memory_space<vmem>>, %arg11: memref<1x32xf32, #tpu.memory_space<vmem>>, %arg12: memref<1x32xf32, #tpu.memory_space<vmem>>, %arg13: memref<32x32xf32, #tpu.memory_space<vmem>>, %arg14: memref<1x16x32xf32, #tpu.memory_space<vmem>>) attributes {dimension_semantics = [#tpu.dimension_semantics<parallel>], iteration_bounds = array<i64: 2>, scalar_prefetch = 0 : i64, scratch_operands = 0 : i64, tpu.core_type = #tpu.core_type<tc>, window_params = [{transform_indices = @transform_0, window_bounds = array<i64: 1, 16, 32>}, {pipeline_mode = #tpu.pipeline_mode<synchronous>, transform_indices = @transform_1, window_bounds = array<i64: 5, 16, 16>}, {pipeline_mode = #tpu.pipeline_mode<synchronous>, transform_indices = @transform_2, window_bounds = array<i64: 5, 32, 32>}, {pipeline_mode = #tpu.pipeline_mode<synchronous>, transform_indices = @transform_3, window_bounds = array<i64: 1, 32>}, {pipeline_mode = #tpu.pipeline_mode<synchronous>, transform_indices = @transform_4, window_bounds = array<i64: 1, 32>}, {pipeline_mode = #tpu.pipeline_mode<synchronous>, transform_indices = @transform_5, window_bounds = array<i64: 1, 32>}, {transform_indices = @transform_6, window_bounds = array<i64: 1, 1, 32>}, {transform_indices = @transform_7, window_bounds = array<i64: 1, 1, 32>}, {pipeline_mode = #tpu.pipeline_mode<synchronous>, transform_indices = @transform_8, window_bounds = array<i64: 5, 32, 32>}, {pipeline_mode = #tpu.pipeline_mode<synchronous>, transform_indices = @transform_9, window_bounds = array<i64: 1, 32>}, {pipeline_mode = #tpu.pipeline_mode<synchronous>, transform_indices = @transform_10, window_bounds = array<i64: 1, 32>}, {pipeline_mode = #tpu.pipeline_mode<synchronous>, transform_indices = @transform_11, window_bounds = array<i64: 1, 32>}, {pipeline_mode = #tpu.pipeline_mode<synchronous>, transform_indices = @transform_12, window_bounds = array<i64: 32, 32>}, {transform_indices = @transform_13, window_bounds = array<i64: 1, 16, 32>}]} {
    %c0 = arith.constant 0 : index
    %c0_0 = arith.constant 0 : index
    %0 = vector.load %arg13[%c0, %c0_0] : memref<32x32xf32, #tpu.memory_space<vmem>>, vector<32x32xf32>
    %c0_1 = arith.constant 0 : index
    %c0_2 = arith.constant 0 : index
    %c0_3 = arith.constant 0 : index
    %1 = vector.load %arg1[%c0_1, %c0_2, %c0_3] : memref<1x16x32xf32, #tpu.memory_space<vmem>>, vector<1x16x32xf32>
    %2 = vector.shape_cast %1 : vector<1x16x32xf32> to vector<16x32xf32>
    %3 = arith.truncf %2 : vector<16x32xf32> to vector<16x32xbf16>
    %cst = arith.constant 0.000000e+00 : f32
    %4 = vector.broadcast %cst : f32 to vector<16x32xf32>
    %c0_4 = arith.constant 0 : index
    %c0_5 = arith.constant 0 : index
    %c0_6 = arith.constant 0 : index
    %5 = vector.load %arg2[%c0_4, %c0_5, %c0_6] : memref<5x16x16xbf16, #tpu.memory_space<vmem>>, vector<1x16x16xbf16>
    %6 = vector.shape_cast %5 : vector<1x16x16xbf16> to vector<16x16xbf16>
    %cst_7 = arith.constant dense<0.000000e+00> : vector<16x32xf32>
    %7 = tpu.matmul %6, %3, %cst_7 {dimension_numbers = #tpu.dot_dimension_numbers<[1], [0], [0], [1], [0, 0, 1, 1], [], []>} : vector<16x16xbf16>, vector<16x32xbf16>, vector<16x32xf32> -> vector<16x32xf32>
    %8 = arith.truncf %7 : vector<16x32xf32> to vector<16x32xbf16>
    %c0_8 = arith.constant 0 : index
    %c0_9 = arith.constant 0 : index
    %c0_10 = arith.constant 0 : index
    %9 = vector.load %arg3[%c0_8, %c0_9, %c0_10] : memref<5x32x32xbf16, #tpu.memory_space<vmem>>, vector<1x32x32xbf16>
    %10 = vector.shape_cast %9 : vector<1x32x32xbf16> to vector<32x32xbf16>
    %cst_11 = arith.constant dense<0.000000e+00> : vector<16x32xf32>
    %11 = tpu.matmul %8, %10, %cst_11 {dimension_numbers = #tpu.dot_dimension_numbers<[1], [0], [0], [1], [0, 0, 1, 1], [], []>} : vector<16x32xbf16>, vector<32x32xbf16>, vector<16x32xf32> -> vector<16x32xf32>
    %12 = arith.addf %4, %11 : vector<16x32xf32>
    %c1 = arith.constant 1 : index
    %c0_12 = arith.constant 0 : index
    %c0_13 = arith.constant 0 : index
    %13 = vector.load %arg2[%c1, %c0_12, %c0_13] : memref<5x16x16xbf16, #tpu.memory_space<vmem>>, vector<1x16x16xbf16>
    %14 = vector.shape_cast %13 : vector<1x16x16xbf16> to vector<16x16xbf16>
    %cst_14 = arith.constant dense<0.000000e+00> : vector<16x32xf32>
    %15 = tpu.matmul %14, %3, %cst_14 {dimension_numbers = #tpu.dot_dimension_numbers<[1], [0], [0], [1], [0, 0, 1, 1], [], []>} : vector<16x16xbf16>, vector<16x32xbf16>, vector<16x32xf32> -> vector<16x32xf32>
    %16 = arith.truncf %15 : vector<16x32xf32> to vector<16x32xbf16>
    %c1_15 = arith.constant 1 : index
    %c0_16 = arith.constant 0 : index
    %c0_17 = arith.constant 0 : index
    %17 = vector.load %arg3[%c1_15, %c0_16, %c0_17] : memref<5x32x32xbf16, #tpu.memory_space<vmem>>, vector<1x32x32xbf16>
    %18 = vector.shape_cast %17 : vector<1x32x32xbf16> to vector<32x32xbf16>
    %cst_18 = arith.constant dense<0.000000e+00> : vector<16x32xf32>
    %19 = tpu.matmul %16, %18, %cst_18 {dimension_numbers = #tpu.dot_dimension_numbers<[1], [0], [0], [1], [0, 0, 1, 1], [], []>} : vector<16x32xbf16>, vector<32x32xbf16>, vector<16x32xf32> -> vector<16x32xf32>
    %20 = arith.addf %12, %19 : vector<16x32xf32>
    %c2 = arith.constant 2 : index
    %c0_19 = arith.constant 0 : index
    %c0_20 = arith.constant 0 : index
    %21 = vector.load %arg2[%c2, %c0_19, %c0_20] : memref<5x16x16xbf16, #tpu.memory_space<vmem>>, vector<1x16x16xbf16>
    %22 = vector.shape_cast %21 : vector<1x16x16xbf16> to vector<16x16xbf16>
    %cst_21 = arith.constant dense<0.000000e+00> : vector<16x32xf32>
    %23 = tpu.matmul %22, %3, %cst_21 {dimension_numbers = #tpu.dot_dimension_numbers<[1], [0], [0], [1], [0, 0, 1, 1], [], []>} : vector<16x16xbf16>, vector<16x32xbf16>, vector<16x32xf32> -> vector<16x32xf32>
    %24 = arith.truncf %23 : vector<16x32xf32> to vector<16x32xbf16>
    %c2_22 = arith.constant 2 : index
    %c0_23 = arith.constant 0 : index
    %c0_24 = arith.constant 0 : index
    %25 = vector.load %arg3[%c2_22, %c0_23, %c0_24] : memref<5x32x32xbf16, #tpu.memory_space<vmem>>, vector<1x32x32xbf16>
    %26 = vector.shape_cast %25 : vector<1x32x32xbf16> to vector<32x32xbf16>
    %cst_25 = arith.constant dense<0.000000e+00> : vector<16x32xf32>
    %27 = tpu.matmul %24, %26, %cst_25 {dimension_numbers = #tpu.dot_dimension_numbers<[1], [0], [0], [1], [0, 0, 1, 1], [], []>} : vector<16x32xbf16>, vector<32x32xbf16>, vector<16x32xf32> -> vector<16x32xf32>
    %28 = arith.addf %20, %27 : vector<16x32xf32>
    %c3 = arith.constant 3 : index
    %c0_26 = arith.constant 0 : index
    %c0_27 = arith.constant 0 : index
    %29 = vector.load %arg2[%c3, %c0_26, %c0_27] : memref<5x16x16xbf16, #tpu.memory_space<vmem>>, vector<1x16x16xbf16>
    %30 = vector.shape_cast %29 : vector<1x16x16xbf16> to vector<16x16xbf16>
    %cst_28 = arith.constant dense<0.000000e+00> : vector<16x32xf32>
    %31 = tpu.matmul %30, %3, %cst_28 {dimension_numbers = #tpu.dot_dimension_numbers<[1], [0], [0], [1], [0, 0, 1, 1], [], []>} : vector<16x16xbf16>, vector<16x32xbf16>, vector<16x32xf32> -> vector<16x32xf32>
    %32 = arith.truncf %31 : vector<16x32xf32> to vector<16x32xbf16>
    %c3_29 = arith.constant 3 : index
    %c0_30 = arith.constant 0 : index
    %c0_31 = arith.constant 0 : index
    %33 = vector.load %arg3[%c3_29, %c0_30, %c0_31] : memref<5x32x32xbf16, #tpu.memory_space<vmem>>, vector<1x32x32xbf16>
    %34 = vector.shape_cast %33 : vector<1x32x32xbf16> to vector<32x32xbf16>
    %cst_32 = arith.constant dense<0.000000e+00> : vector<16x32xf32>
    %35 = tpu.matmul %32, %34, %cst_32 {dimension_numbers = #tpu.dot_dimension_numbers<[1], [0], [0], [1], [0, 0, 1, 1], [], []>} : vector<16x32xbf16>, vector<32x32xbf16>, vector<16x32xf32> -> vector<16x32xf32>
    %36 = arith.addf %28, %35 : vector<16x32xf32>
    %c4 = arith.constant 4 : index
    %c0_33 = arith.constant 0 : index
    %c0_34 = arith.constant 0 : index
    %37 = vector.load %arg2[%c4, %c0_33, %c0_34] : memref<5x16x16xbf16, #tpu.memory_space<vmem>>, vector<1x16x16xbf16>
    %38 = vector.shape_cast %37 : vector<1x16x16xbf16> to vector<16x16xbf16>
    %cst_35 = arith.constant dense<0.000000e+00> : vector<16x32xf32>
    %39 = tpu.matmul %38, %3, %cst_35 {dimension_numbers = #tpu.dot_dimension_numbers<[1], [0], [0], [1], [0, 0, 1, 1], [], []>} : vector<16x16xbf16>, vector<16x32xbf16>, vector<16x32xf32> -> vector<16x32xf32>
    %40 = arith.truncf %39 : vector<16x32xf32> to vector<16x32xbf16>
    %c4_36 = arith.constant 4 : index
    %c0_37 = arith.constant 0 : index
    %c0_38 = arith.constant 0 : index
    %41 = vector.load %arg3[%c4_36, %c0_37, %c0_38] : memref<5x32x32xbf16, #tpu.memory_space<vmem>>, vector<1x32x32xbf16>
    %42 = vector.shape_cast %41 : vector<1x32x32xbf16> to vector<32x32xbf16>
    %cst_39 = arith.constant dense<0.000000e+00> : vector<16x32xf32>
    %43 = tpu.matmul %40, %42, %cst_39 {dimension_numbers = #tpu.dot_dimension_numbers<[1], [0], [0], [1], [0, 0, 1, 1], [], []>} : vector<16x32xbf16>, vector<32x32xbf16>, vector<16x32xf32> -> vector<16x32xf32>
    %44 = arith.addf %36, %43 : vector<16x32xf32>
    %c0_40 = arith.constant 0 : index
    %c0_41 = arith.constant 0 : index
    %45 = vector.load %arg4[%c0_40, %c0_41] : memref<1x32xf32, #tpu.memory_space<vmem>>, vector<1x32xf32>
    %46 = vector.broadcast %45 : vector<1x32xf32> to vector<16x32xf32>
    %47 = arith.addf %44, %46 : vector<16x32xf32>
    %cst_42 = arith.constant dense<0.000000e+00> : vector<16x32xf32>
    %48 = tpu.matmul %47, %0, %cst_42 {dimension_numbers = #tpu.dot_dimension_numbers<[1], [0], [0], [1], [0, 0, 1, 1], [], []>} : vector<16x32xf32>, vector<32x32xf32>, vector<16x32xf32> -> vector<16x32xf32>
    %cst_43 = arith.constant dense<0.000000e+00> : vector<32xf32>
    %49 = vector.multi_reduction <add>, %48, %cst_43 [0] : vector<16x32xf32> to vector<32xf32>
    %50 = vector.shape_cast %49 : vector<32xf32> to vector<1x32xf32>
    %51 = vector.broadcast %50 : vector<1x32xf32> to vector<16x32xf32>
    %52 = arith.subf %47, %51 : vector<16x32xf32>
    %53 = arith.mulf %52, %52 : vector<16x32xf32>
    %cst_44 = arith.constant dense<0.000000e+00> : vector<16x32xf32>
    %54 = tpu.matmul %53, %0, %cst_44 {dimension_numbers = #tpu.dot_dimension_numbers<[1], [0], [0], [1], [0, 0, 1, 1], [], []>} : vector<16x32xf32>, vector<32x32xf32>, vector<16x32xf32> -> vector<16x32xf32>
    %cst_45 = arith.constant dense<0.000000e+00> : vector<32xf32>
    %55 = vector.multi_reduction <add>, %54, %cst_45 [0] : vector<16x32xf32> to vector<32xf32>
    %56 = vector.shape_cast %55 : vector<32xf32> to vector<1x32xf32>
    %cst_46 = arith.constant 9.99999974E-6 : f32
    %57 = vector.broadcast %cst_46 : f32 to vector<1x32xf32>
    %58 = arith.addf %56, %57 : vector<1x32xf32>
    %59 = math.rsqrt %58 : vector<1x32xf32>
    %60 = vector.broadcast %59 : vector<1x32xf32> to vector<16x32xf32>
    %61 = arith.mulf %52, %60 : vector<16x32xf32>
    %c0_47 = arith.constant 0 : index
    %c0_48 = arith.constant 0 : index
    %62 = vector.load %arg5[%c0_47, %c0_48] : memref<1x32xf32, #tpu.memory_space<vmem>>, vector<1x32xf32>
    %63 = vector.broadcast %62 : vector<1x32xf32> to vector<16x32xf32>
    %64 = arith.mulf %61, %63 : vector<16x32xf32>
    %c0_49 = arith.constant 0 : index
    %c0_50 = arith.constant 0 : index
    %65 = vector.load %arg6[%c0_49, %c0_50] : memref<1x32xf32, #tpu.memory_space<vmem>>, vector<1x32xf32>
    %66 = vector.broadcast %65 : vector<1x32xf32> to vector<16x32xf32>
    %67 = arith.addf %64, %66 : vector<16x32xf32>
    %cst_51 = arith.constant 0.000000e+00 : f32
    %68 = vector.broadcast %cst_51 : f32 to vector<16x32xf32>
    %69 = arith.maximumf %67, %68 : vector<16x32xf32>
    %70 = vector.broadcast %cst_51 : f32 to vector<16x32xf32>
    %71 = arith.subf %67, %70 : vector<16x32xf32>
    %72 = arith.cmpf one, %71, %71 : vector<16x32xf32>
    %73 = vector.broadcast %cst_51 : f32 to vector<16x32xf32>
    %74 = arith.addf %67, %73 : vector<16x32xf32>
    %75 = math.absf %71 : vector<16x32xf32>
    %cst_52 = arith.constant 0.000000e+00 : f32
    %76 = vector.broadcast %cst_52 : f32 to vector<16x32xf32>
    %77 = arith.subf %76, %75 : vector<16x32xf32>
    %78 = math.exp %77 : vector<16x32xf32>
    %79 = math.log1p %78 : vector<16x32xf32>
    %80 = arith.addf %69, %79 : vector<16x32xf32>
    %81 = arith.select %72, %74, %80 : vector<16x32xi1>, vector<16x32xf32>
    %82 = math.tanh %81 : vector<16x32xf32>
    %83 = arith.mulf %67, %82 : vector<16x32xf32>
    %c0_53 = arith.constant 0 : index
    %c0_54 = arith.constant 0 : index
    %c0_55 = arith.constant 0 : index
    %84 = vector.load %arg7[%c0_53, %c0_54, %c0_55] : memref<1x1x32xf32, #tpu.memory_space<vmem>>, vector<1x1x32xf32>
    %85 = vector.shape_cast %84 : vector<1x1x32xf32> to vector<1x32xf32>
    %86 = vector.broadcast %85 : vector<1x32xf32> to vector<16x32xf32>
    %87 = arith.mulf %86, %83 : vector<16x32xf32>
    %c0_56 = arith.constant 0 : index
    %c0_57 = arith.constant 0 : index
    %c0_58 = arith.constant 0 : index
    %88 = vector.load %arg8[%c0_56, %c0_57, %c0_58] : memref<1x1x32xf32, #tpu.memory_space<vmem>>, vector<1x1x32xf32>
    %89 = vector.shape_cast %88 : vector<1x1x32xf32> to vector<1x32xf32>
    %90 = vector.broadcast %89 : vector<1x32xf32> to vector<16x32xf32>
    %91 = arith.addf %87, %90 : vector<16x32xf32>
    %92 = arith.truncf %91 : vector<16x32xf32> to vector<16x32xbf16>
    %cst_59 = arith.constant 0.000000e+00 : f32
    %93 = vector.broadcast %cst_59 : f32 to vector<16x32xf32>
    %c0_60 = arith.constant 0 : index
    %c0_61 = arith.constant 0 : index
    %c0_62 = arith.constant 0 : index
    %94 = vector.load %arg2[%c0_60, %c0_61, %c0_62] : memref<5x16x16xbf16, #tpu.memory_space<vmem>>, vector<1x16x16xbf16>
    %95 = vector.shape_cast %94 : vector<1x16x16xbf16> to vector<16x16xbf16>
    %cst_63 = arith.constant dense<0.000000e+00> : vector<16x32xf32>
    %96 = tpu.matmul %95, %92, %cst_63 {dimension_numbers = #tpu.dot_dimension_numbers<[1], [0], [0], [1], [0, 0, 1, 1], [], []>} : vector<16x16xbf16>, vector<16x32xbf16>, vector<16x32xf32> -> vector<16x32xf32>
    %97 = arith.truncf %96 : vector<16x32xf32> to vector<16x32xbf16>
    %c0_64 = arith.constant 0 : index
    %c0_65 = arith.constant 0 : index
    %c0_66 = arith.constant 0 : index
    %98 = vector.load %arg9[%c0_64, %c0_65, %c0_66] : memref<5x32x32xbf16, #tpu.memory_space<vmem>>, vector<1x32x32xbf16>
    %99 = vector.shape_cast %98 : vector<1x32x32xbf16> to vector<32x32xbf16>
    %cst_67 = arith.constant dense<0.000000e+00> : vector<16x32xf32>
    %100 = tpu.matmul %97, %99, %cst_67 {dimension_numbers = #tpu.dot_dimension_numbers<[1], [0], [0], [1], [0, 0, 1, 1], [], []>} : vector<16x32xbf16>, vector<32x32xbf16>, vector<16x32xf32> -> vector<16x32xf32>
    %101 = arith.addf %93, %100 : vector<16x32xf32>
    %c1_68 = arith.constant 1 : index
    %c0_69 = arith.constant 0 : index
    %c0_70 = arith.constant 0 : index
    %102 = vector.load %arg2[%c1_68, %c0_69, %c0_70] : memref<5x16x16xbf16, #tpu.memory_space<vmem>>, vector<1x16x16xbf16>
    %103 = vector.shape_cast %102 : vector<1x16x16xbf16> to vector<16x16xbf16>
    %cst_71 = arith.constant dense<0.000000e+00> : vector<16x32xf32>
    %104 = tpu.matmul %103, %92, %cst_71 {dimension_numbers = #tpu.dot_dimension_numbers<[1], [0], [0], [1], [0, 0, 1, 1], [], []>} : vector<16x16xbf16>, vector<16x32xbf16>, vector<16x32xf32> -> vector<16x32xf32>
    %105 = arith.truncf %104 : vector<16x32xf32> to vector<16x32xbf16>
    %c1_72 = arith.constant 1 : index
    %c0_73 = arith.constant 0 : index
    %c0_74 = arith.constant 0 : index
    %106 = vector.load %arg9[%c1_72, %c0_73, %c0_74] : memref<5x32x32xbf16, #tpu.memory_space<vmem>>, vector<1x32x32xbf16>
    %107 = vector.shape_cast %106 : vector<1x32x32xbf16> to vector<32x32xbf16>
    %cst_75 = arith.constant dense<0.000000e+00> : vector<16x32xf32>
    %108 = tpu.matmul %105, %107, %cst_75 {dimension_numbers = #tpu.dot_dimension_numbers<[1], [0], [0], [1], [0, 0, 1, 1], [], []>} : vector<16x32xbf16>, vector<32x32xbf16>, vector<16x32xf32> -> vector<16x32xf32>
    %109 = arith.addf %101, %108 : vector<16x32xf32>
    %c2_76 = arith.constant 2 : index
    %c0_77 = arith.constant 0 : index
    %c0_78 = arith.constant 0 : index
    %110 = vector.load %arg2[%c2_76, %c0_77, %c0_78] : memref<5x16x16xbf16, #tpu.memory_space<vmem>>, vector<1x16x16xbf16>
    %111 = vector.shape_cast %110 : vector<1x16x16xbf16> to vector<16x16xbf16>
    %cst_79 = arith.constant dense<0.000000e+00> : vector<16x32xf32>
    %112 = tpu.matmul %111, %92, %cst_79 {dimension_numbers = #tpu.dot_dimension_numbers<[1], [0], [0], [1], [0, 0, 1, 1], [], []>} : vector<16x16xbf16>, vector<16x32xbf16>, vector<16x32xf32> -> vector<16x32xf32>
    %113 = arith.truncf %112 : vector<16x32xf32> to vector<16x32xbf16>
    %c2_80 = arith.constant 2 : index
    %c0_81 = arith.constant 0 : index
    %c0_82 = arith.constant 0 : index
    %114 = vector.load %arg9[%c2_80, %c0_81, %c0_82] : memref<5x32x32xbf16, #tpu.memory_space<vmem>>, vector<1x32x32xbf16>
    %115 = vector.shape_cast %114 : vector<1x32x32xbf16> to vector<32x32xbf16>
    %cst_83 = arith.constant dense<0.000000e+00> : vector<16x32xf32>
    %116 = tpu.matmul %113, %115, %cst_83 {dimension_numbers = #tpu.dot_dimension_numbers<[1], [0], [0], [1], [0, 0, 1, 1], [], []>} : vector<16x32xbf16>, vector<32x32xbf16>, vector<16x32xf32> -> vector<16x32xf32>
    %117 = arith.addf %109, %116 : vector<16x32xf32>
    %c3_84 = arith.constant 3 : index
    %c0_85 = arith.constant 0 : index
    %c0_86 = arith.constant 0 : index
    %118 = vector.load %arg2[%c3_84, %c0_85, %c0_86] : memref<5x16x16xbf16, #tpu.memory_space<vmem>>, vector<1x16x16xbf16>
    %119 = vector.shape_cast %118 : vector<1x16x16xbf16> to vector<16x16xbf16>
    %cst_87 = arith.constant dense<0.000000e+00> : vector<16x32xf32>
    %120 = tpu.matmul %119, %92, %cst_87 {dimension_numbers = #tpu.dot_dimension_numbers<[1], [0], [0], [1], [0, 0, 1, 1], [], []>} : vector<16x16xbf16>, vector<16x32xbf16>, vector<16x32xf32> -> vector<16x32xf32>
    %121 = arith.truncf %120 : vector<16x32xf32> to vector<16x32xbf16>
    %c3_88 = arith.constant 3 : index
    %c0_89 = arith.constant 0 : index
    %c0_90 = arith.constant 0 : index
    %122 = vector.load %arg9[%c3_88, %c0_89, %c0_90] : memref<5x32x32xbf16, #tpu.memory_space<vmem>>, vector<1x32x32xbf16>
    %123 = vector.shape_cast %122 : vector<1x32x32xbf16> to vector<32x32xbf16>
    %cst_91 = arith.constant dense<0.000000e+00> : vector<16x32xf32>
    %124 = tpu.matmul %121, %123, %cst_91 {dimension_numbers = #tpu.dot_dimension_numbers<[1], [0], [0], [1], [0, 0, 1, 1], [], []>} : vector<16x32xbf16>, vector<32x32xbf16>, vector<16x32xf32> -> vector<16x32xf32>
    %125 = arith.addf %117, %124 : vector<16x32xf32>
    %c4_92 = arith.constant 4 : index
    %c0_93 = arith.constant 0 : index
    %c0_94 = arith.constant 0 : index
    %126 = vector.load %arg2[%c4_92, %c0_93, %c0_94] : memref<5x16x16xbf16, #tpu.memory_space<vmem>>, vector<1x16x16xbf16>
    %127 = vector.shape_cast %126 : vector<1x16x16xbf16> to vector<16x16xbf16>
    %cst_95 = arith.constant dense<0.000000e+00> : vector<16x32xf32>
    %128 = tpu.matmul %127, %92, %cst_95 {dimension_numbers = #tpu.dot_dimension_numbers<[1], [0], [0], [1], [0, 0, 1, 1], [], []>} : vector<16x16xbf16>, vector<16x32xbf16>, vector<16x32xf32> -> vector<16x32xf32>
    %129 = arith.truncf %128 : vector<16x32xf32> to vector<16x32xbf16>
    %c4_96 = arith.constant 4 : index
    %c0_97 = arith.constant 0 : index
    %c0_98 = arith.constant 0 : index
    %130 = vector.load %arg9[%c4_96, %c0_97, %c0_98] : memref<5x32x32xbf16, #tpu.memory_space<vmem>>, vector<1x32x32xbf16>
    %131 = vector.shape_cast %130 : vector<1x32x32xbf16> to vector<32x32xbf16>
    %cst_99 = arith.constant dense<0.000000e+00> : vector<16x32xf32>
    %132 = tpu.matmul %129, %131, %cst_99 {dimension_numbers = #tpu.dot_dimension_numbers<[1], [0], [0], [1], [0, 0, 1, 1], [], []>} : vector<16x32xbf16>, vector<32x32xbf16>, vector<16x32xf32> -> vector<16x32xf32>
    %133 = arith.addf %125, %132 : vector<16x32xf32>
    %c0_100 = arith.constant 0 : index
    %c0_101 = arith.constant 0 : index
    %134 = vector.load %arg10[%c0_100, %c0_101] : memref<1x32xf32, #tpu.memory_space<vmem>>, vector<1x32xf32>
    %135 = vector.broadcast %134 : vector<1x32xf32> to vector<16x32xf32>
    %136 = arith.addf %133, %135 : vector<16x32xf32>
    %cst_102 = arith.constant dense<0.000000e+00> : vector<16x32xf32>
    %137 = tpu.matmul %136, %0, %cst_102 {dimension_numbers = #tpu.dot_dimension_numbers<[1], [0], [0], [1], [0, 0, 1, 1], [], []>} : vector<16x32xf32>, vector<32x32xf32>, vector<16x32xf32> -> vector<16x32xf32>
    %cst_103 = arith.constant dense<0.000000e+00> : vector<32xf32>
    %138 = vector.multi_reduction <add>, %137, %cst_103 [0] : vector<16x32xf32> to vector<32xf32>
    %139 = vector.shape_cast %138 : vector<32xf32> to vector<1x32xf32>
    %140 = vector.broadcast %139 : vector<1x32xf32> to vector<16x32xf32>
    %141 = arith.subf %136, %140 : vector<16x32xf32>
    %142 = arith.mulf %141, %141 : vector<16x32xf32>
    %cst_104 = arith.constant dense<0.000000e+00> : vector<16x32xf32>
    %143 = tpu.matmul %142, %0, %cst_104 {dimension_numbers = #tpu.dot_dimension_numbers<[1], [0], [0], [1], [0, 0, 1, 1], [], []>} : vector<16x32xf32>, vector<32x32xf32>, vector<16x32xf32> -> vector<16x32xf32>
    %cst_105 = arith.constant dense<0.000000e+00> : vector<32xf32>
    %144 = vector.multi_reduction <add>, %143, %cst_105 [0] : vector<16x32xf32> to vector<32xf32>
    %145 = vector.shape_cast %144 : vector<32xf32> to vector<1x32xf32>
    %cst_106 = arith.constant 9.99999974E-6 : f32
    %146 = vector.broadcast %cst_106 : f32 to vector<1x32xf32>
    %147 = arith.addf %145, %146 : vector<1x32xf32>
    %148 = math.rsqrt %147 : vector<1x32xf32>
    %149 = vector.broadcast %148 : vector<1x32xf32> to vector<16x32xf32>
    %150 = arith.mulf %141, %149 : vector<16x32xf32>
    %c0_107 = arith.constant 0 : index
    %c0_108 = arith.constant 0 : index
    %151 = vector.load %arg11[%c0_107, %c0_108] : memref<1x32xf32, #tpu.memory_space<vmem>>, vector<1x32xf32>
    %152 = vector.broadcast %151 : vector<1x32xf32> to vector<16x32xf32>
    %153 = arith.mulf %150, %152 : vector<16x32xf32>
    %c0_109 = arith.constant 0 : index
    %c0_110 = arith.constant 0 : index
    %154 = vector.load %arg12[%c0_109, %c0_110] : memref<1x32xf32, #tpu.memory_space<vmem>>, vector<1x32xf32>
    %155 = vector.broadcast %154 : vector<1x32xf32> to vector<16x32xf32>
    %156 = arith.addf %153, %155 : vector<16x32xf32>
    %cst_111 = arith.constant 0.000000e+00 : f32
    %157 = vector.broadcast %cst_111 : f32 to vector<16x32xf32>
    %158 = arith.maximumf %156, %157 : vector<16x32xf32>
    %159 = vector.broadcast %cst_111 : f32 to vector<16x32xf32>
    %160 = arith.subf %156, %159 : vector<16x32xf32>
    %161 = arith.cmpf one, %160, %160 : vector<16x32xf32>
    %162 = vector.broadcast %cst_111 : f32 to vector<16x32xf32>
    %163 = arith.addf %156, %162 : vector<16x32xf32>
    %164 = math.absf %160 : vector<16x32xf32>
    %cst_112 = arith.constant 0.000000e+00 : f32
    %165 = vector.broadcast %cst_112 : f32 to vector<16x32xf32>
    %166 = arith.subf %165, %164 : vector<16x32xf32>
    %167 = math.exp %166 : vector<16x32xf32>
    %168 = math.log1p %167 : vector<16x32xf32>
    %169 = arith.addf %158, %168 : vector<16x32xf32>
    %170 = arith.select %161, %163, %169 : vector<16x32xi1>, vector<16x32xf32>
    %171 = math.tanh %170 : vector<16x32xf32>
    %172 = arith.mulf %156, %171 : vector<16x32xf32>
    %173 = arith.addf %172, %2 : vector<16x32xf32>
    %c0_113 = arith.constant 0 : index
    %c0_114 = arith.constant 0 : index
    %c0_115 = arith.constant 0 : index
    %174 = vector.load %arg14[%c0_113, %c0_114, %c0_115] : memref<1x16x32xf32, #tpu.memory_space<vmem>>, vector<1x16x32xf32>
    %175 = vector.shape_cast %174 : vector<1x16x32xf32> to vector<16x32xf32>
    %176 = vector.shape_cast %173 : vector<16x32xf32> to vector<1x16x32xf32>
    tpu.vector_store %arg14[%c0_113, %c0_114, %c0_115], %176 {strides = array<i32>} : memref<1x16x32xf32, #tpu.memory_space<vmem>>, vector<1x16x32xf32>,
    return
  }
  func.func @transform_0(%arg0: i32) -> (i32, i32, i32) {
    %c0_i32 = arith.constant 0 : i32
    %c0_i32_0 = arith.constant 0 : i32
    %c0_i32_1 = arith.constant 0 : i32
    return %arg0, %c0_i32, %c0_i32_0 : i32, i32, i32
  }
  func.func @transform_1(%arg0: i32) -> (i32, i32, i32) {
    %c0_i32 = arith.constant 0 : i32
    %c0_i32_0 = arith.constant 0 : i32
    %c0_i32_1 = arith.constant 0 : i32
    %c0_i32_2 = arith.constant 0 : i32
    return %c0_i32, %c0_i32_0, %c0_i32_1 : i32, i32, i32
  }
  func.func @transform_2(%arg0: i32) -> (i32, i32, i32) {
    %c0_i32 = arith.constant 0 : i32
    %c0_i32_0 = arith.constant 0 : i32
    %c0_i32_1 = arith.constant 0 : i32
    %c0_i32_2 = arith.constant 0 : i32
    return %c0_i32, %c0_i32_0, %c0_i32_1 : i32, i32, i32
  }
  func.func @transform_3(%arg0: i32) -> (i32, i32) {
    %c0_i32 = arith.constant 0 : i32
    %c0_i32_0 = arith.constant 0 : i32
    %c0_i32_1 = arith.constant 0 : i32
    return %c0_i32, %c0_i32_0 : i32, i32
  }
  func.func @transform_4(%arg0: i32) -> (i32, i32) {
    %c0_i32 = arith.constant 0 : i32
    %c0_i32_0 = arith.constant 0 : i32
    %c0_i32_1 = arith.constant 0 : i32
    return %c0_i32, %c0_i32_0 : i32, i32
  }
  func.func @transform_5(%arg0: i32) -> (i32, i32) {
    %c0_i32 = arith.constant 0 : i32
    %c0_i32_0 = arith.constant 0 : i32
    %c0_i32_1 = arith.constant 0 : i32
    return %c0_i32, %c0_i32_0 : i32, i32
  }
  func.func @transform_6(%arg0: i32) -> (i32, i32, i32) {
    %c0_i32 = arith.constant 0 : i32
    %c0_i32_0 = arith.constant 0 : i32
    %c0_i32_1 = arith.constant 0 : i32
    return %arg0, %c0_i32, %c0_i32_0 : i32, i32, i32
  }
  func.func @transform_7(%arg0: i32) -> (i32, i32, i32) {
    %c0_i32 = arith.constant 0 : i32
    %c0_i32_0 = arith.constant 0 : i32
    %c0_i32_1 = arith.constant 0 : i32
    return %arg0, %c0_i32, %c0_i32_0 : i32, i32, i32
  }
  func.func @transform_8(%arg0: i32) -> (i32, i32, i32) {
    %c0_i32 = arith.constant 0 : i32
    %c0_i32_0 = arith.constant 0 : i32
    %c0_i32_1 = arith.constant 0 : i32
    %c0_i32_2 = arith.constant 0 : i32
    return %c0_i32, %c0_i32_0, %c0_i32_1 : i32, i32, i32
  }
  func.func @transform_9(%arg0: i32) -> (i32, i32) {
    %c0_i32 = arith.constant 0 : i32
    %c0_i32_0 = arith.constant 0 : i32
    %c0_i32_1 = arith.constant 0 : i32
    return %c0_i32, %c0_i32_0 : i32, i32
  }
  func.func @transform_10(%arg0: i32) -> (i32, i32) {
    %c0_i32 = arith.constant 0 : i32
    %c0_i32_0 = arith.constant 0 : i32
    %c0_i32_1 = arith.constant 0 : i32
    return %c0_i32, %c0_i32_0 : i32, i32
  }
  func.func @transform_11(%arg0: i32) -> (i32, i32) {
    %c0_i32 = arith.constant 0 : i32
    %c0_i32_0 = arith.constant 0 : i32
    %c0_i32_1 = arith.constant 0 : i32
    return %c0_i32, %c0_i32_0 : i32, i32
  }
  func.func @transform_12(%arg0: i32) -> (i32, i32) {
    %c0_i32 = arith.constant 0 : i32
    %c0_i32_0 = arith.constant 0 : i32
    %c0_i32_1 = arith.constant 0 : i32
    return %c0_i32, %c0_i32_0 : i32, i32
  }
  func.func @transform_13(%arg0: i32) -> (i32, i32, i32) {
    %c0_i32 = arith.constant 0 : i32
    %c0_i32_0 = arith.constant 0 : i32
    %c0_i32_1 = arith.constant 0 : i32
    return %arg0, %c0_i32, %c0_i32_0 : i32, i32, i32
  }
}

module attributes {stable_mosaic.version = 11 : i64} {
  func.func @_crb_kernel(%arg0: i32, %arg1: memref<1x16x4xf32, #tpu.memory_space<vmem>>, %arg2: memref<5x16x16xbf16, #tpu.memory_space<vmem>>, %arg3: memref<5x4x32xbf16, #tpu.memory_space<vmem>>, %arg4: memref<1x32xf32, #tpu.memory_space<vmem>>, %arg5: memref<1x32xf32, #tpu.memory_space<vmem>>, %arg6: memref<1x32xf32, #tpu.memory_space<vmem>>, %arg7: memref<1x1x32xf32, #tpu.memory_space<vmem>>, %arg8: memref<1x1x32xf32, #tpu.memory_space<vmem>>, %arg9: memref<5x32x32xbf16, #tpu.memory_space<vmem>>, %arg10: memref<1x32xf32, #tpu.memory_space<vmem>>, %arg11: memref<1x32xf32, #tpu.memory_space<vmem>>, %arg12: memref<1x32xf32, #tpu.memory_space<vmem>>, %arg13: memref<32x32xf32, #tpu.memory_space<vmem>>, %arg14: memref<4x32xbf16, #tpu.memory_space<vmem>>, %arg15: memref<1x32xf32, #tpu.memory_space<vmem>>, %arg16: memref<1x16x32xf32, #tpu.memory_space<vmem>>) attributes {dimension_semantics = [#tpu.dimension_semantics<parallel>], iteration_bounds = array<i64: 2>, scalar_prefetch = 0 : i64, scratch_operands = 0 : i64, tpu.core_type = #tpu.core_type<tc>, window_params = [{transform_indices = @transform_0, window_bounds = array<i64: 1, 16, 4>}, {pipeline_mode = #tpu.pipeline_mode<synchronous>, transform_indices = @transform_1, window_bounds = array<i64: 5, 16, 16>}, {pipeline_mode = #tpu.pipeline_mode<synchronous>, transform_indices = @transform_2, window_bounds = array<i64: 5, 4, 32>}, {pipeline_mode = #tpu.pipeline_mode<synchronous>, transform_indices = @transform_3, window_bounds = array<i64: 1, 32>}, {pipeline_mode = #tpu.pipeline_mode<synchronous>, transform_indices = @transform_4, window_bounds = array<i64: 1, 32>}, {pipeline_mode = #tpu.pipeline_mode<synchronous>, transform_indices = @transform_5, window_bounds = array<i64: 1, 32>}, {transform_indices = @transform_6, window_bounds = array<i64: 1, 1, 32>}, {transform_indices = @transform_7, window_bounds = array<i64: 1, 1, 32>}, {pipeline_mode = #tpu.pipeline_mode<synchronous>, transform_indices = @transform_8, window_bounds = array<i64: 5, 32, 32>}, {pipeline_mode = #tpu.pipeline_mode<synchronous>, transform_indices = @transform_9, window_bounds = array<i64: 1, 32>}, {pipeline_mode = #tpu.pipeline_mode<synchronous>, transform_indices = @transform_10, window_bounds = array<i64: 1, 32>}, {pipeline_mode = #tpu.pipeline_mode<synchronous>, transform_indices = @transform_11, window_bounds = array<i64: 1, 32>}, {pipeline_mode = #tpu.pipeline_mode<synchronous>, transform_indices = @transform_12, window_bounds = array<i64: 32, 32>}, {pipeline_mode = #tpu.pipeline_mode<synchronous>, transform_indices = @transform_13, window_bounds = array<i64: 4, 32>}, {pipeline_mode = #tpu.pipeline_mode<synchronous>, transform_indices = @transform_14, window_bounds = array<i64: 1, 32>}, {transform_indices = @transform_15, window_bounds = array<i64: 1, 16, 32>}]} {
    %c0 = arith.constant 0 : index
    %c0_0 = arith.constant 0 : index
    %0 = vector.load %arg13[%c0, %c0_0] : memref<32x32xf32, #tpu.memory_space<vmem>>, vector<32x32xf32>
    %c0_1 = arith.constant 0 : index
    %c0_2 = arith.constant 0 : index
    %c0_3 = arith.constant 0 : index
    %1 = vector.load %arg1[%c0_1, %c0_2, %c0_3] : memref<1x16x4xf32, #tpu.memory_space<vmem>>, vector<1x16x4xf32>
    %2 = vector.shape_cast %1 : vector<1x16x4xf32> to vector<16x4xf32>
    %3 = arith.truncf %2 : vector<16x4xf32> to vector<16x4xbf16>
    %cst = arith.constant 0.000000e+00 : f32
    %4 = vector.broadcast %cst : f32 to vector<16x32xf32>
    %c0_4 = arith.constant 0 : index
    %c0_5 = arith.constant 0 : index
    %c0_6 = arith.constant 0 : index
    %5 = vector.load %arg2[%c0_4, %c0_5, %c0_6] : memref<5x16x16xbf16, #tpu.memory_space<vmem>>, vector<1x16x16xbf16>
    %6 = vector.shape_cast %5 : vector<1x16x16xbf16> to vector<16x16xbf16>
    %cst_7 = arith.constant dense<0.000000e+00> : vector<16x4xf32>
    %7 = tpu.matmul %6, %3, %cst_7 {dimension_numbers = #tpu.dot_dimension_numbers<[1], [0], [0], [1], [0, 0, 1, 1], [], []>} : vector<16x16xbf16>, vector<16x4xbf16>, vector<16x4xf32> -> vector<16x4xf32>
    %8 = arith.truncf %7 : vector<16x4xf32> to vector<16x4xbf16>
    %c0_8 = arith.constant 0 : index
    %c0_9 = arith.constant 0 : index
    %c0_10 = arith.constant 0 : index
    %9 = vector.load %arg3[%c0_8, %c0_9, %c0_10] : memref<5x4x32xbf16, #tpu.memory_space<vmem>>, vector<1x4x32xbf16>
    %10 = vector.shape_cast %9 : vector<1x4x32xbf16> to vector<4x32xbf16>
    %cst_11 = arith.constant dense<0.000000e+00> : vector<16x32xf32>
    %11 = tpu.matmul %8, %10, %cst_11 {dimension_numbers = #tpu.dot_dimension_numbers<[1], [0], [0], [1], [0, 0, 1, 1], [], []>} : vector<16x4xbf16>, vector<4x32xbf16>, vector<16x32xf32> -> vector<16x32xf32>
    %12 = arith.addf %4, %11 : vector<16x32xf32>
    %c1 = arith.constant 1 : index
    %c0_12 = arith.constant 0 : index
    %c0_13 = arith.constant 0 : index
    %13 = vector.load %arg2[%c1, %c0_12, %c0_13] : memref<5x16x16xbf16, #tpu.memory_space<vmem>>, vector<1x16x16xbf16>
    %14 = vector.shape_cast %13 : vector<1x16x16xbf16> to vector<16x16xbf16>
    %cst_14 = arith.constant dense<0.000000e+00> : vector<16x4xf32>
    %15 = tpu.matmul %14, %3, %cst_14 {dimension_numbers = #tpu.dot_dimension_numbers<[1], [0], [0], [1], [0, 0, 1, 1], [], []>} : vector<16x16xbf16>, vector<16x4xbf16>, vector<16x4xf32> -> vector<16x4xf32>
    %16 = arith.truncf %15 : vector<16x4xf32> to vector<16x4xbf16>
    %c1_15 = arith.constant 1 : index
    %c0_16 = arith.constant 0 : index
    %c0_17 = arith.constant 0 : index
    %17 = vector.load %arg3[%c1_15, %c0_16, %c0_17] : memref<5x4x32xbf16, #tpu.memory_space<vmem>>, vector<1x4x32xbf16>
    %18 = vector.shape_cast %17 : vector<1x4x32xbf16> to vector<4x32xbf16>
    %cst_18 = arith.constant dense<0.000000e+00> : vector<16x32xf32>
    %19 = tpu.matmul %16, %18, %cst_18 {dimension_numbers = #tpu.dot_dimension_numbers<[1], [0], [0], [1], [0, 0, 1, 1], [], []>} : vector<16x4xbf16>, vector<4x32xbf16>, vector<16x32xf32> -> vector<16x32xf32>
    %20 = arith.addf %12, %19 : vector<16x32xf32>
    %c2 = arith.constant 2 : index
    %c0_19 = arith.constant 0 : index
    %c0_20 = arith.constant 0 : index
    %21 = vector.load %arg2[%c2, %c0_19, %c0_20] : memref<5x16x16xbf16, #tpu.memory_space<vmem>>, vector<1x16x16xbf16>
    %22 = vector.shape_cast %21 : vector<1x16x16xbf16> to vector<16x16xbf16>
    %cst_21 = arith.constant dense<0.000000e+00> : vector<16x4xf32>
    %23 = tpu.matmul %22, %3, %cst_21 {dimension_numbers = #tpu.dot_dimension_numbers<[1], [0], [0], [1], [0, 0, 1, 1], [], []>} : vector<16x16xbf16>, vector<16x4xbf16>, vector<16x4xf32> -> vector<16x4xf32>
    %24 = arith.truncf %23 : vector<16x4xf32> to vector<16x4xbf16>
    %c2_22 = arith.constant 2 : index
    %c0_23 = arith.constant 0 : index
    %c0_24 = arith.constant 0 : index
    %25 = vector.load %arg3[%c2_22, %c0_23, %c0_24] : memref<5x4x32xbf16, #tpu.memory_space<vmem>>, vector<1x4x32xbf16>
    %26 = vector.shape_cast %25 : vector<1x4x32xbf16> to vector<4x32xbf16>
    %cst_25 = arith.constant dense<0.000000e+00> : vector<16x32xf32>
    %27 = tpu.matmul %24, %26, %cst_25 {dimension_numbers = #tpu.dot_dimension_numbers<[1], [0], [0], [1], [0, 0, 1, 1], [], []>} : vector<16x4xbf16>, vector<4x32xbf16>, vector<16x32xf32> -> vector<16x32xf32>
    %28 = arith.addf %20, %27 : vector<16x32xf32>
    %c3 = arith.constant 3 : index
    %c0_26 = arith.constant 0 : index
    %c0_27 = arith.constant 0 : index
    %29 = vector.load %arg2[%c3, %c0_26, %c0_27] : memref<5x16x16xbf16, #tpu.memory_space<vmem>>, vector<1x16x16xbf16>
    %30 = vector.shape_cast %29 : vector<1x16x16xbf16> to vector<16x16xbf16>
    %cst_28 = arith.constant dense<0.000000e+00> : vector<16x4xf32>
    %31 = tpu.matmul %30, %3, %cst_28 {dimension_numbers = #tpu.dot_dimension_numbers<[1], [0], [0], [1], [0, 0, 1, 1], [], []>} : vector<16x16xbf16>, vector<16x4xbf16>, vector<16x4xf32> -> vector<16x4xf32>
    %32 = arith.truncf %31 : vector<16x4xf32> to vector<16x4xbf16>
    %c3_29 = arith.constant 3 : index
    %c0_30 = arith.constant 0 : index
    %c0_31 = arith.constant 0 : index
    %33 = vector.load %arg3[%c3_29, %c0_30, %c0_31] : memref<5x4x32xbf16, #tpu.memory_space<vmem>>, vector<1x4x32xbf16>
    %34 = vector.shape_cast %33 : vector<1x4x32xbf16> to vector<4x32xbf16>
    %cst_32 = arith.constant dense<0.000000e+00> : vector<16x32xf32>
    %35 = tpu.matmul %32, %34, %cst_32 {dimension_numbers = #tpu.dot_dimension_numbers<[1], [0], [0], [1], [0, 0, 1, 1], [], []>} : vector<16x4xbf16>, vector<4x32xbf16>, vector<16x32xf32> -> vector<16x32xf32>
    %36 = arith.addf %28, %35 : vector<16x32xf32>
    %c4 = arith.constant 4 : index
    %c0_33 = arith.constant 0 : index
    %c0_34 = arith.constant 0 : index
    %37 = vector.load %arg2[%c4, %c0_33, %c0_34] : memref<5x16x16xbf16, #tpu.memory_space<vmem>>, vector<1x16x16xbf16>
    %38 = vector.shape_cast %37 : vector<1x16x16xbf16> to vector<16x16xbf16>
    %cst_35 = arith.constant dense<0.000000e+00> : vector<16x4xf32>
    %39 = tpu.matmul %38, %3, %cst_35 {dimension_numbers = #tpu.dot_dimension_numbers<[1], [0], [0], [1], [0, 0, 1, 1], [], []>} : vector<16x16xbf16>, vector<16x4xbf16>, vector<16x4xf32> -> vector<16x4xf32>
    %40 = arith.truncf %39 : vector<16x4xf32> to vector<16x4xbf16>
    %c4_36 = arith.constant 4 : index
    %c0_37 = arith.constant 0 : index
    %c0_38 = arith.constant 0 : index
    %41 = vector.load %arg3[%c4_36, %c0_37, %c0_38] : memref<5x4x32xbf16, #tpu.memory_space<vmem>>, vector<1x4x32xbf16>
    %42 = vector.shape_cast %41 : vector<1x4x32xbf16> to vector<4x32xbf16>
    %cst_39 = arith.constant dense<0.000000e+00> : vector<16x32xf32>
    %43 = tpu.matmul %40, %42, %cst_39 {dimension_numbers = #tpu.dot_dimension_numbers<[1], [0], [0], [1], [0, 0, 1, 1], [], []>} : vector<16x4xbf16>, vector<4x32xbf16>, vector<16x32xf32> -> vector<16x32xf32>
    %44 = arith.addf %36, %43 : vector<16x32xf32>
    %c0_40 = arith.constant 0 : index
    %c0_41 = arith.constant 0 : index
    %45 = vector.load %arg4[%c0_40, %c0_41] : memref<1x32xf32, #tpu.memory_space<vmem>>, vector<1x32xf32>
    %46 = vector.broadcast %45 : vector<1x32xf32> to vector<16x32xf32>
    %47 = arith.addf %44, %46 : vector<16x32xf32>
    %cst_42 = arith.constant dense<0.000000e+00> : vector<16x32xf32>
    %48 = tpu.matmul %47, %0, %cst_42 {dimension_numbers = #tpu.dot_dimension_numbers<[1], [0], [0], [1], [0, 0, 1, 1], [], []>} : vector<16x32xf32>, vector<32x32xf32>, vector<16x32xf32> -> vector<16x32xf32>
    %cst_43 = arith.constant dense<0.000000e+00> : vector<32xf32>
    %49 = vector.multi_reduction <add>, %48, %cst_43 [0] : vector<16x32xf32> to vector<32xf32>
    %50 = vector.shape_cast %49 : vector<32xf32> to vector<1x32xf32>
    %51 = vector.broadcast %50 : vector<1x32xf32> to vector<16x32xf32>
    %52 = arith.subf %47, %51 : vector<16x32xf32>
    %53 = arith.mulf %52, %52 : vector<16x32xf32>
    %cst_44 = arith.constant dense<0.000000e+00> : vector<16x32xf32>
    %54 = tpu.matmul %53, %0, %cst_44 {dimension_numbers = #tpu.dot_dimension_numbers<[1], [0], [0], [1], [0, 0, 1, 1], [], []>} : vector<16x32xf32>, vector<32x32xf32>, vector<16x32xf32> -> vector<16x32xf32>
    %cst_45 = arith.constant dense<0.000000e+00> : vector<32xf32>
    %55 = vector.multi_reduction <add>, %54, %cst_45 [0] : vector<16x32xf32> to vector<32xf32>
    %56 = vector.shape_cast %55 : vector<32xf32> to vector<1x32xf32>
    %cst_46 = arith.constant 9.99999974E-6 : f32
    %57 = vector.broadcast %cst_46 : f32 to vector<1x32xf32>
    %58 = arith.addf %56, %57 : vector<1x32xf32>
    %59 = math.rsqrt %58 : vector<1x32xf32>
    %60 = vector.broadcast %59 : vector<1x32xf32> to vector<16x32xf32>
    %61 = arith.mulf %52, %60 : vector<16x32xf32>
    %c0_47 = arith.constant 0 : index
    %c0_48 = arith.constant 0 : index
    %62 = vector.load %arg5[%c0_47, %c0_48] : memref<1x32xf32, #tpu.memory_space<vmem>>, vector<1x32xf32>
    %63 = vector.broadcast %62 : vector<1x32xf32> to vector<16x32xf32>
    %64 = arith.mulf %61, %63 : vector<16x32xf32>
    %c0_49 = arith.constant 0 : index
    %c0_50 = arith.constant 0 : index
    %65 = vector.load %arg6[%c0_49, %c0_50] : memref<1x32xf32, #tpu.memory_space<vmem>>, vector<1x32xf32>
    %66 = vector.broadcast %65 : vector<1x32xf32> to vector<16x32xf32>
    %67 = arith.addf %64, %66 : vector<16x32xf32>
    %cst_51 = arith.constant 0.000000e+00 : f32
    %68 = vector.broadcast %cst_51 : f32 to vector<16x32xf32>
    %69 = arith.maximumf %67, %68 : vector<16x32xf32>
    %70 = vector.broadcast %cst_51 : f32 to vector<16x32xf32>
    %71 = arith.subf %67, %70 : vector<16x32xf32>
    %72 = arith.cmpf one, %71, %71 : vector<16x32xf32>
    %73 = vector.broadcast %cst_51 : f32 to vector<16x32xf32>
    %74 = arith.addf %67, %73 : vector<16x32xf32>
    %75 = math.absf %71 : vector<16x32xf32>
    %cst_52 = arith.constant 0.000000e+00 : f32
    %76 = vector.broadcast %cst_52 : f32 to vector<16x32xf32>
    %77 = arith.subf %76, %75 : vector<16x32xf32>
    %78 = math.exp %77 : vector<16x32xf32>
    %79 = math.log1p %78 : vector<16x32xf32>
    %80 = arith.addf %69, %79 : vector<16x32xf32>
    %81 = arith.select %72, %74, %80 : vector<16x32xi1>, vector<16x32xf32>
    %82 = math.tanh %81 : vector<16x32xf32>
    %83 = arith.mulf %67, %82 : vector<16x32xf32>
    %c0_53 = arith.constant 0 : index
    %c0_54 = arith.constant 0 : index
    %c0_55 = arith.constant 0 : index
    %84 = vector.load %arg7[%c0_53, %c0_54, %c0_55] : memref<1x1x32xf32, #tpu.memory_space<vmem>>, vector<1x1x32xf32>
    %85 = vector.shape_cast %84 : vector<1x1x32xf32> to vector<1x32xf32>
    %86 = vector.broadcast %85 : vector<1x32xf32> to vector<16x32xf32>
    %87 = arith.mulf %86, %83 : vector<16x32xf32>
    %c0_56 = arith.constant 0 : index
    %c0_57 = arith.constant 0 : index
    %c0_58 = arith.constant 0 : index
    %88 = vector.load %arg8[%c0_56, %c0_57, %c0_58] : memref<1x1x32xf32, #tpu.memory_space<vmem>>, vector<1x1x32xf32>
    %89 = vector.shape_cast %88 : vector<1x1x32xf32> to vector<1x32xf32>
    %90 = vector.broadcast %89 : vector<1x32xf32> to vector<16x32xf32>
    %91 = arith.addf %87, %90 : vector<16x32xf32>
    %92 = arith.truncf %91 : vector<16x32xf32> to vector<16x32xbf16>
    %cst_59 = arith.constant 0.000000e+00 : f32
    %93 = vector.broadcast %cst_59 : f32 to vector<16x32xf32>
    %c0_60 = arith.constant 0 : index
    %c0_61 = arith.constant 0 : index
    %c0_62 = arith.constant 0 : index
    %94 = vector.load %arg2[%c0_60, %c0_61, %c0_62] : memref<5x16x16xbf16, #tpu.memory_space<vmem>>, vector<1x16x16xbf16>
    %95 = vector.shape_cast %94 : vector<1x16x16xbf16> to vector<16x16xbf16>
    %cst_63 = arith.constant dense<0.000000e+00> : vector<16x32xf32>
    %96 = tpu.matmul %95, %92, %cst_63 {dimension_numbers = #tpu.dot_dimension_numbers<[1], [0], [0], [1], [0, 0, 1, 1], [], []>} : vector<16x16xbf16>, vector<16x32xbf16>, vector<16x32xf32> -> vector<16x32xf32>
    %97 = arith.truncf %96 : vector<16x32xf32> to vector<16x32xbf16>
    %c0_64 = arith.constant 0 : index
    %c0_65 = arith.constant 0 : index
    %c0_66 = arith.constant 0 : index
    %98 = vector.load %arg9[%c0_64, %c0_65, %c0_66] : memref<5x32x32xbf16, #tpu.memory_space<vmem>>, vector<1x32x32xbf16>
    %99 = vector.shape_cast %98 : vector<1x32x32xbf16> to vector<32x32xbf16>
    %cst_67 = arith.constant dense<0.000000e+00> : vector<16x32xf32>
    %100 = tpu.matmul %97, %99, %cst_67 {dimension_numbers = #tpu.dot_dimension_numbers<[1], [0], [0], [1], [0, 0, 1, 1], [], []>} : vector<16x32xbf16>, vector<32x32xbf16>, vector<16x32xf32> -> vector<16x32xf32>
    %101 = arith.addf %93, %100 : vector<16x32xf32>
    %c1_68 = arith.constant 1 : index
    %c0_69 = arith.constant 0 : index
    %c0_70 = arith.constant 0 : index
    %102 = vector.load %arg2[%c1_68, %c0_69, %c0_70] : memref<5x16x16xbf16, #tpu.memory_space<vmem>>, vector<1x16x16xbf16>
    %103 = vector.shape_cast %102 : vector<1x16x16xbf16> to vector<16x16xbf16>
    %cst_71 = arith.constant dense<0.000000e+00> : vector<16x32xf32>
    %104 = tpu.matmul %103, %92, %cst_71 {dimension_numbers = #tpu.dot_dimension_numbers<[1], [0], [0], [1], [0, 0, 1, 1], [], []>} : vector<16x16xbf16>, vector<16x32xbf16>, vector<16x32xf32> -> vector<16x32xf32>
    %105 = arith.truncf %104 : vector<16x32xf32> to vector<16x32xbf16>
    %c1_72 = arith.constant 1 : index
    %c0_73 = arith.constant 0 : index
    %c0_74 = arith.constant 0 : index
    %106 = vector.load %arg9[%c1_72, %c0_73, %c0_74] : memref<5x32x32xbf16, #tpu.memory_space<vmem>>, vector<1x32x32xbf16>
    %107 = vector.shape_cast %106 : vector<1x32x32xbf16> to vector<32x32xbf16>
    %cst_75 = arith.constant dense<0.000000e+00> : vector<16x32xf32>
    %108 = tpu.matmul %105, %107, %cst_75 {dimension_numbers = #tpu.dot_dimension_numbers<[1], [0], [0], [1], [0, 0, 1, 1], [], []>} : vector<16x32xbf16>, vector<32x32xbf16>, vector<16x32xf32> -> vector<16x32xf32>
    %109 = arith.addf %101, %108 : vector<16x32xf32>
    %c2_76 = arith.constant 2 : index
    %c0_77 = arith.constant 0 : index
    %c0_78 = arith.constant 0 : index
    %110 = vector.load %arg2[%c2_76, %c0_77, %c0_78] : memref<5x16x16xbf16, #tpu.memory_space<vmem>>, vector<1x16x16xbf16>
    %111 = vector.shape_cast %110 : vector<1x16x16xbf16> to vector<16x16xbf16>
    %cst_79 = arith.constant dense<0.000000e+00> : vector<16x32xf32>
    %112 = tpu.matmul %111, %92, %cst_79 {dimension_numbers = #tpu.dot_dimension_numbers<[1], [0], [0], [1], [0, 0, 1, 1], [], []>} : vector<16x16xbf16>, vector<16x32xbf16>, vector<16x32xf32> -> vector<16x32xf32>
    %113 = arith.truncf %112 : vector<16x32xf32> to vector<16x32xbf16>
    %c2_80 = arith.constant 2 : index
    %c0_81 = arith.constant 0 : index
    %c0_82 = arith.constant 0 : index
    %114 = vector.load %arg9[%c2_80, %c0_81, %c0_82] : memref<5x32x32xbf16, #tpu.memory_space<vmem>>, vector<1x32x32xbf16>
    %115 = vector.shape_cast %114 : vector<1x32x32xbf16> to vector<32x32xbf16>
    %cst_83 = arith.constant dense<0.000000e+00> : vector<16x32xf32>
    %116 = tpu.matmul %113, %115, %cst_83 {dimension_numbers = #tpu.dot_dimension_numbers<[1], [0], [0], [1], [0, 0, 1, 1], [], []>} : vector<16x32xbf16>, vector<32x32xbf16>, vector<16x32xf32> -> vector<16x32xf32>
    %117 = arith.addf %109, %116 : vector<16x32xf32>
    %c3_84 = arith.constant 3 : index
    %c0_85 = arith.constant 0 : index
    %c0_86 = arith.constant 0 : index
    %118 = vector.load %arg2[%c3_84, %c0_85, %c0_86] : memref<5x16x16xbf16, #tpu.memory_space<vmem>>, vector<1x16x16xbf16>
    %119 = vector.shape_cast %118 : vector<1x16x16xbf16> to vector<16x16xbf16>
    %cst_87 = arith.constant dense<0.000000e+00> : vector<16x32xf32>
    %120 = tpu.matmul %119, %92, %cst_87 {dimension_numbers = #tpu.dot_dimension_numbers<[1], [0], [0], [1], [0, 0, 1, 1], [], []>} : vector<16x16xbf16>, vector<16x32xbf16>, vector<16x32xf32> -> vector<16x32xf32>
    %121 = arith.truncf %120 : vector<16x32xf32> to vector<16x32xbf16>
    %c3_88 = arith.constant 3 : index
    %c0_89 = arith.constant 0 : index
    %c0_90 = arith.constant 0 : index
    %122 = vector.load %arg9[%c3_88, %c0_89, %c0_90] : memref<5x32x32xbf16, #tpu.memory_space<vmem>>, vector<1x32x32xbf16>
    %123 = vector.shape_cast %122 : vector<1x32x32xbf16> to vector<32x32xbf16>
    %cst_91 = arith.constant dense<0.000000e+00> : vector<16x32xf32>
    %124 = tpu.matmul %121, %123, %cst_91 {dimension_numbers = #tpu.dot_dimension_numbers<[1], [0], [0], [1], [0, 0, 1, 1], [], []>} : vector<16x32xbf16>, vector<32x32xbf16>, vector<16x32xf32> -> vector<16x32xf32>
    %125 = arith.addf %117, %124 : vector<16x32xf32>
    %c4_92 = arith.constant 4 : index
    %c0_93 = arith.constant 0 : index
    %c0_94 = arith.constant 0 : index
    %126 = vector.load %arg2[%c4_92, %c0_93, %c0_94] : memref<5x16x16xbf16, #tpu.memory_space<vmem>>, vector<1x16x16xbf16>
    %127 = vector.shape_cast %126 : vector<1x16x16xbf16> to vector<16x16xbf16>
    %cst_95 = arith.constant dense<0.000000e+00> : vector<16x32xf32>
    %128 = tpu.matmul %127, %92, %cst_95 {dimension_numbers = #tpu.dot_dimension_numbers<[1], [0], [0], [1], [0, 0, 1, 1], [], []>} : vector<16x16xbf16>, vector<16x32xbf16>, vector<16x32xf32> -> vector<16x32xf32>
    %129 = arith.truncf %128 : vector<16x32xf32> to vector<16x32xbf16>
    %c4_96 = arith.constant 4 : index
    %c0_97 = arith.constant 0 : index
    %c0_98 = arith.constant 0 : index
    %130 = vector.load %arg9[%c4_96, %c0_97, %c0_98] : memref<5x32x32xbf16, #tpu.memory_space<vmem>>, vector<1x32x32xbf16>
    %131 = vector.shape_cast %130 : vector<1x32x32xbf16> to vector<32x32xbf16>
    %cst_99 = arith.constant dense<0.000000e+00> : vector<16x32xf32>
    %132 = tpu.matmul %129, %131, %cst_99 {dimension_numbers = #tpu.dot_dimension_numbers<[1], [0], [0], [1], [0, 0, 1, 1], [], []>} : vector<16x32xbf16>, vector<32x32xbf16>, vector<16x32xf32> -> vector<16x32xf32>
    %133 = arith.addf %125, %132 : vector<16x32xf32>
    %c0_100 = arith.constant 0 : index
    %c0_101 = arith.constant 0 : index
    %134 = vector.load %arg10[%c0_100, %c0_101] : memref<1x32xf32, #tpu.memory_space<vmem>>, vector<1x32xf32>
    %135 = vector.broadcast %134 : vector<1x32xf32> to vector<16x32xf32>
    %136 = arith.addf %133, %135 : vector<16x32xf32>
    %cst_102 = arith.constant dense<0.000000e+00> : vector<16x32xf32>
    %137 = tpu.matmul %136, %0, %cst_102 {dimension_numbers = #tpu.dot_dimension_numbers<[1], [0], [0], [1], [0, 0, 1, 1], [], []>} : vector<16x32xf32>, vector<32x32xf32>, vector<16x32xf32> -> vector<16x32xf32>
    %cst_103 = arith.constant dense<0.000000e+00> : vector<32xf32>
    %138 = vector.multi_reduction <add>, %137, %cst_103 [0] : vector<16x32xf32> to vector<32xf32>
    %139 = vector.shape_cast %138 : vector<32xf32> to vector<1x32xf32>
    %140 = vector.broadcast %139 : vector<1x32xf32> to vector<16x32xf32>
    %141 = arith.subf %136, %140 : vector<16x32xf32>
    %142 = arith.mulf %141, %141 : vector<16x32xf32>
    %cst_104 = arith.constant dense<0.000000e+00> : vector<16x32xf32>
    %143 = tpu.matmul %142, %0, %cst_104 {dimension_numbers = #tpu.dot_dimension_numbers<[1], [0], [0], [1], [0, 0, 1, 1], [], []>} : vector<16x32xf32>, vector<32x32xf32>, vector<16x32xf32> -> vector<16x32xf32>
    %cst_105 = arith.constant dense<0.000000e+00> : vector<32xf32>
    %144 = vector.multi_reduction <add>, %143, %cst_105 [0] : vector<16x32xf32> to vector<32xf32>
    %145 = vector.shape_cast %144 : vector<32xf32> to vector<1x32xf32>
    %cst_106 = arith.constant 9.99999974E-6 : f32
    %146 = vector.broadcast %cst_106 : f32 to vector<1x32xf32>
    %147 = arith.addf %145, %146 : vector<1x32xf32>
    %148 = math.rsqrt %147 : vector<1x32xf32>
    %149 = vector.broadcast %148 : vector<1x32xf32> to vector<16x32xf32>
    %150 = arith.mulf %141, %149 : vector<16x32xf32>
    %c0_107 = arith.constant 0 : index
    %c0_108 = arith.constant 0 : index
    %151 = vector.load %arg11[%c0_107, %c0_108] : memref<1x32xf32, #tpu.memory_space<vmem>>, vector<1x32xf32>
    %152 = vector.broadcast %151 : vector<1x32xf32> to vector<16x32xf32>
    %153 = arith.mulf %150, %152 : vector<16x32xf32>
    %c0_109 = arith.constant 0 : index
    %c0_110 = arith.constant 0 : index
    %154 = vector.load %arg12[%c0_109, %c0_110] : memref<1x32xf32, #tpu.memory_space<vmem>>, vector<1x32xf32>
    %155 = vector.broadcast %154 : vector<1x32xf32> to vector<16x32xf32>
    %156 = arith.addf %153, %155 : vector<16x32xf32>
    %cst_111 = arith.constant 0.000000e+00 : f32
    %157 = vector.broadcast %cst_111 : f32 to vector<16x32xf32>
    %158 = arith.maximumf %156, %157 : vector<16x32xf32>
    %159 = vector.broadcast %cst_111 : f32 to vector<16x32xf32>
    %160 = arith.subf %156, %159 : vector<16x32xf32>
    %161 = arith.cmpf one, %160, %160 : vector<16x32xf32>
    %162 = vector.broadcast %cst_111 : f32 to vector<16x32xf32>
    %163 = arith.addf %156, %162 : vector<16x32xf32>
    %164 = math.absf %160 : vector<16x32xf32>
    %cst_112 = arith.constant 0.000000e+00 : f32
    %165 = vector.broadcast %cst_112 : f32 to vector<16x32xf32>
    %166 = arith.subf %165, %164 : vector<16x32xf32>
    %167 = math.exp %166 : vector<16x32xf32>
    %168 = math.log1p %167 : vector<16x32xf32>
    %169 = arith.addf %158, %168 : vector<16x32xf32>
    %170 = arith.select %161, %163, %169 : vector<16x32xi1>, vector<16x32xf32>
    %171 = math.tanh %170 : vector<16x32xf32>
    %172 = arith.mulf %156, %171 : vector<16x32xf32>
    %c0_113 = arith.constant 0 : index
    %c0_114 = arith.constant 0 : index
    %173 = vector.load %arg14[%c0_113, %c0_114] : memref<4x32xbf16, #tpu.memory_space<vmem>>, vector<4x32xbf16>
    %cst_115 = arith.constant dense<0.000000e+00> : vector<16x32xf32>
    %174 = tpu.matmul %3, %173, %cst_115 {dimension_numbers = #tpu.dot_dimension_numbers<[1], [0], [0], [1], [0, 0, 1, 1], [], []>} : vector<16x4xbf16>, vector<4x32xbf16>, vector<16x32xf32> -> vector<16x32xf32>
    %c0_116 = arith.constant 0 : index
    %c0_117 = arith.constant 0 : index
    %175 = vector.load %arg15[%c0_116, %c0_117] : memref<1x32xf32, #tpu.memory_space<vmem>>, vector<1x32xf32>
    %176 = vector.broadcast %175 : vector<1x32xf32> to vector<16x32xf32>
    %177 = arith.addf %174, %176 : vector<16x32xf32>
    %178 = arith.addf %172, %177 : vector<16x32xf32>
    %c0_118 = arith.constant 0 : index
    %c0_119 = arith.constant 0 : index
    %c0_120 = arith.constant 0 : index
    %179 = vector.load %arg16[%c0_118, %c0_119, %c0_120] : memref<1x16x32xf32, #tpu.memory_space<vmem>>, vector<1x16x32xf32>
    %180 = vector.shape_cast %179 : vector<1x16x32xf32> to vector<16x32xf32>
    %181 = vector.shape_cast %178 : vector<16x32xf32> to vector<1x16x32xf32>
    tpu.vector_store %arg16[%c0_118, %c0_119, %c0_120], %181 {strides = array<i32>} : memref<1x16x32xf32, #tpu.memory_space<vmem>>, vector<1x16x32xf32>,
    return
  }
  func.func @transform_0(%arg0: i32) -> (i32, i32, i32) {
    %c0_i32 = arith.constant 0 : i32
    %c0_i32_0 = arith.constant 0 : i32
    %c0_i32_1 = arith.constant 0 : i32
    return %arg0, %c0_i32, %c0_i32_0 : i32, i32, i32
  }
  func.func @transform_1(%arg0: i32) -> (i32, i32, i32) {
    %c0_i32 = arith.constant 0 : i32
    %c0_i32_0 = arith.constant 0 : i32
    %c0_i32_1 = arith.constant 0 : i32
    %c0_i32_2 = arith.constant 0 : i32
    return %c0_i32, %c0_i32_0, %c0_i32_1 : i32, i32, i32
  }
  func.func @transform_2(%arg0: i32) -> (i32, i32, i32) {
    %c0_i32 = arith.constant 0 : i32
    %c0_i32_0 = arith.constant 0 : i32
    %c0_i32_1 = arith.constant 0 : i32
    %c0_i32_2 = arith.constant 0 : i32
    return %c0_i32, %c0_i32_0, %c0_i32_1 : i32, i32, i32
  }
  func.func @transform_3(%arg0: i32) -> (i32, i32) {
    %c0_i32 = arith.constant 0 : i32
    %c0_i32_0 = arith.constant 0 : i32
    %c0_i32_1 = arith.constant 0 : i32
    return %c0_i32, %c0_i32_0 : i32, i32
  }
  func.func @transform_4(%arg0: i32) -> (i32, i32) {
    %c0_i32 = arith.constant 0 : i32
    %c0_i32_0 = arith.constant 0 : i32
    %c0_i32_1 = arith.constant 0 : i32
    return %c0_i32, %c0_i32_0 : i32, i32
  }
  func.func @transform_5(%arg0: i32) -> (i32, i32) {
    %c0_i32 = arith.constant 0 : i32
    %c0_i32_0 = arith.constant 0 : i32
    %c0_i32_1 = arith.constant 0 : i32
    return %c0_i32, %c0_i32_0 : i32, i32
  }
  func.func @transform_6(%arg0: i32) -> (i32, i32, i32) {
    %c0_i32 = arith.constant 0 : i32
    %c0_i32_0 = arith.constant 0 : i32
    %c0_i32_1 = arith.constant 0 : i32
    return %arg0, %c0_i32, %c0_i32_0 : i32, i32, i32
  }
  func.func @transform_7(%arg0: i32) -> (i32, i32, i32) {
    %c0_i32 = arith.constant 0 : i32
    %c0_i32_0 = arith.constant 0 : i32
    %c0_i32_1 = arith.constant 0 : i32
    return %arg0, %c0_i32, %c0_i32_0 : i32, i32, i32
  }
  func.func @transform_8(%arg0: i32) -> (i32, i32, i32) {
    %c0_i32 = arith.constant 0 : i32
    %c0_i32_0 = arith.constant 0 : i32
    %c0_i32_1 = arith.constant 0 : i32
    %c0_i32_2 = arith.constant 0 : i32
    return %c0_i32, %c0_i32_0, %c0_i32_1 : i32, i32, i32
  }
  func.func @transform_9(%arg0: i32) -> (i32, i32) {
    %c0_i32 = arith.constant 0 : i32
    %c0_i32_0 = arith.constant 0 : i32
    %c0_i32_1 = arith.constant 0 : i32
    return %c0_i32, %c0_i32_0 : i32, i32
  }
  func.func @transform_10(%arg0: i32) -> (i32, i32) {
    %c0_i32 = arith.constant 0 : i32
    %c0_i32_0 = arith.constant 0 : i32
    %c0_i32_1 = arith.constant 0 : i32
    return %c0_i32, %c0_i32_0 : i32, i32
  }
  func.func @transform_11(%arg0: i32) -> (i32, i32) {
    %c0_i32 = arith.constant 0 : i32
    %c0_i32_0 = arith.constant 0 : i32
    %c0_i32_1 = arith.constant 0 : i32
    return %c0_i32, %c0_i32_0 : i32, i32
  }
  func.func @transform_12(%arg0: i32) -> (i32, i32) {
    %c0_i32 = arith.constant 0 : i32
    %c0_i32_0 = arith.constant 0 : i32
    %c0_i32_1 = arith.constant 0 : i32
    return %c0_i32, %c0_i32_0 : i32, i32
  }
  func.func @transform_13(%arg0: i32) -> (i32, i32) {
    %c0_i32 = arith.constant 0 : i32
    %c0_i32_0 = arith.constant 0 : i32
    %c0_i32_1 = arith.constant 0 : i32
    return %c0_i32, %c0_i32_0 : i32, i32
  }
  func.func @transform_14(%arg0: i32) -> (i32, i32) {
    %c0_i32 = arith.constant 0 : i32
    %c0_i32_0 = arith.constant 0 : i32
    %c0_i32_1 = arith.constant 0 : i32
    return %c0_i32, %c0_i32_0 : i32, i32
  }
  func.func @transform_15(%arg0: i32) -> (i32, i32, i32) {
    %c0_i32 = arith.constant 0 : i32
    %c0_i32_0 = arith.constant 0 : i32
    %c0_i32_1 = arith.constant 0 : i32
    return %arg0, %c0_i32, %c0_i32_0 : i32, i32, i32
  }
}

</mosaic_0001>

<llo_original>
// kernel: _lambda_.3
$region0: #{_lambda_.3}
  #allocation0 [shape = 'u32[]', space=smem, size = 0x4, offset = 0x4, fixed_abs, tag = 'smem constant byte address 0x4 - core index']
  #allocation1 [shape = 'u32[144,128]{1,0:T(1,128)}', space=vmem, size = 0x12000, scoped, tag = 'internal scratch']
  %s0 = inlined_call_operand.vmem [shape: f32[2,16,32], index: 0, kind: input, shape index: {}]
  %s1 = inlined_call_operand.vmem [shape: bf16[5,16,16], index: 1, kind: input, shape index: {}]
  %s2 = inlined_call_operand.vmem [shape: bf16[5,32,32], index: 2, kind: input, shape index: {}]
  %s3 = inlined_call_operand.vmem [shape: f32[1,32], index: 3, kind: input, shape index: {}]
  %s4 = inlined_call_operand.vmem [shape: f32[1,32], index: 4, kind: input, shape index: {}]
  %s5 = inlined_call_operand.vmem [shape: f32[1,32], index: 5, kind: input, shape index: {}]
  %s6 = inlined_call_operand.vmem [shape: f32[2,1,32], index: 6, kind: input, shape index: {}]
  %s7 = inlined_call_operand.vmem [shape: f32[2,1,32], index: 7, kind: input, shape index: {}]
  %s8 = inlined_call_operand.vmem [shape: bf16[5,32,32], index: 8, kind: input, shape index: {}]
  %s9 = inlined_call_operand.vmem [shape: f32[1,32], index: 9, kind: input, shape index: {}]
  %s10 = inlined_call_operand.vmem [shape: f32[1,32], index: 10, kind: input, shape index: {}]
  %s11 = inlined_call_operand.vmem [shape: f32[1,32], index: 11, kind: input, shape index: {}]
  %s12 = inlined_call_operand.vmem [shape: f32[32,32], index: 12, kind: input, shape index: {}]
  %s13 = inlined_call_operand.hbm [shape: f32[2,16,32], index: 13, kind: output, shape index: {}]
  %s14 = sld [smem:[#allocation0]]
  $region85: #{_lambda_.3} parent=0
    _
  %s16 = ssub.s32 1, %s14
  %s17 = scalar_select 0, %s16, %s14
  $region1: #{_lambda_.3} parent=0
    #allocation2 [shape = 'u8[16384]{0}', space=vmem, size = 0x4000, scoped, tag = 'output window, operand 0']
    #allocation3 [shape = 's32[2]{0}', space=sflag, size = 0x8, scoped, tag = 'scoped memory for _lambda_.3']
    %18 = vsyncpa [#allocation3], 0
    %s19 = scalar_lea.sflag [#allocation3], 1
    %20 = vsyncpa %s19, 0
    loop: start=0, step=1, limit=4
    $region2: #{_lambda_.3} parent=1 // loop_pre_header
      _
    $region3: #{_lambda_.3} parent=1 // loop_header
      %s22 = sphi 0, %s26
      %p23 = scmp.ge.s32.totalorder %s22, 4
      %s32 = sphi 0, %s34
      %s35 = sphi 0, %s32
      %s36 = sphi 0, %s35
      %s52 = sphi 0, %s36
      %s56 = sphi 0, %s56
      %s58 = sphi 0, %s56
      %s59 = sphi 0, %s58
      %s73 = sphi 0, %s59
      %s77 = sphi 0, %s77
      %s79 = sphi 0, %s77
      %s80 = sphi 0, %s79
      %s94 = sphi 0, %s80
      %s98 = sphi 0, %s98
      %s100 = sphi 0, %s98
      %s101 = sphi 0, %s100
      %s115 = sphi 0, %s101
      %s119 = sphi 0, %s119
      %s121 = sphi 0, %s119
      %s122 = sphi 0, %s121
      %s136 = sphi 0, %s122
      %s140 = sphi 0, %s140
      %s142 = sphi 0, %s140
      %s143 = sphi 0, %s142
      %s157 = sphi 0, %s143
      %s163 = sphi 0, %s165
      %s166 = sphi 0, %s163
      %s167 = sphi 0, %s166
      %s183 = sphi 0, %s167
      %s189 = sphi 0, %s191
      %s192 = sphi 0, %s189
      %s193 = sphi 0, %s192
      %s209 = sphi 0, %s193
      %s213 = sphi 0, %s213
      %s215 = sphi 0, %s213
      %s216 = sphi 0, %s215
      %s230 = sphi 0, %s216
      %s234 = sphi 0, %s234
      %s236 = sphi 0, %s234
      %s237 = sphi 0, %s236
      %s251 = sphi 0, %s237
      %s255 = sphi 0, %s255
      %s257 = sphi 0, %s255
      %s258 = sphi 0, %s257
      %s272 = sphi 0, %s258
      %s276 = sphi 0, %s276
      %s278 = sphi 0, %s276
      %s279 = sphi 0, %s278
      %s293 = sphi 0, %s279
      %s297 = sphi 0, %s297
      %s299 = sphi 0, %s297
      %s300 = sphi 0, %s299
      %s314 = sphi 0, %s300
      %s320 = sphi 0, %s322
      %s323 = sphi 0, %s320
      %s324 = sphi 0, %s323
      %s340 = sphi 0, %s324
    $region4: #{_lambda_.3} parent=1 // loop_header_branch
      %25 = sbr.rel (%p23) target = $region8
    $region5: #{_lambda_.3} parent=1 // loop_body
      %s27 = ssub.s32 %s22, 1
      %s28 = ssub.s32 %s22, 2
      %s29 = sadd.s32 %s22, 1
      %s30 = ssub.s32 %s22, %s29
      %p31 = scmp.eq.s32.totalorder %s30, 0
      %s33 = sadd.s32 %s32, 1
      %s34 = scalar_select %p31, %s32, %s33
      %p37 = pneg %p31
      %p38 = scmp.eq.s32.totalorder %s22, 1
      %p39 = por %p37, %p38
      %p40 = scmp.ne.s32.totalorder %s32, %s35
      %p41 = scmp.eq.s32.totalorder %s22, 0
      %p42 = por %p40, %p41
      %p43 = scmp.ne.s32.totalorder %s32, %s35
      %p44 = scmp.eq.s32.totalorder %s27, 1
      %p45 = por %p43, %p44
      %p46 = scmp.ne.s32.totalorder %s35, %s36
      %p47 = scmp.eq.s32.totalorder %s27, 0
      %p48 = por %p46, %p47
      %p49 = scmp.ne.s32.totalorder %s35, %s36
      %p50 = scmp.eq.s32.totalorder %s28, 1
      %p51 = por %p49, %p50
      %p53 = scmp.ne.s32.totalorder %s36, %s52
      %p54 = scmp.eq.s32.totalorder %s28, 0
      %p55 = por %p53, %p54
      %s57 = sadd.s32 %s56, 1
      %p60 = scmp.eq.s32.totalorder %s22, 1
      %p61 = scmp.ne.s32.totalorder %s56, %s58
      %p62 = scmp.eq.s32.totalorder %s22, 0
      %p63 = por %p61, %p62
      %p64 = scmp.ne.s32.totalorder %s56, %s58
      %p65 = scmp.eq.s32.totalorder %s27, 1
      %p66 = por %p64, %p65
      %p67 = scmp.ne.s32.totalorder %s58, %s59
      %p68 = scmp.eq.s32.totalorder %s27, 0
      %p69 = por %p67, %p68
      %p70 = scmp.ne.s32.totalorder %s58, %s59
      %p71 = scmp.eq.s32.totalorder %s28, 1
      %p72 = por %p70, %p71
      %p74 = scmp.ne.s32.totalorder %s59, %s73
      %p75 = scmp.eq.s32.totalorder %s28, 0
      %p76 = por %p74, %p75
      %s78 = sadd.s32 %s77, 1
      %p81 = scmp.eq.s32.totalorder %s22, 1
      %p82 = scmp.ne.s32.totalorder %s77, %s79
      %p83 = scmp.eq.s32.totalorder %s22, 0
      %p84 = por %p82, %p83
      %p85 = scmp.ne.s32.totalorder %s77, %s79
      %p86 = scmp.eq.s32.totalorder %s27, 1
      %p87 = por %p85, %p86
      %p88 = scmp.ne.s32.totalorder %s79, %s80
      %p89 = scmp.eq.s32.totalorder %s27, 0
      %p90 = por %p88, %p89
      %p91 = scmp.ne.s32.totalorder %s79, %s80
      %p92 = scmp.eq.s32.totalorder %s28, 1
      %p93 = por %p91, %p92
      %p95 = scmp.ne.s32.totalorder %s80, %s94
      %p96 = scmp.eq.s32.totalorder %s28, 0
      %p97 = por %p95, %p96
      %s99 = sadd.s32 %s98, 1
      %p102 = scmp.eq.s32.totalorder %s22, 1
      %p103 = scmp.ne.s32.totalorder %s98, %s100
      %p104 = scmp.eq.s32.totalorder %s22, 0
      %p105 = por %p103, %p104
      %p106 = scmp.ne.s32.totalorder %s98, %s100
      %p107 = scmp.eq.s32.totalorder %s27, 1
      %p108 = por %p106, %p107
      %p109 = scmp.ne.s32.totalorder %s100, %s101
      %p110 = scmp.eq.s32.totalorder %s27, 0
      %p111 = por %p109, %p110
      %p112 = scmp.ne.s32.totalorder %s100, %s101
      %p113 = scmp.eq.s32.totalorder %s28, 1
      %p114 = por %p112, %p113
      %p116 = scmp.ne.s32.totalorder %s101, %s115
      %p117 = scmp.eq.s32.totalorder %s28, 0
      %p118 = por %p116, %p117
      %s120 = sadd.s32 %s119, 1
      %p123 = scmp.eq.s32.totalorder %s22, 1
      %p124 = scmp.ne.s32.totalorder %s119, %s121
      %p125 = scmp.eq.s32.totalorder %s22, 0
      %p126 = por %p124, %p125
      %p127 = scmp.ne.s32.totalorder %s119, %s121
      %p128 = scmp.eq.s32.totalorder %s27, 1
      %p129 = por %p127, %p128
      %p130 = scmp.ne.s32.totalorder %s121, %s122
      %p131 = scmp.eq.s32.totalorder %s27, 0
      %p132 = por %p130, %p131
      %p133 = scmp.ne.s32.totalorder %s121, %s122
      %p134 = scmp.eq.s32.totalorder %s28, 1
      %p135 = por %p133, %p134
      %p137 = scmp.ne.s32.totalorder %s122, %s136
      %p138 = scmp.eq.s32.totalorder %s28, 0
      %p139 = por %p137, %p138
      %s141 = sadd.s32 %s140, 1
      %p144 = scmp.eq.s32.totalorder %s22, 1
      %p145 = scmp.ne.s32.totalorder %s140, %s142
      %p146 = scmp.eq.s32.totalorder %s22, 0
      %p147 = por %p145, %p146
      %p148 = scmp.ne.s32.totalorder %s140, %s142
      %p149 = scmp.eq.s32.totalorder %s27, 1
      %p150 = por %p148, %p149
      %p151 = scmp.ne.s32.totalorder %s142, %s143
      %p152 = scmp.eq.s32.totalorder %s27, 0
      %p153 = por %p151, %p152
      %p154 = scmp.ne.s32.totalorder %s142, %s143
      %p155 = scmp.eq.s32.totalorder %s28, 1
      %p156 = por %p154, %p155
      %p158 = scmp.ne.s32.totalorder %s143, %s157
      %p159 = scmp.eq.s32.totalorder %s28, 0
      %p160 = por %p158, %p159
      %s161 = ssub.s32 %s22, %s29
      %p162 = scmp.eq.s32.totalorder %s161, 0
      %s164 = sadd.s32 %s163, 1
      %s165 = scalar_select %p162, %s163, %s164
      %p168 = pneg %p162
      %p169 = scmp.eq.s32.totalorder %s22, 1
      %p170 = por %p168, %p169
      %p171 = scmp.ne.s32.totalorder %s163, %s166
      %p172 = scmp.eq.s32.totalorder %s22, 0
      %p173 = por %p171, %p172
      %p174 = scmp.ne.s32.totalorder %s163, %s166
      %p175 = scmp.eq.s32.totalorder %s27, 1
      %p176 = por %p174, %p175
      %p177 = scmp.ne.s32.totalorder %s166, %s167
      %p178 = scmp.eq.s32.totalorder %s27, 0
      %p179 = por %p177, %p178
      %p180 = scmp.ne.s32.totalorder %s166, %s167
      %p181 = scmp.eq.s32.totalorder %s28, 1
      %p182 = por %p180, %p181
      %p184 = scmp.ne.s32.totalorder %s167, %s183
      %p185 = scmp.eq.s32.totalorder %s28, 0
      %p186 = por %p184, %p185
      %s187 = ssub.s32 %s22, %s29
      %p188 = scmp.eq.s32.totalorder %s187, 0
      %s190 = sadd.s32 %s189, 1
      %s191 = scalar_select %p188, %s189, %s190
      %p194 = pneg %p188
      %p195 = scmp.eq.s32.totalorder %s22, 1
      %p196 = por %p194, %p195
      %p197 = scmp.ne.s32.totalorder %s189, %s192
      %p198 = scmp.eq.s32.totalorder %s22, 0
      %p199 = por %p197, %p198
      %p200 = scmp.ne.s32.totalorder %s189, %s192
      %p201 = scmp.eq.s32.totalorder %s27, 1
      %p202 = por %p200, %p201
      %p203 = scmp.ne.s32.totalorder %s192, %s193
      %p204 = scmp.eq.s32.totalorder %s27, 0
      %p205 = por %p203, %p204
      %p206 = scmp.ne.s32.totalorder %s192, %s193
      %p207 = scmp.eq.s32.totalorder %s28, 1
      %p208 = por %p206, %p207
      %p210 = scmp.ne.s32.totalorder %s193, %s209
      %p211 = scmp.eq.s32.totalorder %s28, 0
      %p212 = por %p210, %p211
      %s214 = sadd.s32 %s213, 1
      %p217 = scmp.eq.s32.totalorder %s22, 1
      %p218 = scmp.ne.s32.totalorder %s213, %s215
      %p219 = scmp.eq.s32.totalorder %s22, 0
      %p220 = por %p218, %p219
      %p221 = scmp.ne.s32.totalorder %s213, %s215
      %p222 = scmp.eq.s32.totalorder %s27, 1
      %p223 = por %p221, %p222
      %p224 = scmp.ne.s32.totalorder %s215, %s216
      %p225 = scmp.eq.s32.totalorder %s27, 0
      %p226 = por %p224, %p225
      %p227 = scmp.ne.s32.totalorder %s215, %s216
      %p228 = scmp.eq.s32.totalorder %s28, 1
      %p229 = por %p227, %p228
      %p231 = scmp.ne.s32.totalorder %s216, %s230
      %p232 = scmp.eq.s32.totalorder %s28, 0
      %p233 = por %p231, %p232
      %s235 = sadd.s32 %s234, 1
      %p238 = scmp.eq.s32.totalorder %s22, 1
      %p239 = scmp.ne.s32.totalorder %s234, %s236
      %p240 = scmp.eq.s32.totalorder %s22, 0
      %p241 = por %p239, %p240
      %p242 = scmp.ne.s32.totalorder %s234, %s236
      %p243 = scmp.eq.s32.totalorder %s27, 1
      %p244 = por %p242, %p243
      %p245 = scmp.ne.s32.totalorder %s236, %s237
      %p246 = scmp.eq.s32.totalorder %s27, 0
      %p247 = por %p245, %p246
      %p248 = scmp.ne.s32.totalorder %s236, %s237
      %p249 = scmp.eq.s32.totalorder %s28, 1
      %p250 = por %p248, %p249
      %p252 = scmp.ne.s32.totalorder %s237, %s251
      %p253 = scmp.eq.s32.totalorder %s28, 0
      %p254 = por %p252, %p253
      %s256 = sadd.s32 %s255, 1
      %p259 = scmp.eq.s32.totalorder %s22, 1
      %p260 = scmp.ne.s32.totalorder %s255, %s257
      %p261 = scmp.eq.s32.totalorder %s22, 0
      %p262 = por %p260, %p261
      %p263 = scmp.ne.s32.totalorder %s255, %s257
      %p264 = scmp.eq.s32.totalorder %s27, 1
      %p265 = por %p263, %p264
      %p266 = scmp.ne.s32.totalorder %s257, %s258
      %p267 = scmp.eq.s32.totalorder %s27, 0
      %p268 = por %p266, %p267
      %p269 = scmp.ne.s32.totalorder %s257, %s258
      %p270 = scmp.eq.s32.totalorder %s28, 1
      %p271 = por %p269, %p270
      %p273 = scmp.ne.s32.totalorder %s258, %s272
      %p274 = scmp.eq.s32.totalorder %s28, 0
      %p275 = por %p273, %p274
      %s277 = sadd.s32 %s276, 1
      %p280 = scmp.eq.s32.totalorder %s22, 1
      %p281 = scmp.ne.s32.totalorder %s276, %s278
      %p282 = scmp.eq.s32.totalorder %s22, 0
      %p283 = por %p281, %p282
      %p284 = scmp.ne.s32.totalorder %s276, %s278
      %p285 = scmp.eq.s32.totalorder %s27, 1
      %p286 = por %p284, %p285
      %p287 = scmp.ne.s32.totalorder %s278, %s279
      %p288 = scmp.eq.s32.totalorder %s27, 0
      %p289 = por %p287, %p288
      %p290 = scmp.ne.s32.totalorder %s278, %s279
      %p291 = scmp.eq.s32.totalorder %s28, 1
      %p292 = por %p290, %p291
      %p294 = scmp.ne.s32.totalorder %s279, %s293
      %p295 = scmp.eq.s32.totalorder %s28, 0
      %p296 = por %p294, %p295
      %s298 = sadd.s32 %s297, 1
      %p301 = scmp.eq.s32.totalorder %s22, 1
      %p302 = scmp.ne.s32.totalorder %s297, %s299
      %p303 = scmp.eq.s32.totalorder %s22, 0
      %p304 = por %p302, %p303
      %p305 = scmp.ne.s32.totalorder %s297, %s299
      %p306 = scmp.eq.s32.totalorder %s27, 1
      %p307 = por %p305, %p306
      %p308 = scmp.ne.s32.totalorder %s299, %s300
      %p309 = scmp.eq.s32.totalorder %s27, 0
      %p310 = por %p308, %p309
      %p311 = scmp.ne.s32.totalorder %s299, %s300
      %p312 = scmp.eq.s32.totalorder %s28, 1
      %p313 = por %p311, %p312
      %p315 = scmp.ne.s32.totalorder %s300, %s314
      %p316 = scmp.eq.s32.totalorder %s28, 0
      %p317 = por %p315, %p316
      %s318 = ssub.s32 %s22, %s29
      %p319 = scmp.eq.s32.totalorder %s318, 0
      %s321 = sadd.s32 %s320, 1
      %s322 = scalar_select %p319, %s320, %s321
      %p325 = pneg %p319
      %p326 = scmp.eq.s32.totalorder %s22, 1
      %p327 = por %p325, %p326
      %p328 = scmp.ne.s32.totalorder %s320, %s323
      %p329 = scmp.eq.s32.totalorder %s22, 0
      %p330 = por %p328, %p329
      %p331 = scmp.ne.s32.totalorder %s320, %s323
      %p332 = scmp.eq.s32.totalorder %s27, 1
      %p333 = por %p331, %p332
      %p334 = scmp.ne.s32.totalorder %s323, %s324
      %p335 = scmp.eq.s32.totalorder %s27, 0
      %p336 = por %p334, %p335
      %p337 = scmp.ne.s32.totalorder %s323, %s324
      %p338 = scmp.eq.s32.totalorder %s28, 1
      %p339 = por %p337, %p338
      %p341 = scmp.ne.s32.totalorder %s324, %s340
      %p342 = scmp.eq.s32.totalorder %s28, 0
      %p343 = por %p341, %p342
      %p344 = scmp.le.s32.totalorder 1, %s22
      %p345 = scmp.lt.s32.totalorder %s22, 3
      %p346 = pnand %p344, %p345
      %p347 = pneg %p346
      // Predicated region
      $region9: #{_lambda_.3} parent=5 // pred_check
        _
      $region10: #{_lambda_.3} parent=5 // pred_check_branch
        %349 = sbr.rel (%p346) target = $region12
      $region11: #{_lambda_.3} parent=5 // pred_region
        %s350 = ssub.s32 %s22, 1
        // Predicated region
        $region13: #{_lambda_.3} parent=11 // pred_check
          %p351 = pneg %p69
        $region14: #{_lambda_.3} parent=11 // pred_check_branch
          %353 = sbr.rel (%p351) target = $region16
        $region15: #{_lambda_.3} parent=11 // pred_region
          _
        $region16: #{_lambda_.3} parent=11 // pred_fallthru
          _
        // Predicated region
        $region17: #{_lambda_.3} parent=11 // pred_check
          %p354 = pneg %p90
        $region18: #{_lambda_.3} parent=11 // pred_check_branch
          %356 = sbr.rel (%p354) target = $region20
        $region19: #{_lambda_.3} parent=11 // pred_region
          _
        $region20: #{_lambda_.3} parent=11 // pred_fallthru
          _
        // Predicated region
        $region21: #{_lambda_.3} parent=11 // pred_check
          %p357 = pneg %p111
        $region22: #{_lambda_.3} parent=11 // pred_check_branch
          %359 = sbr.rel (%p357) target = $region24
        $region23: #{_lambda_.3} parent=11 // pred_region
          _
        $region24: #{_lambda_.3} parent=11 // pred_fallthru
          _
        // Predicated region
        $region25: #{_lambda_.3} parent=11 // pred_check
          %p360 = pneg %p132
        $region26: #{_lambda_.3} parent=11 // pred_check_branch
          %362 = sbr.rel (%p360) target = $region28
        $region27: #{_lambda_.3} parent=11 // pred_region
          _
        $region28: #{_lambda_.3} parent=11 // pred_fallthru
          _
        // Predicated region
        $region29: #{_lambda_.3} parent=11 // pred_check
          %p363 = pneg %p153
        $region30: #{_lambda_.3} parent=11 // pred_check_branch
          %365 = sbr.rel (%p363) target = $region32
        $region31: #{_lambda_.3} parent=11 // pred_region
          _
        $region32: #{_lambda_.3} parent=11 // pred_fallthru
          _
        // Predicated region
        $region33: #{_lambda_.3} parent=11 // pred_check
          %p366 = pneg %p226
        $region34: #{_lambda_.3} parent=11 // pred_check_branch
          %368 = sbr.rel (%p366) target = $region36
        $region35: #{_lambda_.3} parent=11 // pred_region
          _
        $region36: #{_lambda_.3} parent=11 // pred_fallthru
          _
        // Predicated region
        $region37: #{_lambda_.3} parent=11 // pred_check
          %p369 = pneg %p247
        $region38: #{_lambda_.3} parent=11 // pred_check_branch
          %371 = sbr.rel (%p369) target = $region40
        $region39: #{_lambda_.3} parent=11 // pred_region
          _
        $region40: #{_lambda_.3} parent=11 // pred_fallthru
          _
        // Predicated region
        $region41: #{_lambda_.3} parent=11 // pred_check
          %p372 = pneg %p268
        $region42: #{_lambda_.3} parent=11 // pred_check_branch
          %374 = sbr.rel (%p372) target = $region44
        $region43: #{_lambda_.3} parent=11 // pred_region
          _
        $region44: #{_lambda_.3} parent=11 // pred_fallthru
          _
        // Predicated region
        $region45: #{_lambda_.3} parent=11 // pred_check
          %p375 = pneg %p289
        $region46: #{_lambda_.3} parent=11 // pred_check_branch
          %377 = sbr.rel (%p375) target = $region48
        $region47: #{_lambda_.3} parent=11 // pred_region
          _
        $region48: #{_lambda_.3} parent=11 // pred_fallthru
          _
        // Predicated region
        $region49: #{_lambda_.3} parent=11 // pred_check
          %p378 = pneg %p310
        $region50: #{_lambda_.3} parent=11 // pred_check_branch
          %380 = sbr.rel (%p378) target = $region52
        $region51: #{_lambda_.3} parent=11 // pred_region
          _
        $region52: #{_lambda_.3} parent=11 // pred_fallthru
          _
      $region12: #{_lambda_.3} parent=5 // pred_fallthru
        _
      %p381 = scmp.lt.s32.totalorder %s22, 2
      // Predicated region
      $region53: #{_lambda_.3} parent=5 // pred_check
        %p382 = pneg %p381
      $region54: #{_lambda_.3} parent=5 // pred_check_branch
        %384 = sbr.rel (%p382) target = $region56
      $region55: #{_lambda_.3} parent=5 // pred_region
        // Predicated region
        $region57: #{_lambda_.3} parent=55 // pred_check
          %p385 = pneg %p42
        $region58: #{_lambda_.3} parent=55 // pred_check_branch
          %387 = sbr.rel (%p385) target = $region60
        $region59: #{_lambda_.3} parent=55 // pred_region
          %p388 = scmp.lt.s32.totalorder %s22, 1
          %s389 = scalar_select %p388, %s22, 1
          %s390 = smul.addr %s389, 2
          %s391 = smul.addr %s390, 8
          %s392 = scalar_lea.vmem %s0, %s391
        $region60: #{_lambda_.3} parent=55 // pred_fallthru
          _
        // Predicated region
        $region61: #{_lambda_.3} parent=55 // pred_check
          %p393 = pneg %p173
        $region62: #{_lambda_.3} parent=55 // pred_check_branch
          %395 = sbr.rel (%p393) target = $region64
        $region63: #{_lambda_.3} parent=55 // pred_region
          %p396 = scmp.lt.s32.totalorder %s22, 1
          %s397 = scalar_select %p396, %s22, 1
          %s398 = scalar_lea.vmem %s6, %s397
        $region64: #{_lambda_.3} parent=55 // pred_fallthru
          _
        // Predicated region
        $region65: #{_lambda_.3} parent=55 // pred_check
          %p399 = pneg %p199
        $region66: #{_lambda_.3} parent=55 // pred_check_branch
          %401 = sbr.rel (%p399) target = $region68
        $region67: #{_lambda_.3} parent=55 // pred_region
          %p402 = scmp.lt.s32.totalorder %s22, 1
          %s403 = scalar_select %p402, %s22, 1
          %s404 = scalar_lea.vmem %s7, %s403
        $region68: #{_lambda_.3} parent=55 // pred_fallthru
          _
      $region56: #{_lambda_.3} parent=5 // pred_fallthru
        _
      %p405 = scmp.le.s32.totalorder 1, %s22
      %p406 = scmp.lt.s32.totalorder %s22, 3
      %p407 = pnand %p405, %p406
      %p408 = pneg %p407
      // Predicated region
      $region69: #{_lambda_.3} parent=5 // pred_check
        _
      $region70: #{_lambda_.3} parent=5 // pred_check_branch
        %410 = sbr.rel (%p407) target = $region72
      $region71: #{_lambda_.3} parent=5 // pred_region
        %s411 = ssub.s32 %s22, 1
        %p412 = scmp.lt.s32.totalorder %s27, 1
        %s413 = scalar_select %p412, %s27, 1
        %s414 = smul.addr %s413, 2
        %s415 = smul.addr %s414, 8
        %s416 = scalar_lea.vmem %s0, %s415
        %p417 = pneg %p48
        %p418 = pneg %p45
        %p419 = pneg %p69
        %p420 = pneg %p66
        %p421 = pneg %p90
        %p422 = pneg %p87
        %p423 = pneg %p111
        %p424 = pneg %p108
        %p425 = pneg %p132
        %p426 = pneg %p129
        %p427 = pneg %p153
        %p428 = pneg %p150
        %p429 = scmp.lt.s32.totalorder %s27, 1
        %s430 = scalar_select %p429, %s27, 1
        %s431 = scalar_lea.vmem %s6, %s430
        %p432 = pneg %p179
        %p433 = pneg %p176
        %p434 = scmp.lt.s32.totalorder %s27, 1
        %s435 = scalar_select %p434, %s27, 1
        %s436 = scalar_lea.vmem %s7, %s435
        %p437 = pneg %p205
        %p438 = pneg %p202
        %p439 = pneg %p226
        %p440 = pneg %p223
        %p441 = pneg %p247
        %p442 = pneg %p244
        %p443 = pneg %p268
        %p444 = pneg %p265
        %p445 = pneg %p289
        %p446 = pneg %p286
        %p447 = pneg %p310
        %p448 = pneg %p307
        %p449 = pneg %p336
        %p450 = pneg %p333
        %s451 = sand.u32 %s323, 1
        %s452 = scalar_lea.sflag [#allocation3], %s451
        %s453 = sand.u32 %s323, 1
        %s454 = smul.addr %s453, 16
        %s455 = scalar_lea.vmem [#allocation2], %s454
        %p456 = scmp.lt.s32.totalorder %s27, 1
        %s457 = scalar_select %p456, %s27, 1
        %s458 = smul.addr %s457, 2
        %s459 = smul.addr %s458, 8
        %s460 = scalar_lea.vmem %s0, %s459
        %p461 = scmp.lt.s32.totalorder %s27, 1
        %s462 = scalar_select %p461, %s27, 1
        %s463 = scalar_lea.vmem %s6, %s462
        %p464 = scmp.lt.s32.totalorder %s27, 1
        %s465 = scalar_select %p464, %s27, 1
        %s466 = scalar_lea.vmem %s7, %s465
        %v468 = vld [vmem:[%s12] sm:$0xff]
        %v469 = vld [vmem:[%s12 + $0x8] sm:$0xff]
        %v470 = vld [vmem:[%s12 + $0x10] sm:$0xff]
        %v471 = vld [vmem:[%s12 + $0x18] sm:$0xff]
        %v472 = vld [vmem:[%s460] sm:$0xff]
        %v473 = vld [vmem:[%s460 + $0x8] sm:$0xff]
        %v474 = vpack.c.bf16 %v473, %v472
        %v475 = vld [vmem:[%s1] sm:$0xf]
        %v476 = vld [vmem:[%s1 + $0x4] sm:$0xf]
        %v479 = vunpack.c.l.b16 %v475
        %v480 = vunpack.c.l.b16 %v476
        %v481 = vpack.c.b16 %v480, %v479
        %vm482 = vcmask 130048
        %v484 = vsel %vm482, %v481, 0
        %486 = vmatprep.subr.bf16.mxu0 0
        %487 = vmatpush1.bf16.msra.mxu0 %v474
        %488 = vmatprep.subr.bf16.mxu0 0
        %489 = vmatpush1.bf16.msra.mxu0 0
        %490 = vmatprep.subr.bf16.mxu0 0
        %491 = vmatpush1.bf16.msra.mxu0 0
        %492 = vmatprep.subr.bf16.mxu0 0
        %493 = vmatpush1.bf16.msra.mxu0 0
        %494 = vmatprep.subr.bf16.mxu0 0
        %495 = vmatpush1.bf16.msra.mxu0 0
        %496 = vmatprep.subr.bf16.mxu0 0
        %497 = vmatpush1.bf16.msra.mxu0 0
        %498 = vmatprep.subr.bf16.mxu0 0
        %499 = vmatpush1.bf16.msra.mxu0 0
        %500 = vmatprep.subr.bf16.mxu0 0
        %501 = vmatpush1.bf16.msra.mxu0 0
        %502 = vmatprep.subr.bf16.mxu0 0
        %503 = vmatpush1.bf16.msra.mxu0 0
        %504 = vmatprep.subr.bf16.mxu0 0
        %505 = vmatpush1.bf16.msra.mxu0 0
        %506 = vmatprep.subr.bf16.mxu0 0
        %507 = vmatpush1.bf16.msra.mxu0 0
        %508 = vmatprep.subr.bf16.mxu0 0
        %509 = vmatpush1.bf16.msra.mxu0 0
        %510 = vmatprep.subr.bf16.mxu0 0
        %511 = vmatpush1.bf16.msra.mxu0 0
        %512 = vmatprep.subr.bf16.mxu0 0
        %513 = vmatpush1.bf16.msra.mxu0 0
        %514 = vmatprep.subr.bf16.mxu0 0
        %515 = vmatpush1.bf16.msra.mxu0 0
        %516 = vmatprep.subr.bf16.mxu0 0
        %517 = vmatpush1.bf16.msra.mxu0 0
        %518 = vmatprep.mubr.bf16.mxu0 0
        %519 = vmatmul.mubr.bf16.gmra.mrb[0].mxu0 %v484
        %v520 = vpop.f32.mrb[0].mxu0
        %v521 = vadd.f32 0.0, %v520
        %v522 = vpop.f32.mrb[0].mxu0
        %v523 = vpop.f32.mrb[0].mxu0
        %v524 = vadd.f32 0.0, %v523
        %v525 = vpop.f32.mrb[0].mxu0
        %526 = vdwg.mxu0
        %v527 = vpack.c.bf16 %v524, %v521
        %v528 = vld [vmem:[%s2] sm:$0xf]
        %v529 = vld [vmem:[%s2 + $0x4] sm:$0xf]
        %v530 = vld [vmem:[%s2 + $0x8] sm:$0xf]
        %v531 = vld [vmem:[%s2 + $0xc] sm:$0xf]
        %s532 = scalar_lea.vmem %s1, 8
        %v533 = vld [vmem:[%s532] sm:$0xf]
        %v534 = vld [vmem:[%s532 + $0x4] sm:$0xf]
        %v537 = vunpack.c.l.b16 %v533
        %v538 = vunpack.c.l.b16 %v534
        %v539 = vpack.c.b16 %v538, %v537
        %v541 = vsel %vm482, %v539, 0
        %543 = vmatprep.subr.bf16.mxu0 0
        %544 = vmatpush1.bf16.msra.mxu0 %v474
        %545 = vmatprep.subr.bf16.mxu0 0
        %546 = vmatpush1.bf16.msra.mxu0 0
        %547 = vmatprep.subr.bf16.mxu0 0
        %548 = vmatpush1.bf16.msra.mxu0 0
        %549 = vmatprep.subr.bf16.mxu0 0
        %550 = vmatpush1.bf16.msra.mxu0 0
        %551 = vmatprep.subr.bf16.mxu0 0
        %552 = vmatpush1.bf16.msra.mxu0 0
        %553 = vmatprep.subr.bf16.mxu0 0
        %554 = vmatpush1.bf16.msra.mxu0 0
        %555 = vmatprep.subr.bf16.mxu0 0
        %556 = vmatpush1.bf16.msra.mxu0 0
        %557 = vmatprep.subr.bf16.mxu0 0
        %558 = vmatpush1.bf16.msra.mxu0 0
        %559 = vmatprep.subr.bf16.mxu0 0
        %560 = vmatpush1.bf16.msra.mxu0 0
        %561 = vmatprep.subr.bf16.mxu0 0
        %562 = vmatpush1.bf16.msra.mxu0 0
        %563 = vmatprep.subr.bf16.mxu0 0
        %564 = vmatpush1.bf16.msra.mxu0 0
        %565 = vmatprep.subr.bf16.mxu0 0
        %566 = vmatpush1.bf16.msra.mxu0 0
        %567 = vmatprep.subr.bf16.mxu0 0
        %568 = vmatpush1.bf16.msra.mxu0 0
        %569 = vmatprep.subr.bf16.mxu0 0
        %570 = vmatpush1.bf16.msra.mxu0 0
        %571 = vmatprep.subr.bf16.mxu0 0
        %572 = vmatpush1.bf16.msra.mxu0 0
        %573 = vmatprep.subr.bf16.mxu0 0
        %574 = vmatpush1.bf16.msra.mxu0 0
        %575 = vmatprep.mubr.bf16.mxu0 0
        %576 = vmatmul.mubr.bf16.gmra.mrb[0].mxu0 %v541
        %v577 = vpop.f32.mrb[0].mxu0
        %v578 = vadd.f32 0.0, %v577
        %v579 = vpop.f32.mrb[0].mxu0
        %v580 = vpop.f32.mrb[0].mxu0
        %v581 = vadd.f32 0.0, %v580
        %v582 = vpop.f32.mrb[0].mxu0
        %583 = vdwg.mxu0
        %v584 = vpack.c.bf16 %v581, %v578
        %s585 = scalar_lea.vmem %s2, 16
        %v586 = vld [vmem:[%s585] sm:$0xf]
        %v587 = vld [vmem:[%s585 + $0x4] sm:$0xf]
        %v588 = vld [vmem:[%s585 + $0x8] sm:$0xf]
        %v589 = vld [vmem:[%s585 + $0xc] sm:$0xf]
        %v594 = vunpack.c.l.b16 %v586
        %v595 = vunpack.c.l.b16 %v587
        %v596 = vunpack.c.l.b16 %v588
        %v597 = vunpack.c.l.b16 %v589
        %v598 = vpack.c.b16 %v595, %v594
        %v599 = vpack.c.b16 %v597, %v596
        %vm602 = vcmask 261120
        %v604 = vsel %vm602, %v584, 0
        %606 = vmatprep.subr.bf16.mxu0 0
        %607 = vmatpush1.bf16.msra.mxu0 %v598
        %608 = vmatprep.subr.bf16.mxu0 0
        %609 = vmatpush1.bf16.msra.mxu0 %v599
        %610 = vmatprep.subr.bf16.mxu0 0
        %611 = vmatpush1.bf16.msra.mxu0 0
        %612 = vmatprep.subr.bf16.mxu0 0
        %613 = vmatpush1.bf16.msra.mxu0 0
        %614 = vmatprep.subr.bf16.mxu0 0
        %615 = vmatpush1.bf16.msra.mxu0 0
        %616 = vmatprep.subr.bf16.mxu0 0
        %617 = vmatpush1.bf16.msra.mxu0 0
        %618 = vmatprep.subr.bf16.mxu0 0
        %619 = vmatpush1.bf16.msra.mxu0 0
        %620 = vmatprep.subr.bf16.mxu0 0
        %621 = vmatpush1.bf16.msra.mxu0 0
        %622 = vmatprep.subr.bf16.mxu0 0
        %623 = vmatpush1.bf16.msra.mxu0 0
        %624 = vmatprep.subr.bf16.mxu0 0
        %625 = vmatpush1.bf16.msra.mxu0 0
        %626 = vmatprep.subr.bf16.mxu0 0
        %627 = vmatpush1.bf16.msra.mxu0 0
        %628 = vmatprep.subr.bf16.mxu0 0
        %629 = vmatpush1.bf16.msra.mxu0 0
        %630 = vmatprep.subr.bf16.mxu0 0
        %631 = vmatpush1.bf16.msra.mxu0 0
        %632 = vmatprep.subr.bf16.mxu0 0
        %633 = vmatpush1.bf16.msra.mxu0 0
        %634 = vmatprep.subr.bf16.mxu0 0
        %635 = vmatpush1.bf16.msra.mxu0 0
        %636 = vmatprep.subr.bf16.mxu0 0
        %637 = vmatpush1.bf16.msra.mxu0 0
        %638 = vmatprep.mubr.bf16.mxu0 0
        %639 = vmatmul.mubr.bf16.gmra.mrb[0].mxu0 %v604
        %v640 = vpop.f32.mrb[0].mxu0
        %v641 = vadd.f32 0.0, %v640
        %v642 = vpop.f32.mrb[0].mxu0
        %v643 = vpop.f32.mrb[0].mxu0
        %v644 = vadd.f32 0.0, %v643
        %v645 = vpop.f32.mrb[0].mxu0
        %646 = vdwg.mxu0
        %v651 = vunpack.c.l.b16 %v528
        %v652 = vunpack.c.l.b16 %v529
        %v653 = vunpack.c.l.b16 %v530
        %v654 = vunpack.c.l.b16 %v531
        %v655 = vpack.c.b16 %v652, %v651
        %v656 = vpack.c.b16 %v654, %v653
        %v660 = vsel %vm602, %v527, 0
        %662 = vmatprep.subr.bf16.mxu0 0
        %663 = vmatpush1.bf16.msra.mxu0 %v655
        %664 = vmatprep.subr.bf16.mxu0 0
        %665 = vmatpush1.bf16.msra.mxu0 %v656
        %666 = vmatprep.subr.bf16.mxu0 0
        %667 = vmatpush1.bf16.msra.mxu0 0
        %668 = vmatprep.subr.bf16.mxu0 0
        %669 = vmatpush1.bf16.msra.mxu0 0
        %670 = vmatprep.subr.bf16.mxu0 0
        %671 = vmatpush1.bf16.msra.mxu0 0
        %672 = vmatprep.subr.bf16.mxu0 0
        %673 = vmatpush1.bf16.msra.mxu0 0
        %674 = vmatprep.subr.bf16.mxu0 0
        %675 = vmatpush1.bf16.msra.mxu0 0
        %676 = vmatprep.subr.bf16.mxu0 0
        %677 = vmatpush1.bf16.msra.mxu0 0
        %678 = vmatprep.subr.bf16.mxu0 0
        %679 = vmatpush1.bf16.msra.mxu0 0
        %680 = vmatprep.subr.bf16.mxu0 0
        %681 = vmatpush1.bf16.msra.mxu0 0
        %682 = vmatprep.subr.bf16.mxu0 0
        %683 = vmatpush1.bf16.msra.mxu0 0
        %684 = vmatprep.subr.bf16.mxu0 0
        %685 = vmatpush1.bf16.msra.mxu0 0
        %686 = vmatprep.subr.bf16.mxu0 0
        %687 = vmatpush1.bf16.msra.mxu0 0
        %688 = vmatprep.subr.bf16.mxu0 0
        %689 = vmatpush1.bf16.msra.mxu0 0
        %690 = vmatprep.subr.bf16.mxu0 0
        %691 = vmatpush1.bf16.msra.mxu0 0
        %692 = vmatprep.subr.bf16.mxu0 0
        %693 = vmatpush1.bf16.msra.mxu0 0
        %694 = vmatprep.mubr.bf16.mxu0 0
        %695 = vmatmul.mubr.bf16.gmra.mrb[0].mxu0 %v660
        %v696 = vpop.f32.mrb[0].mxu0
        %v697 = vadd.f32 %v641, %v696
        %v698 = vpop.f32.mrb[0].mxu0
        %v699 = vpop.f32.mrb[0].mxu0
        %v700 = vadd.f32 %v644, %v699
        %v701 = vpop.f32.mrb[0].mxu0
        %702 = vdwg.mxu0
        %s703 = scalar_lea.vmem %s1, 16
        %v704 = vld [vmem:[%s703] sm:$0xf]
        %v705 = vld [vmem:[%s703 + $0x4] sm:$0xf]
        %v708 = vunpack.c.l.b16 %v704
        %v709 = vunpack.c.l.b16 %v705
        %v710 = vpack.c.b16 %v709, %v708
        %v712 = vsel %vm482, %v710, 0
        %714 = vmatprep.subr.bf16.mxu0 0
        %715 = vmatpush1.bf16.msra.mxu0 %v474
        %716 = vmatprep.subr.bf16.mxu0 0
        %717 = vmatpush1.bf16.msra.mxu0 0
        %718 = vmatprep.subr.bf16.mxu0 0
        %719 = vmatpush1.bf16.msra.mxu0 0
        %720 = vmatprep.subr.bf16.mxu0 0
        %721 = vmatpush1.bf16.msra.mxu0 0
        %722 = vmatprep.subr.bf16.mxu0 0
        %723 = vmatpush1.bf16.msra.mxu0 0
        %724 = vmatprep.subr.bf16.mxu0 0
        %725 = vmatpush1.bf16.msra.mxu0 0
        %726 = vmatprep.subr.bf16.mxu0 0
        %727 = vmatpush1.bf16.msra.mxu0 0
        %728 = vmatprep.subr.bf16.mxu0 0
        %729 = vmatpush1.bf16.msra.mxu0 0
        %730 = vmatprep.subr.bf16.mxu0 0
        %731 = vmatpush1.bf16.msra.mxu0 0
        %732 = vmatprep.subr.bf16.mxu0 0
        %733 = vmatpush1.bf16.msra.mxu0 0
        %734 = vmatprep.subr.bf16.mxu0 0
        %735 = vmatpush1.bf16.msra.mxu0 0
        %736 = vmatprep.subr.bf16.mxu0 0
        %737 = vmatpush1.bf16.msra.mxu0 0
        %738 = vmatprep.subr.bf16.mxu0 0
        %739 = vmatpush1.bf16.msra.mxu0 0
        %740 = vmatprep.subr.bf16.mxu0 0
        %741 = vmatpush1.bf16.msra.mxu0 0
        %742 = vmatprep.subr.bf16.mxu0 0
        %743 = vmatpush1.bf16.msra.mxu0 0
        %744 = vmatprep.subr.bf16.mxu0 0
        %745 = vmatpush1.bf16.msra.mxu0 0
        %746 = vmatprep.mubr.bf16.mxu0 0
        %747 = vmatmul.mubr.bf16.gmra.mrb[0].mxu0 %v712
        %v748 = vpop.f32.mrb[0].mxu0
        %v749 = vadd.f32 0.0, %v748
        %v750 = vpop.f32.mrb[0].mxu0
        %v751 = vpop.f32.mrb[0].mxu0
        %v752 = vadd.f32 0.0, %v751
        %v753 = vpop.f32.mrb[0].mxu0
        %754 = vdwg.mxu0
        %v755 = vpack.c.bf16 %v752, %v749
        %s756 = scalar_lea.vmem %s2, 32
        %v757 = vld [vmem:[%s756] sm:$0xf]
        %v758 = vld [vmem:[%s756 + $0x4] sm:$0xf]
        %v759 = vld [vmem:[%s756 + $0x8] sm:$0xf]
        %v760 = vld [vmem:[%s756 + $0xc] sm:$0xf]
        %v765 = vunpack.c.l.b16 %v757
        %v766 = vunpack.c.l.b16 %v758
        %v767 = vunpack.c.l.b16 %v759
        %v768 = vunpack.c.l.b16 %v760
        %v769 = vpack.c.b16 %v766, %v765
        %v770 = vpack.c.b16 %v768, %v767
        %v774 = vsel %vm602, %v755, 0
        %776 = vmatprep.subr.bf16.mxu0 0
        %777 = vmatpush1.bf16.msra.mxu0 %v769
        %778 = vmatprep.subr.bf16.mxu0 0
        %779 = vmatpush1.bf16.msra.mxu0 %v770
        %780 = vmatprep.subr.bf16.mxu0 0
        %781 = vmatpush1.bf16.msra.mxu0 0
        %782 = vmatprep.subr.bf16.mxu0 0
        %783 = vmatpush1.bf16.msra.mxu0 0
        %784 = vmatprep.subr.bf16.mxu0 0
        %785 = vmatpush1.bf16.msra.mxu0 0
        %786 = vmatprep.subr.bf16.mxu0 0
        %787 = vmatpush1.bf16.msra.mxu0 0
        %788 = vmatprep.subr.bf16.mxu0 0
        %789 = vmatpush1.bf16.msra.mxu0 0
        %790 = vmatprep.subr.bf16.mxu0 0
        %791 = vmatpush1.bf16.msra.mxu0 0
        %792 = vmatprep.subr.bf16.mxu0 0
        %793 = vmatpush1.bf16.msra.mxu0 0
        %794 = vmatprep.subr.bf16.mxu0 0
        %795 = vmatpush1.bf16.msra.mxu0 0
        %796 = vmatprep.subr.bf16.mxu0 0
        %797 = vmatpush1.bf16.msra.mxu0 0
        %798 = vmatprep.subr.bf16.mxu0 0
        %799 = vmatpush1.bf16.msra.mxu0 0
        %800 = vmatprep.subr.bf16.mxu0 0
        %801 = vmatpush1.bf16.msra.mxu0 0
        %802 = vmatprep.subr.bf16.mxu0 0
        %803 = vmatpush1.bf16.msra.mxu0 0
        %804 = vmatprep.subr.bf16.mxu0 0
        %805 = vmatpush1.bf16.msra.mxu0 0
        %806 = vmatprep.subr.bf16.mxu0 0
        %807 = vmatpush1.bf16.msra.mxu0 0
        %808 = vmatprep.mubr.bf16.mxu0 0
        %809 = vmatmul.mubr.bf16.gmra.mrb[0].mxu0 %v774
        %v810 = vpop.f32.mrb[0].mxu0
        %v811 = vadd.f32 0.0, %v810
        %v812 = vpop.f32.mrb[0].mxu0
        %v813 = vpop.f32.mrb[0].mxu0
        %v814 = vadd.f32 0.0, %v813
        %v815 = vpop.f32.mrb[0].mxu0
        %816 = vdwg.mxu0
        %v817 = vadd.f32 %v697, %v811
        %v818 = vadd.f32 %v700, %v814
        %s819 = scalar_lea.vmem %s1, 24
        %v820 = vld [vmem:[%s819] sm:$0xf]
        %v821 = vld [vmem:[%s819 + $0x4] sm:$0xf]
        %v824 = vunpack.c.l.b16 %v820
        %v825 = vunpack.c.l.b16 %v821
        %v826 = vpack.c.b16 %v825, %v824
        %v828 = vsel %vm482, %v826, 0
        %830 = vmatprep.subr.bf16.mxu0 0
        %831 = vmatpush1.bf16.msra.mxu0 %v474
        %832 = vmatprep.subr.bf16.mxu0 0
        %833 = vmatpush1.bf16.msra.mxu0 0
        %834 = vmatprep.subr.bf16.mxu0 0
        %835 = vmatpush1.bf16.msra.mxu0 0
        %836 = vmatprep.subr.bf16.mxu0 0
        %837 = vmatpush1.bf16.msra.mxu0 0
        %838 = vmatprep.subr.bf16.mxu0 0
        %839 = vmatpush1.bf16.msra.mxu0 0
        %840 = vmatprep.subr.bf16.mxu0 0
        %841 = vmatpush1.bf16.msra.mxu0 0
        %842 = vmatprep.subr.bf16.mxu0 0
        %843 = vmatpush1.bf16.msra.mxu0 0
        %844 = vmatprep.subr.bf16.mxu0 0
        %845 = vmatpush1.bf16.msra.mxu0 0
        %846 = vmatprep.subr.bf16.mxu0 0
        %847 = vmatpush1.bf16.msra.mxu0 0
        %848 = vmatprep.subr.bf16.mxu0 0
        %849 = vmatpush1.bf16.msra.mxu0 0
        %850 = vmatprep.subr.bf16.mxu0 0
        %851 = vmatpush1.bf16.msra.mxu0 0
        %852 = vmatprep.subr.bf16.mxu0 0
        %853 = vmatpush1.bf16.msra.mxu0 0
        %854 = vmatprep.subr.bf16.mxu0 0
        %855 = vmatpush1.bf16.msra.mxu0 0
        %856 = vmatprep.subr.bf16.mxu0 0
        %857 = vmatpush1.bf16.msra.mxu0 0
        %858 = vmatprep.subr.bf16.mxu0 0
        %859 = vmatpush1.bf16.msra.mxu0 0
        %860 = vmatprep.subr.bf16.mxu0 0
        %861 = vmatpush1.bf16.msra.mxu0 0
        %862 = vmatprep.mubr.bf16.mxu0 0
        %863 = vmatmul.mubr.bf16.gmra.mrb[0].mxu0 %v828
        %v864 = vpop.f32.mrb[0].mxu0
        %v865 = vadd.f32 0.0, %v864
        %v866 = vpop.f32.mrb[0].mxu0
        %v867 = vpop.f32.mrb[0].mxu0
        %v868 = vadd.f32 0.0, %v867
        %v869 = vpop.f32.mrb[0].mxu0
        %870 = vdwg.mxu0
        %v871 = vpack.c.bf16 %v868, %v865
        %s872 = scalar_lea.vmem %s2, 48
        %v873 = vld [vmem:[%s872] sm:$0xf]
        %v874 = vld [vmem:[%s872 + $0x4] sm:$0xf]
        %v875 = vld [vmem:[%s872 + $0x8] sm:$0xf]
        %v876 = vld [vmem:[%s872 + $0xc] sm:$0xf]
        %v881 = vunpack.c.l.b16 %v873
        %v882 = vunpack.c.l.b16 %v874
        %v883 = vunpack.c.l.b16 %v875
        %v884 = vunpack.c.l.b16 %v876
        %v885 = vpack.c.b16 %v882, %v881
        %v886 = vpack.c.b16 %v884, %v883
        %v890 = vsel %vm602, %v871, 0
        %892 = vmatprep.subr.bf16.mxu0 0
        %893 = vmatpush1.bf16.msra.mxu0 %v885
        %894 = vmatprep.subr.bf16.mxu0 0
        %895 = vmatpush1.bf16.msra.mxu0 %v886
        %896 = vmatprep.subr.bf16.mxu0 0
        %897 = vmatpush1.bf16.msra.mxu0 0
        %898 = vmatprep.subr.bf16.mxu0 0
        %899 = vmatpush1.bf16.msra.mxu0 0
        %900 = vmatprep.subr.bf16.mxu0 0
        %901 = vmatpush1.bf16.msra.mxu0 0
        %902 = vmatprep.subr.bf16.mxu0 0
        %903 = vmatpush1.bf16.msra.mxu0 0
        %904 = vmatprep.subr.bf16.mxu0 0
        %905 = vmatpush1.bf16.msra.mxu0 0
        %906 = vmatprep.subr.bf16.mxu0 0
        %907 = vmatpush1.bf16.msra.mxu0 0
        %908 = vmatprep.subr.bf16.mxu0 0
        %909 = vmatpush1.bf16.msra.mxu0 0
        %910 = vmatprep.subr.bf16.mxu0 0
        %911 = vmatpush1.bf16.msra.mxu0 0
        %912 = vmatprep.subr.bf16.mxu0 0
        %913 = vmatpush1.bf16.msra.mxu0 0
        %914 = vmatprep.subr.bf16.mxu0 0
        %915 = vmatpush1.bf16.msra.mxu0 0
        %916 = vmatprep.subr.bf16.mxu0 0
        %917 = vmatpush1.bf16.msra.mxu0 0
        %918 = vmatprep.subr.bf16.mxu0 0
        %919 = vmatpush1.bf16.msra.mxu0 0
        %920 = vmatprep.subr.bf16.mxu0 0
        %921 = vmatpush1.bf16.msra.mxu0 0
        %922 = vmatprep.subr.bf16.mxu0 0
        %923 = vmatpush1.bf16.msra.mxu0 0
        %924 = vmatprep.mubr.bf16.mxu0 0
        %925 = vmatmul.mubr.bf16.gmra.mrb[0].mxu0 %v890
        %v926 = vpop.f32.mrb[0].mxu0
        %v927 = vadd.f32 0.0, %v926
        %v928 = vpop.f32.mrb[0].mxu0
        %v929 = vpop.f32.mrb[0].mxu0
        %v930 = vadd.f32 0.0, %v929
        %v931 = vpop.f32.mrb[0].mxu0
        %932 = vdwg.mxu0
        %v933 = vadd.f32 %v817, %v927
        %v934 = vadd.f32 %v818, %v930
        %s935 = scalar_lea.vmem %s1, 32
        %v936 = vld [vmem:[%s935] sm:$0xf]
        %v937 = vld [vmem:[%s935 + $0x4] sm:$0xf]
        %v940 = vunpack.c.l.b16 %v936
        %v941 = vunpack.c.l.b16 %v937
        %v942 = vpack.c.b16 %v941, %v940
        %v944 = vsel %vm482, %v942, 0
        %946 = vmatprep.subr.bf16.mxu0 0
        %947 = vmatpush1.bf16.msra.mxu0 %v474
        %948 = vmatprep.subr.bf16.mxu0 0
        %949 = vmatpush1.bf16.msra.mxu0 0
        %950 = vmatprep.subr.bf16.mxu0 0
        %951 = vmatpush1.bf16.msra.mxu0 0
        %952 = vmatprep.subr.bf16.mxu0 0
        %953 = vmatpush1.bf16.msra.mxu0 0
        %954 = vmatprep.subr.bf16.mxu0 0
        %955 = vmatpush1.bf16.msra.mxu0 0
        %956 = vmatprep.subr.bf16.mxu0 0
        %957 = vmatpush1.bf16.msra.mxu0 0
        %958 = vmatprep.subr.bf16.mxu0 0
        %959 = vmatpush1.bf16.msra.mxu0 0
        %960 = vmatprep.subr.bf16.mxu0 0
        %961 = vmatpush1.bf16.msra.mxu0 0
        %962 = vmatprep.subr.bf16.mxu0 0
        %963 = vmatpush1.bf16.msra.mxu0 0
        %964 = vmatprep.subr.bf16.mxu0 0
        %965 = vmatpush1.bf16.msra.mxu0 0
        %966 = vmatprep.subr.bf16.mxu0 0
        %967 = vmatpush1.bf16.msra.mxu0 0
        %968 = vmatprep.subr.bf16.mxu0 0
        %969 = vmatpush1.bf16.msra.mxu0 0
        %970 = vmatprep.subr.bf16.mxu0 0
        %971 = vmatpush1.bf16.msra.mxu0 0
        %972 = vmatprep.subr.bf16.mxu0 0
        %973 = vmatpush1.bf16.msra.mxu0 0
        %974 = vmatprep.subr.bf16.mxu0 0
        %975 = vmatpush1.bf16.msra.mxu0 0
        %976 = vmatprep.subr.bf16.mxu0 0
        %977 = vmatpush1.bf16.msra.mxu0 0
        %978 = vmatprep.mubr.bf16.mxu0 0
        %979 = vmatmul.mubr.bf16.gmra.mrb[0].mxu0 %v944
        %v980 = vpop.f32.mrb[0].mxu0
        %v981 = vadd.f32 0.0, %v980
        %v982 = vpop.f32.mrb[0].mxu0
        %v983 = vpop.f32.mrb[0].mxu0
        %v984 = vadd.f32 0.0, %v983
        %v985 = vpop.f32.mrb[0].mxu0
        %986 = vdwg.mxu0
        %v987 = vpack.c.bf16 %v984, %v981
        %s988 = scalar_lea.vmem %s2, 64
        %v989 = vld [vmem:[%s988] sm:$0xf]
        %v990 = vld [vmem:[%s988 + $0x4] sm:$0xf]
        %v991 = vld [vmem:[%s988 + $0x8] sm:$0xf]
        %v992 = vld [vmem:[%s988 + $0xc] sm:$0xf]
        %v997 = vunpack.c.l.b16 %v989
        %v998 = vunpack.c.l.b16 %v990
        %v999 = vunpack.c.l.b16 %v991
        %v1000 = vunpack.c.l.b16 %v992
        %v1001 = vpack.c.b16 %v998, %v997
        %v1002 = vpack.c.b16 %v1000, %v999
        %v1006 = vsel %vm602, %v987, 0
        %1008 = vmatprep.subr.bf16.mxu0 0
        %1009 = vmatpush1.bf16.msra.mxu0 %v1001
        %1010 = vmatprep.subr.bf16.mxu0 0
        %1011 = vmatpush1.bf16.msra.mxu0 %v1002
        %1012 = vmatprep.subr.bf16.mxu0 0
        %1013 = vmatpush1.bf16.msra.mxu0 0
        %1014 = vmatprep.subr.bf16.mxu0 0
        %1015 = vmatpush1.bf16.msra.mxu0 0
        %1016 = vmatprep.subr.bf16.mxu0 0
        %1017 = vmatpush1.bf16.msra.mxu0 0
        %1018 = vmatprep.subr.bf16.mxu0 0
        %1019 = vmatpush1.bf16.msra.mxu0 0
        %1020 = vmatprep.subr.bf16.mxu0 0
        %1021 = vmatpush1.bf16.msra.mxu0 0
        %1022 = vmatprep.subr.bf16.mxu0 0
        %1023 = vmatpush1.bf16.msra.mxu0 0
        %1024 = vmatprep.subr.bf16.mxu0 0
        %1025 = vmatpush1.bf16.msra.mxu0 0
        %1026 = vmatprep.subr.bf16.mxu0 0
        %1027 = vmatpush1.bf16.msra.mxu0 0
        %1028 = vmatprep.subr.bf16.mxu0 0
        %1029 = vmatpush1.bf16.msra.mxu0 0
        %1030 = vmatprep.subr.bf16.mxu0 0
        %1031 = vmatpush1.bf16.msra.mxu0 0
        %1032 = vmatprep.subr.bf16.mxu0 0
        %1033 = vmatpush1.bf16.msra.mxu0 0
        %1034 = vmatprep.subr.bf16.mxu0 0
        %1035 = vmatpush1.bf16.msra.mxu0 0
        %1036 = vmatprep.subr.bf16.mxu0 0
        %1037 = vmatpush1.bf16.msra.mxu0 0
        %1038 = vmatprep.subr.bf16.mxu0 0
        %1039 = vmatpush1.bf16.msra.mxu0 0
        %1040 = vmatprep.mubr.bf16.mxu0 0
        %1041 = vmatmul.mubr.bf16.gmra.mrb[0].mxu0 %v1006
        %v1042 = vpop.f32.mrb[0].mxu0
        %v1043 = vadd.f32 0.0, %v1042
        %v1044 = vpop.f32.mrb[0].mxu0
        %v1045 = vpop.f32.mrb[0].mxu0
        %v1046 = vadd.f32 0.0, %v1045
        %v1047 = vpop.f32.mrb[0].mxu0
        %1048 = vdwg.mxu0
        %v1049 = vadd.f32 %v933, %v1043
        %v1050 = vadd.f32 %v934, %v1046
        %v1051 = vld [vmem:[%s3] sm:$0x1]
        %v1053 = vlaneseq
        %v1054 = vshrl.u32 %v1053, 7
        %v1055 = vsub.s32 0, %v1054
        %v1056 = vrot.slane %v1051, %v1055
        %v1058 = vadd.f32 %v1049, %v1056
        %v1059 = vadd.f32 %v1050, %v1056
        %v1061 = vsel %vm602, %v1058, 0
        %v1064 = vsel %vm602, %v1059, 0
        %1066 = vmatprep.subr.mxu0 0.0
        %1067 = vmatpush1.msra.mxu0 %v468
        %1068 = vmatprep.subr.mxu0 0.0
        %1069 = vmatpush1.msra.mxu0 %v469
        %1070 = vmatprep.subr.mxu0 0.0
        %1071 = vmatpush1.msra.mxu0 %v470
        %1072 = vmatprep.subr.mxu0 0.0
        %1073 = vmatpush1.msra.mxu0 %v471
        %1074 = vmatprep.subr.mxu0 0.0
        %1075 = vmatpush1.msra.mxu0 0.0
        %1076 = vmatprep.subr.mxu0 0.0
        %1077 = vmatpush1.msra.mxu0 0.0
        %1078 = vmatprep.subr.mxu0 0.0
        %1079 = vmatpush1.msra.mxu0 0.0
        %1080 = vmatprep.subr.mxu0 0.0
        %1081 = vmatpush1.msra.mxu0 0.0
        %1082 = vmatprep.subr.mxu0 0.0
        %1083 = vmatpush1.msra.mxu0 0.0
        %1084 = vmatprep.subr.mxu0 0.0
        %1085 = vmatpush1.msra.mxu0 0.0
        %1086 = vmatprep.subr.mxu0 0.0
        %1087 = vmatpush1.msra.mxu0 0.0
        %1088 = vmatprep.subr.mxu0 0.0
        %1089 = vmatpush1.msra.mxu0 0.0
        %1090 = vmatprep.subr.mxu0 0.0
        %1091 = vmatpush1.msra.mxu0 0.0
        %1092 = vmatprep.subr.mxu0 0.0
        %1093 = vmatpush1.msra.mxu0 0.0
        %1094 = vmatprep.subr.mxu0 0.0
        %1095 = vmatpush1.msra.mxu0 0.0
        %1096 = vmatprep.subr.mxu0 0.0
        %1097 = vmatpush1.msra.mxu0 0.0
        %1098 = vmatprep.subr.mxu0 0.0
        %1099 = vmatpush1.msra.mxu0 0.0
        %1100 = vmatprep.subr.mxu0 0.0
        %1101 = vmatpush1.msra.mxu0 0.0
        %1102 = vmatprep.subr.mxu0 0.0
        %1103 = vmatpush1.msra.mxu0 0.0
        %1104 = vmatprep.subr.mxu0 0.0
        %1105 = vmatpush1.msra.mxu0 0.0
        %1106 = vmatprep.subr.mxu0 0.0
        %1107 = vmatpush1.msra.mxu0 0.0
        %1108 = vmatprep.subr.mxu0 0.0
        %1109 = vmatpush1.msra.mxu0 0.0
        %1110 = vmatprep.subr.mxu0 0.0
        %1111 = vmatpush1.msra.mxu0 0.0
        %1112 = vmatprep.subr.mxu0 0.0
        %1113 = vmatpush1.msra.mxu0 0.0
        %1114 = vmatprep.subr.mxu0 0.0
        %1115 = vmatpush1.msra.mxu0 0.0
        %1116 = vmatprep.subr.mxu0 0.0
        %1117 = vmatpush1.msra.mxu0 0.0
        %1118 = vmatprep.subr.mxu0 0.0
        %1119 = vmatpush1.msra.mxu0 0.0
        %1120 = vmatprep.subr.mxu0 0.0
        %1121 = vmatpush1.msra.mxu0 0.0
        %1122 = vmatprep.subr.mxu0 0.0
        %1123 = vmatpush1.msra.mxu0 0.0
        %1124 = vmatprep.subr.mxu0 0.0
        %1125 = vmatpush1.msra.mxu0 0.0
        %1126 = vmatprep.subr.mxu0 0.0
        %1127 = vmatpush1.msra.mxu0 0.0
        %1128 = vmatprep.subr.mxu0 0.0
        %1129 = vmatpush1.msra.mxu0 0.0
        %1130 = vmatprep.mubr.f32.mxu0 0.0
        %1131 = vmatmul.mubr.f32.gmra.mrb[0].mxu0 %v1061
        %v1132 = vpop.f32.mrb[0].mxu0
        %v1133 = vadd.f32 0.0, %v1132
        %v1134 = vpop.f32.mrb[0].mxu0
        %1135 = vmatprep.mubr.f32.mxu0 0.0
        %1136 = vmatmul.mubr.f32.gmra.mrb[0].mxu0 %v1064
        %v1137 = vpop.f32.mrb[0].mxu0
        %v1138 = vadd.f32 0.0, %v1137
        %v1139 = vpop.f32.mrb[0].mxu0
        %1140 = vdwg.mxu0
        %v1141 = vsel %vm602, %v1133, 0.0
        %v1142 = vsel %vm602, %v1138, 0.0
        %v1143 = vadd.f32 %v1141, %v1142
        %v1144 = vrot.slane %v1143, 4
        %v1145 = vadd.f32 %v1143, %v1144
        %v1146 = vrot.slane %v1145, 2
        %v1147 = vadd.f32 %v1145, %v1146
        %v1148 = vrot.slane %v1147, 1
        %v1149 = vadd.f32 %v1147, %v1148
        %v1150 = vsub.f32 %v1058, %v1149
        %v1151 = vsub.f32 %v1059, %v1149
        %v1152 = vmul.f32 %v1150, %v1150
        %v1153 = vmul.f32 %v1151, %v1151
        %v1155 = vsel %vm602, %v1152, 0
        %v1158 = vsel %vm602, %v1153, 0
        %1160 = vmatprep.subr.mxu0 0.0
        %1161 = vmatpush1.msra.mxu0 %v468
        %1162 = vmatprep.subr.mxu0 0.0
        %1163 = vmatpush1.msra.mxu0 %v469
        %1164 = vmatprep.subr.mxu0 0.0
        %1165 = vmatpush1.msra.mxu0 %v470
        %1166 = vmatprep.subr.mxu0 0.0
        %1167 = vmatpush1.msra.mxu0 %v471
        %1168 = vmatprep.subr.mxu0 0.0
        %1169 = vmatpush1.msra.mxu0 0.0
        %1170 = vmatprep.subr.mxu0 0.0
        %1171 = vmatpush1.msra.mxu0 0.0
        %1172 = vmatprep.subr.mxu0 0.0
        %1173 = vmatpush1.msra.mxu0 0.0
        %1174 = vmatprep.subr.mxu0 0.0
        %1175 = vmatpush1.msra.mxu0 0.0
        %1176 = vmatprep.subr.mxu0 0.0
        %1177 = vmatpush1.msra.mxu0 0.0
        %1178 = vmatprep.subr.mxu0 0.0
        %1179 = vmatpush1.msra.mxu0 0.0
        %1180 = vmatprep.subr.mxu0 0.0
        %1181 = vmatpush1.msra.mxu0 0.0
        %1182 = vmatprep.subr.mxu0 0.0
        %1183 = vmatpush1.msra.mxu0 0.0
        %1184 = vmatprep.subr.mxu0 0.0
        %1185 = vmatpush1.msra.mxu0 0.0
        %1186 = vmatprep.subr.mxu0 0.0
        %1187 = vmatpush1.msra.mxu0 0.0
        %1188 = vmatprep.subr.mxu0 0.0
        %1189 = vmatpush1.msra.mxu0 0.0
        %1190 = vmatprep.subr.mxu0 0.0
        %1191 = vmatpush1.msra.mxu0 0.0
        %1192 = vmatprep.subr.mxu0 0.0
        %1193 = vmatpush1.msra.mxu0 0.0
        %1194 = vmatprep.subr.mxu0 0.0
        %1195 = vmatpush1.msra.mxu0 0.0
        %1196 = vmatprep.subr.mxu0 0.0
        %1197 = vmatpush1.msra.mxu0 0.0
        %1198 = vmatprep.subr.mxu0 0.0
        %1199 = vmatpush1.msra.mxu0 0.0
        %1200 = vmatprep.subr.mxu0 0.0
        %1201 = vmatpush1.msra.mxu0 0.0
        %1202 = vmatprep.subr.mxu0 0.0
        %1203 = vmatpush1.msra.mxu0 0.0
        %1204 = vmatprep.subr.mxu0 0.0
        %1205 = vmatpush1.msra.mxu0 0.0
        %1206 = vmatprep.subr.mxu0 0.0
        %1207 = vmatpush1.msra.mxu0 0.0
        %1208 = vmatprep.subr.mxu0 0.0
        %1209 = vmatpush1.msra.mxu0 0.0
        %1210 = vmatprep.subr.mxu0 0.0
        %1211 = vmatpush1.msra.mxu0 0.0
        %1212 = vmatprep.subr.mxu0 0.0
        %1213 = vmatpush1.msra.mxu0 0.0
        %1214 = vmatprep.subr.mxu0 0.0
        %1215 = vmatpush1.msra.mxu0 0.0
        %1216 = vmatprep.subr.mxu0 0.0
        %1217 = vmatpush1.msra.mxu0 0.0
        %1218 = vmatprep.subr.mxu0 0.0
        %1219 = vmatpush1.msra.mxu0 0.0
        %1220 = vmatprep.subr.mxu0 0.0
        %1221 = vmatpush1.msra.mxu0 0.0
        %1222 = vmatprep.subr.mxu0 0.0
        %1223 = vmatpush1.msra.mxu0 0.0
        %1224 = vmatprep.mubr.f32.mxu0 0.0
        %1225 = vmatmul.mubr.f32.gmra.mrb[0].mxu0 %v1155
        %v1226 = vpop.f32.mrb[0].mxu0
        %v1227 = vadd.f32 0.0, %v1226
        %v1228 = vpop.f32.mrb[0].mxu0
        %1229 = vmatprep.mubr.f32.mxu0 0.0
        %1230 = vmatmul.mubr.f32.gmra.mrb[0].mxu0 %v1158
        %v1231 = vpop.f32.mrb[0].mxu0
        %v1232 = vadd.f32 0.0, %v1231
        %v1233 = vpop.f32.mrb[0].mxu0
        %1234 = vdwg.mxu0
        %v1235 = vsel %vm602, %v1227, 0.0
        %v1236 = vsel %vm602, %v1232, 0.0
        %v1237 = vadd.f32 %v1235, %v1236
        %v1238 = vrot.slane %v1237, 4
        %v1239 = vadd.f32 %v1237, %v1238
        %v1240 = vrot.slane %v1239, 2
        %v1241 = vadd.f32 %v1239, %v1240
        %v1242 = vrot.slane %v1241, 1
        %v1243 = vadd.f32 %v1241, %v1242
        %v1244 = vadd.f32 %v1243, 1e-05
        %v1245 = vrsqrt.pop %v1244
        %v1246 = vmul.f32 %v1150, %v1245
        %v1247 = vmul.f32 %v1151, %v1245
        %v1248 = vld [vmem:[%s4] sm:$0x1]
        %v1250 = vlaneseq
        %v1251 = vshrl.u32 %v1250, 7
        %v1252 = vsub.s32 0, %v1251
        %v1253 = vrot.slane %v1248, %v1252
        %v1255 = vmul.f32 %v1246, %v1253
        %v1256 = vmul.f32 %v1247, %v1253
        %v1257 = vld [vmem:[%s5] sm:$0x1]
        %v1259 = vlaneseq
        %v1260 = vshrl.u32 %v1259, 7
        %v1261 = vsub.s32 0, %v1260
        %v1262 = vrot.slane %v1257, %v1261
        %v1264 = vadd.f32 %v1255, %v1262
        %v1265 = vadd.f32 %v1256, %v1262
        %v1266 = vmax.f32 %v1264, 0.0
        %v1267 = vmax.f32 %v1265, 0.0
        %vm1268 = vcmp.ne.f32.partialorder %v1264, %v1264
        %vm1269 = vcmp.ne.f32.partialorder %v1265, %v1265
        %v1270 = vadd.f32 %v1264, 0.0
        %v1271 = vadd.f32 %v1265, 0.0
        %v1272 = vand.u32 2147483647, %v1264
        %v1273 = vand.u32 2147483647, %v1265
        %v1274 = vsub.f32 0.0, %v1272
        %v1275 = vsub.f32 0.0, %v1273
        %v1276 = vmul.f32 %v1274, 1.442695
        %v1277 = vpow.pop %v1276
        %v1278 = vmul.f32 %v1275, 1.442695
        %v1279 = vpow.pop %v1278
        %v1280 = vadd.f32 %v1277, 1.0
        %v1281 = vlog2.pop %v1280
        %v1282 = vmul.f32 %v1281, 0.6931472
        %v1283 = vmul.f32 -0.5, %v1277
        %v1284 = vadd.f32 %v1283, 1.0
        %v1285 = vmul.f32 %v1284, %v1277
        %v1286 = vand.u32 2147483647, %v1277
        %vm1287 = vcmp.lt.f32.partialorder %v1286, 0.0004427343
        %v1288 = vsel %vm1287, %v1285, %v1282
        %v1289 = vadd.f32 %v1279, 1.0
        %v1290 = vlog2.pop %v1289
        %v1291 = vmul.f32 %v1290, 0.6931472
        %v1292 = vmul.f32 -0.5, %v1279
        %v1293 = vadd.f32 %v1292, 1.0
        %v1294 = vmul.f32 %v1293, %v1279
        %v1295 = vand.u32 2147483647, %v1279
        %vm1296 = vcmp.lt.f32.partialorder %v1295, 0.0004427343
        %v1297 = vsel %vm1296, %v1294, %v1291
        %v1298 = vadd.f32 %v1266, %v1288
        %v1299 = vadd.f32 %v1267, %v1297
        %v1300 = vsel %vm1268, %v1270, %v1298
        %v1301 = vsel %vm1269, %v1271, %v1299
        %v1302 = vtanh.pop %v1300
        %v1303 = vtanh.pop %v1301
        %v1304 = vmul.f32 %v1264, %v1302
        %v1305 = vmul.f32 %v1265, %v1303
        %v1306 = vld [vmem:[%s463] sm:$0x1]
        %v1308 = vlaneseq
        %v1309 = vshrl.u32 %v1308, 7
        %v1310 = vsub.s32 0, %v1309
        %v1311 = vrot.slane %v1306, %v1310
        %v1313 = vmul.f32 %v1311, %v1304
        %v1314 = vmul.f32 %v1311, %v1305
        %v1315 = vld [vmem:[%s466] sm:$0x1]
        %v1317 = vlaneseq
        %v1318 = vshrl.u32 %v1317, 7
        %v1319 = vsub.s32 0, %v1318
        %v1320 = vrot.slane %v1315, %v1319
        %v1322 = vadd.f32 %v1313, %v1320
        %v1323 = vadd.f32 %v1314, %v1320
        %v1324 = vpack.c.bf16 %v1323, %v1322
        %1325 = vmatprep.subr.bf16.mxu0 0
        %1326 = vmatpush1.bf16.msra.mxu0 %v1324
        %1327 = vmatprep.subr.bf16.mxu0 0
        %1328 = vmatpush1.bf16.msra.mxu0 0
        %1329 = vmatprep.subr.bf16.mxu0 0
        %1330 = vmatpush1.bf16.msra.mxu0 0
        %1331 = vmatprep.subr.bf16.mxu0 0
        %1332 = vmatpush1.bf16.msra.mxu0 0
        %1333 = vmatprep.subr.bf16.mxu0 0
        %1334 = vmatpush1.bf16.msra.mxu0 0
        %1335 = vmatprep.subr.bf16.mxu0 0
        %1336 = vmatpush1.bf16.msra.mxu0 0
        %1337 = vmatprep.subr.bf16.mxu0 0
        %1338 = vmatpush1.bf16.msra.mxu0 0
        %1339 = vmatprep.subr.bf16.mxu0 0
        %1340 = vmatpush1.bf16.msra.mxu0 0
        %1341 = vmatprep.subr.bf16.mxu0 0
        %1342 = vmatpush1.bf16.msra.mxu0 0
        %1343 = vmatprep.subr.bf16.mxu0 0
        %1344 = vmatpush1.bf16.msra.mxu0 0
        %1345 = vmatprep.subr.bf16.mxu0 0
        %1346 = vmatpush1.bf16.msra.mxu0 0
        %1347 = vmatprep.subr.bf16.mxu0 0
        %1348 = vmatpush1.bf16.msra.mxu0 0
        %1349 = vmatprep.subr.bf16.mxu0 0
        %1350 = vmatpush1.bf16.msra.mxu0 0
        %1351 = vmatprep.subr.bf16.mxu0 0
        %1352 = vmatpush1.bf16.msra.mxu0 0
        %1353 = vmatprep.subr.bf16.mxu0 0
        %1354 = vmatpush1.bf16.msra.mxu0 0
        %1355 = vmatprep.subr.bf16.mxu0 0
        %1356 = vmatpush1.bf16.msra.mxu0 0
        %1357 = vmatprep.mubr.bf16.mxu0 0
        %1358 = vmatmul.mubr.bf16.gmra.mrb[0].mxu0 %v484
        %v1359 = vpop.f32.mrb[0].mxu0
        %v1360 = vadd.f32 0.0, %v1359
        %v1361 = vpop.f32.mrb[0].mxu0
        %v1362 = vpop.f32.mrb[0].mxu0
        %v1363 = vadd.f32 0.0, %v1362
        %v1364 = vpop.f32.mrb[0].mxu0
        %1365 = vdwg.mxu0
        %v1366 = vpack.c.bf16 %v1363, %v1360
        %v1367 = vld [vmem:[%s8] sm:$0xf]
        %v1368 = vld [vmem:[%s8 + $0x4] sm:$0xf]
        %v1369 = vld [vmem:[%s8 + $0x8] sm:$0xf]
        %v1370 = vld [vmem:[%s8 + $0xc] sm:$0xf]
        %1371 = vmatprep.subr.bf16.mxu0 0
        %1372 = vmatpush1.bf16.msra.mxu0 %v1324
        %1373 = vmatprep.subr.bf16.mxu0 0
        %1374 = vmatpush1.bf16.msra.mxu0 0
        %1375 = vmatprep.subr.bf16.mxu0 0
        %1376 = vmatpush1.bf16.msra.mxu0 0
        %1377 = vmatprep.subr.bf16.mxu0 0
        %1378 = vmatpush1.bf16.msra.mxu0 0
        %1379 = vmatprep.subr.bf16.mxu0 0
        %1380 = vmatpush1.bf16.msra.mxu0 0
        %1381 = vmatprep.subr.bf16.mxu0 0
        %1382 = vmatpush1.bf16.msra.mxu0 0
        %1383 = vmatprep.subr.bf16.mxu0 0
        %1384 = vmatpush1.bf16.msra.mxu0 0
        %1385 = vmatprep.subr.bf16.mxu0 0
        %1386 = vmatpush1.bf16.msra.mxu0 0
        %1387 = vmatprep.subr.bf16.mxu0 0
        %1388 = vmatpush1.bf16.msra.mxu0 0
        %1389 = vmatprep.subr.bf16.mxu0 0
        %1390 = vmatpush1.bf16.msra.mxu0 0
        %1391 = vmatprep.subr.bf16.mxu0 0
        %1392 = vmatpush1.bf16.msra.mxu0 0
        %1393 = vmatprep.subr.bf16.mxu0 0
        %1394 = vmatpush1.bf16.msra.mxu0 0
        %1395 = vmatprep.subr.bf16.mxu0 0
        %1396 = vmatpush1.bf16.msra.mxu0 0
        %1397 = vmatprep.subr.bf16.mxu0 0
        %1398 = vmatpush1.bf16.msra.mxu0 0
        %1399 = vmatprep.subr.bf16.mxu0 0
        %1400 = vmatpush1.bf16.msra.mxu0 0
        %1401 = vmatprep.subr.bf16.mxu0 0
        %1402 = vmatpush1.bf16.msra.mxu0 0
        %1403 = vmatprep.mubr.bf16.mxu0 0
        %1404 = vmatmul.mubr.bf16.gmra.mrb[0].mxu0 %v541
        %v1405 = vpop.f32.mrb[0].mxu0
        %v1406 = vadd.f32 0.0, %v1405
        %v1407 = vpop.f32.mrb[0].mxu0
        %v1408 = vpop.f32.mrb[0].mxu0
        %v1409 = vadd.f32 0.0, %v1408
        %v1410 = vpop.f32.mrb[0].mxu0
        %1411 = vdwg.mxu0
        %v1412 = vpack.c.bf16 %v1409, %v1406
        %s1413 = scalar_lea.vmem %s8, 16
        %v1414 = vld [vmem:[%s1413] sm:$0xf]
        %v1415 = vld [vmem:[%s1413 + $0x4] sm:$0xf]
        %v1416 = vld [vmem:[%s1413 + $0x8] sm:$0xf]
        %v1417 = vld [vmem:[%s1413 + $0xc] sm:$0xf]
        %v1422 = vunpack.c.l.b16 %v1414
        %v1423 = vunpack.c.l.b16 %v1415
        %v1424 = vunpack.c.l.b16 %v1416
        %v1425 = vunpack.c.l.b16 %v1417
        %v1426 = vpack.c.b16 %v1423, %v1422
        %v1427 = vpack.c.b16 %v1425, %v1424
        %v1431 = vsel %vm602, %v1412, 0
        %1433 = vmatprep.subr.bf16.mxu0 0
        %1434 = vmatpush1.bf16.msra.mxu0 %v1426
        %1435 = vmatprep.subr.bf16.mxu0 0
        %1436 = vmatpush1.bf16.msra.mxu0 %v1427
        %1437 = vmatprep.subr.bf16.mxu0 0
        %1438 = vmatpush1.bf16.msra.mxu0 0
        %1439 = vmatprep.subr.bf16.mxu0 0
        %1440 = vmatpush1.bf16.msra.mxu0 0
        %1441 = vmatprep.subr.bf16.mxu0 0
        %1442 = vmatpush1.bf16.msra.mxu0 0
        %1443 = vmatprep.subr.bf16.mxu0 0
        %1444 = vmatpush1.bf16.msra.mxu0 0
        %1445 = vmatprep.subr.bf16.mxu0 0
        %1446 = vmatpush1.bf16.msra.mxu0 0
        %1447 = vmatprep.subr.bf16.mxu0 0
        %1448 = vmatpush1.bf16.msra.mxu0 0
        %1449 = vmatprep.subr.bf16.mxu0 0
        %1450 = vmatpush1.bf16.msra.mxu0 0
        %1451 = vmatprep.subr.bf16.mxu0 0
        %1452 = vmatpush1.bf16.msra.mxu0 0
        %1453 = vmatprep.subr.bf16.mxu0 0
        %1454 = vmatpush1.bf16.msra.mxu0 0
        %1455 = vmatprep.subr.bf16.mxu0 0
        %1456 = vmatpush1.bf16.msra.mxu0 0
        %1457 = vmatprep.subr.bf16.mxu0 0
        %1458 = vmatpush1.bf16.msra.mxu0 0
        %1459 = vmatprep.subr.bf16.mxu0 0
        %1460 = vmatpush1.bf16.msra.mxu0 0
        %1461 = vmatprep.subr.bf16.mxu0 0
        %1462 = vmatpush1.bf16.msra.mxu0 0
        %1463 = vmatprep.subr.bf16.mxu0 0
        %1464 = vmatpush1.bf16.msra.mxu0 0
        %1465 = vmatprep.mubr.bf16.mxu0 0
        %1466 = vmatmul.mubr.bf16.gmra.mrb[0].mxu0 %v1431
        %v1467 = vpop.f32.mrb[0].mxu0
        %v1468 = vadd.f32 0.0, %v1467
        %v1469 = vpop.f32.mrb[0].mxu0
        %v1470 = vpop.f32.mrb[0].mxu0
        %v1471 = vadd.f32 0.0, %v1470
        %v1472 = vpop.f32.mrb[0].mxu0
        %1473 = vdwg.mxu0
        %v1478 = vunpack.c.l.b16 %v1367
        %v1479 = vunpack.c.l.b16 %v1368
        %v1480 = vunpack.c.l.b16 %v1369
        %v1481 = vunpack.c.l.b16 %v1370
        %v1482 = vpack.c.b16 %v1479, %v1478
        %v1483 = vpack.c.b16 %v1481, %v1480
        %v1487 = vsel %vm602, %v1366, 0
        %1489 = vmatprep.subr.bf16.mxu0 0
        %1490 = vmatpush1.bf16.msra.mxu0 %v1482
        %1491 = vmatprep.subr.bf16.mxu0 0
        %1492 = vmatpush1.bf16.msra.mxu0 %v1483
        %1493 = vmatprep.subr.bf16.mxu0 0
        %1494 = vmatpush1.bf16.msra.mxu0 0
        %1495 = vmatprep.subr.bf16.mxu0 0
        %1496 = vmatpush1.bf16.msra.mxu0 0
        %1497 = vmatprep.subr.bf16.mxu0 0
        %1498 = vmatpush1.bf16.msra.mxu0 0
        %1499 = vmatprep.subr.bf16.mxu0 0
        %1500 = vmatpush1.bf16.msra.mxu0 0
        %1501 = vmatprep.subr.bf16.mxu0 0
        %1502 = vmatpush1.bf16.msra.mxu0 0
        %1503 = vmatprep.subr.bf16.mxu0 0
        %1504 = vmatpush1.bf16.msra.mxu0 0
        %1505 = vmatprep.subr.bf16.mxu0 0
        %1506 = vmatpush1.bf16.msra.mxu0 0
        %1507 = vmatprep.subr.bf16.mxu0 0
        %1508 = vmatpush1.bf16.msra.mxu0 0
        %1509 = vmatprep.subr.bf16.mxu0 0
        %1510 = vmatpush1.bf16.msra.mxu0 0
        %1511 = vmatprep.subr.bf16.mxu0 0
        %1512 = vmatpush1.bf16.msra.mxu0 0
        %1513 = vmatprep.subr.bf16.mxu0 0
        %1514 = vmatpush1.bf16.msra.mxu0 0
        %1515 = vmatprep.subr.bf16.mxu0 0
        %1516 = vmatpush1.bf16.msra.mxu0 0
        %1517 = vmatprep.subr.bf16.mxu0 0
        %1518 = vmatpush1.bf16.msra.mxu0 0
        %1519 = vmatprep.subr.bf16.mxu0 0
        %1520 = vmatpush1.bf16.msra.mxu0 0
        %1521 = vmatprep.mubr.bf16.mxu0 0
        %1522 = vmatmul.mubr.bf16.gmra.mrb[0].mxu0 %v1487
        %v1523 = vpop.f32.mrb[0].mxu0
        %v1524 = vadd.f32 %v1468, %v1523
        %v1525 = vpop.f32.mrb[0].mxu0
        %v1526 = vpop.f32.mrb[0].mxu0
        %v1527 = vadd.f32 %v1471, %v1526
        %v1528 = vpop.f32.mrb[0].mxu0
        %1529 = vdwg.mxu0
        %1530 = vmatprep.subr.bf16.mxu0 0
        %1531 = vmatpush1.bf16.msra.mxu0 %v1324
        %1532 = vmatprep.subr.bf16.mxu0 0
        %1533 = vmatpush1.bf16.msra.mxu0 0
        %1534 = vmatprep.subr.bf16.mxu0 0
        %1535 = vmatpush1.bf16.msra.mxu0 0
        %1536 = vmatprep.subr.bf16.mxu0 0
        %1537 = vmatpush1.bf16.msra.mxu0 0
        %1538 = vmatprep.subr.bf16.mxu0 0
        %1539 = vmatpush1.bf16.msra.mxu0 0
        %1540 = vmatprep.subr.bf16.mxu0 0
        %1541 = vmatpush1.bf16.msra.mxu0 0
        %1542 = vmatprep.subr.bf16.mxu0 0
        %1543 = vmatpush1.bf16.msra.mxu0 0
        %1544 = vmatprep.subr.bf16.mxu0 0
        %1545 = vmatpush1.bf16.msra.mxu0 0
        %1546 = vmatprep.subr.bf16.mxu0 0
        %1547 = vmatpush1.bf16.msra.mxu0 0
        %1548 = vmatprep.subr.bf16.mxu0 0
        %1549 = vmatpush1.bf16.msra.mxu0 0
        %1550 = vmatprep.subr.bf16.mxu0 0
        %1551 = vmatpush1.bf16.msra.mxu0 0
        %1552 = vmatprep.subr.bf16.mxu0 0
        %1553 = vmatpush1.bf16.msra.mxu0 0
        %1554 = vmatprep.subr.bf16.mxu0 0
        %1555 = vmatpush1.bf16.msra.mxu0 0
        %1556 = vmatprep.subr.bf16.mxu0 0
        %1557 = vmatpush1.bf16.msra.mxu0 0
        %1558 = vmatprep.subr.bf16.mxu0 0
        %1559 = vmatpush1.bf16.msra.mxu0 0
        %1560 = vmatprep.subr.bf16.mxu0 0
        %1561 = vmatpush1.bf16.msra.mxu0 0
        %1562 = vmatprep.mubr.bf16.mxu0 0
        %1563 = vmatmul.mubr.bf16.gmra.mrb[0].mxu0 %v712
        %v1564 = vpop.f32.mrb[0].mxu0
        %v1565 = vadd.f32 0.0, %v1564
        %v1566 = vpop.f32.mrb[0].mxu0
        %v1567 = vpop.f32.mrb[0].mxu0
        %v1568 = vadd.f32 0.0, %v1567
        %v1569 = vpop.f32.mrb[0].mxu0
        %1570 = vdwg.mxu0
        %v1571 = vpack.c.bf16 %v1568, %v1565
        %s1572 = scalar_lea.vmem %s8, 32
        %v1573 = vld [vmem:[%s1572] sm:$0xf]
        %v1574 = vld [vmem:[%s1572 + $0x4] sm:$0xf]
        %v1575 = vld [vmem:[%s1572 + $0x8] sm:$0xf]
        %v1576 = vld [vmem:[%s1572 + $0xc] sm:$0xf]
        %v1581 = vunpack.c.l.b16 %v1573
        %v1582 = vunpack.c.l.b16 %v1574
        %v1583 = vunpack.c.l.b16 %v1575
        %v1584 = vunpack.c.l.b16 %v1576
        %v1585 = vpack.c.b16 %v1582, %v1581
        %v1586 = vpack.c.b16 %v1584, %v1583
        %v1590 = vsel %vm602, %v1571, 0
        %1592 = vmatprep.subr.bf16.mxu0 0
        %1593 = vmatpush1.bf16.msra.mxu0 %v1585
        %1594 = vmatprep.subr.bf16.mxu0 0
        %1595 = vmatpush1.bf16.msra.mxu0 %v1586
        %1596 = vmatprep.subr.bf16.mxu0 0
        %1597 = vmatpush1.bf16.msra.mxu0 0
        %1598 = vmatprep.subr.bf16.mxu0 0
        %1599 = vmatpush1.bf16.msra.mxu0 0
        %1600 = vmatprep.subr.bf16.mxu0 0
        %1601 = vmatpush1.bf16.msra.mxu0 0
        %1602 = vmatprep.subr.bf16.mxu0 0
        %1603 = vmatpush1.bf16.msra.mxu0 0
        %1604 = vmatprep.subr.bf16.mxu0 0
        %1605 = vmatpush1.bf16.msra.mxu0 0
        %1606 = vmatprep.subr.bf16.mxu0 0
        %1607 = vmatpush1.bf16.msra.mxu0 0
        %1608 = vmatprep.subr.bf16.mxu0 0
        %1609 = vmatpush1.bf16.msra.mxu0 0
        %1610 = vmatprep.subr.bf16.mxu0 0
        %1611 = vmatpush1.bf16.msra.mxu0 0
        %1612 = vmatprep.subr.bf16.mxu0 0
        %1613 = vmatpush1.bf16.msra.mxu0 0
        %1614 = vmatprep.subr.bf16.mxu0 0
        %1615 = vmatpush1.bf16.msra.mxu0 0
        %1616 = vmatprep.subr.bf16.mxu0 0
        %1617 = vmatpush1.bf16.msra.mxu0 0
        %1618 = vmatprep.subr.bf16.mxu0 0
        %1619 = vmatpush1.bf16.msra.mxu0 0
        %1620 = vmatprep.subr.bf16.mxu0 0
        %1621 = vmatpush1.bf16.msra.mxu0 0
        %1622 = vmatprep.subr.bf16.mxu0 0
        %1623 = vmatpush1.bf16.msra.mxu0 0
        %1624 = vmatprep.mubr.bf16.mxu0 0
        %1625 = vmatmul.mubr.bf16.gmra.mrb[0].mxu0 %v1590
        %v1626 = vpop.f32.mrb[0].mxu0
        %v1627 = vadd.f32 0.0, %v1626
        %v1628 = vpop.f32.mrb[0].mxu0
        %v1629 = vpop.f32.mrb[0].mxu0
        %v1630 = vadd.f32 0.0, %v1629
        %v1631 = vpop.f32.mrb[0].mxu0
        %1632 = vdwg.mxu0
        %v1633 = vadd.f32 %v1524, %v1627
        %v1634 = vadd.f32 %v1527, %v1630
        %1635 = vmatprep.subr.bf16.mxu0 0
        %1636 = vmatpush1.bf16.msra.mxu0 %v1324
        %1637 = vmatprep.subr.bf16.mxu0 0
        %1638 = vmatpush1.bf16.msra.mxu0 0
        %1639 = vmatprep.subr.bf16.mxu0 0
        %1640 = vmatpush1.bf16.msra.mxu0 0
        %1641 = vmatprep.subr.bf16.mxu0 0
        %1642 = vmatpush1.bf16.msra.mxu0 0
        %1643 = vmatprep.subr.bf16.mxu0 0
        %1644 = vmatpush1.bf16.msra.mxu0 0
        %1645 = vmatprep.subr.bf16.mxu0 0
        %1646 = vmatpush1.bf16.msra.mxu0 0
        %1647 = vmatprep.subr.bf16.mxu0 0
        %1648 = vmatpush1.bf16.msra.mxu0 0
        %1649 = vmatprep.subr.bf16.mxu0 0
        %1650 = vmatpush1.bf16.msra.mxu0 0
        %1651 = vmatprep.subr.bf16.mxu0 0
        %1652 = vmatpush1.bf16.msra.mxu0 0
        %1653 = vmatprep.subr.bf16.mxu0 0
        %1654 = vmatpush1.bf16.msra.mxu0 0
        %1655 = vmatprep.subr.bf16.mxu0 0
        %1656 = vmatpush1.bf16.msra.mxu0 0
        %1657 = vmatprep.subr.bf16.mxu0 0
        %1658 = vmatpush1.bf16.msra.mxu0 0
        %1659 = vmatprep.subr.bf16.mxu0 0
        %1660 = vmatpush1.bf16.msra.mxu0 0
        %1661 = vmatprep.subr.bf16.mxu0 0
        %1662 = vmatpush1.bf16.msra.mxu0 0
        %1663 = vmatprep.subr.bf16.mxu0 0
        %1664 = vmatpush1.bf16.msra.mxu0 0
        %1665 = vmatprep.subr.bf16.mxu0 0
        %1666 = vmatpush1.bf16.msra.mxu0 0
        %1667 = vmatprep.mubr.bf16.mxu0 0
        %1668 = vmatmul.mubr.bf16.gmra.mrb[0].mxu0 %v828
        %v1669 = vpop.f32.mrb[0].mxu0
        %v1670 = vadd.f32 0.0, %v1669
        %v1671 = vpop.f32.mrb[0].mxu0
        %v1672 = vpop.f32.mrb[0].mxu0
        %v1673 = vadd.f32 0.0, %v1672
        %v1674 = vpop.f32.mrb[0].mxu0
        %1675 = vdwg.mxu0
        %v1676 = vpack.c.bf16 %v1673, %v1670
        %s1677 = scalar_lea.vmem %s8, 48
        %v1678 = vld [vmem:[%s1677] sm:$0xf]
        %v1679 = vld [vmem:[%s1677 + $0x4] sm:$0xf]
        %v1680 = vld [vmem:[%s1677 + $0x8] sm:$0xf]
        %v1681 = vld [vmem:[%s1677 + $0xc] sm:$0xf]
        %v1686 = vunpack.c.l.b16 %v1678
        %v1687 = vunpack.c.l.b16 %v1679
        %v1688 = vunpack.c.l.b16 %v1680
        %v1689 = vunpack.c.l.b16 %v1681
        %v1690 = vpack.c.b16 %v1687, %v1686
        %v1691 = vpack.c.b16 %v1689, %v1688
        %v1695 = vsel %vm602, %v1676, 0
        %1697 = vmatprep.subr.bf16.mxu0 0
        %1698 = vmatpush1.bf16.msra.mxu0 %v1690
        %1699 = vmatprep.subr.bf16.mxu0 0
        %1700 = vmatpush1.bf16.msra.mxu0 %v1691
        %1701 = vmatprep.subr.bf16.mxu0 0
        %1702 = vmatpush1.bf16.msra.mxu0 0
        %1703 = vmatprep.subr.bf16.mxu0 0
        %1704 = vmatpush1.bf16.msra.mxu0 0
        %1705 = vmatprep.subr.bf16.mxu0 0
        %1706 = vmatpush1.bf16.msra.mxu0 0
        %1707 = vmatprep.subr.bf16.mxu0 0
        %1708 = vmatpush1.bf16.msra.mxu0 0
        %1709 = vmatprep.subr.bf16.mxu0 0
        %1710 = vmatpush1.bf16.msra.mxu0 0
        %1711 = vmatprep.subr.bf16.mxu0 0
        %1712 = vmatpush1.bf16.msra.mxu0 0
        %1713 = vmatprep.subr.bf16.mxu0 0
        %1714 = vmatpush1.bf16.msra.mxu0 0
        %1715 = vmatprep.subr.bf16.mxu0 0
        %1716 = vmatpush1.bf16.msra.mxu0 0
        %1717 = vmatprep.subr.bf16.mxu0 0
        %1718 = vmatpush1.bf16.msra.mxu0 0
        %1719 = vmatprep.subr.bf16.mxu0 0
        %1720 = vmatpush1.bf16.msra.mxu0 0
        %1721 = vmatprep.subr.bf16.mxu0 0
        %1722 = vmatpush1.bf16.msra.mxu0 0
        %1723 = vmatprep.subr.bf16.mxu0 0
        %1724 = vmatpush1.bf16.msra.mxu0 0
        %1725 = vmatprep.subr.bf16.mxu0 0
        %1726 = vmatpush1.bf16.msra.mxu0 0
        %1727 = vmatprep.subr.bf16.mxu0 0
        %1728 = vmatpush1.bf16.msra.mxu0 0
        %1729 = vmatprep.mubr.bf16.mxu0 0
        %1730 = vmatmul.mubr.bf16.gmra.mrb[0].mxu0 %v1695
        %v1731 = vpop.f32.mrb[0].mxu0
        %v1732 = vadd.f32 0.0, %v1731
        %v1733 = vpop.f32.mrb[0].mxu0
        %v1734 = vpop.f32.mrb[0].mxu0
        %v1735 = vadd.f32 0.0, %v1734
        %v1736 = vpop.f32.mrb[0].mxu0
        %1737 = vdwg.mxu0
        %v1738 = vadd.f32 %v1633, %v1732
        %v1739 = vadd.f32 %v1634, %v1735
        %1740 = vmatprep.subr.bf16.mxu0 0
        %1741 = vmatpush1.bf16.msra.mxu0 %v1324
        %1742 = vmatprep.subr.bf16.mxu0 0
        %1743 = vmatpush1.bf16.msra.mxu0 0
        %1744 = vmatprep.subr.bf16.mxu0 0
        %1745 = vmatpush1.bf16.msra.mxu0 0
        %1746 = vmatprep.subr.bf16.mxu0 0
        %1747 = vmatpush1.bf16.msra.mxu0 0
        %1748 = vmatprep.subr.bf16.mxu0 0
        %1749 = vmatpush1.bf16.msra.mxu0 0
        %1750 = vmatprep.subr.bf16.mxu0 0
        %1751 = vmatpush1.bf16.msra.mxu0 0
        %1752 = vmatprep.subr.bf16.mxu0 0
        %1753 = vmatpush1.bf16.msra.mxu0 0
        %1754 = vmatprep.subr.bf16.mxu0 0
        %1755 = vmatpush1.bf16.msra.mxu0 0
        %1756 = vmatprep.subr.bf16.mxu0 0
        %1757 = vmatpush1.bf16.msra.mxu0 0
        %1758 = vmatprep.subr.bf16.mxu0 0
        %1759 = vmatpush1.bf16.msra.mxu0 0
        %1760 = vmatprep.subr.bf16.mxu0 0
        %1761 = vmatpush1.bf16.msra.mxu0 0
        %1762 = vmatprep.subr.bf16.mxu0 0
        %1763 = vmatpush1.bf16.msra.mxu0 0
        %1764 = vmatprep.subr.bf16.mxu0 0
        %1765 = vmatpush1.bf16.msra.mxu0 0
        %1766 = vmatprep.subr.bf16.mxu0 0
        %1767 = vmatpush1.bf16.msra.mxu0 0
        %1768 = vmatprep.subr.bf16.mxu0 0
        %1769 = vmatpush1.bf16.msra.mxu0 0
        %1770 = vmatprep.subr.bf16.mxu0 0
        %1771 = vmatpush1.bf16.msra.mxu0 0
        %1772 = vmatprep.mubr.bf16.mxu0 0
        %1773 = vmatmul.mubr.bf16.gmra.mrb[0].mxu0 %v944
        %v1774 = vpop.f32.mrb[0].mxu0
        %v1775 = vadd.f32 0.0, %v1774
        %v1776 = vpop.f32.mrb[0].mxu0
        %v1777 = vpop.f32.mrb[0].mxu0
        %v1778 = vadd.f32 0.0, %v1777
        %v1779 = vpop.f32.mrb[0].mxu0
        %1780 = vdwg.mxu0
        %v1781 = vpack.c.bf16 %v1778, %v1775
        %s1782 = scalar_lea.vmem %s8, 64
        %v1783 = vld [vmem:[%s1782] sm:$0xf]
        %v1784 = vld [vmem:[%s1782 + $0x4] sm:$0xf]
        %v1785 = vld [vmem:[%s1782 + $0x8] sm:$0xf]
        %v1786 = vld [vmem:[%s1782 + $0xc] sm:$0xf]
        %v1791 = vunpack.c.l.b16 %v1783
        %v1792 = vunpack.c.l.b16 %v1784
        %v1793 = vunpack.c.l.b16 %v1785
        %v1794 = vunpack.c.l.b16 %v1786
        %v1795 = vpack.c.b16 %v1792, %v1791
        %v1796 = vpack.c.b16 %v1794, %v1793
        %v1800 = vsel %vm602, %v1781, 0
        %1802 = vmatprep.subr.bf16.mxu0 0
        %1803 = vmatpush1.bf16.msra.mxu0 %v1795
        %1804 = vmatprep.subr.bf16.mxu0 0
        %1805 = vmatpush1.bf16.msra.mxu0 %v1796
        %1806 = vmatprep.subr.bf16.mxu0 0
        %1807 = vmatpush1.bf16.msra.mxu0 0
        %1808 = vmatprep.subr.bf16.mxu0 0
        %1809 = vmatpush1.bf16.msra.mxu0 0
        %1810 = vmatprep.subr.bf16.mxu0 0
        %1811 = vmatpush1.bf16.msra.mxu0 0
        %1812 = vmatprep.subr.bf16.mxu0 0
        %1813 = vmatpush1.bf16.msra.mxu0 0
        %1814 = vmatprep.subr.bf16.mxu0 0
        %1815 = vmatpush1.bf16.msra.mxu0 0
        %1816 = vmatprep.subr.bf16.mxu0 0
        %1817 = vmatpush1.bf16.msra.mxu0 0
        %1818 = vmatprep.subr.bf16.mxu0 0
        %1819 = vmatpush1.bf16.msra.mxu0 0
        %1820 = vmatprep.subr.bf16.mxu0 0
        %1821 = vmatpush1.bf16.msra.mxu0 0
        %1822 = vmatprep.subr.bf16.mxu0 0
        %1823 = vmatpush1.bf16.msra.mxu0 0
        %1824 = vmatprep.subr.bf16.mxu0 0
        %1825 = vmatpush1.bf16.msra.mxu0 0
        %1826 = vmatprep.subr.bf16.mxu0 0
        %1827 = vmatpush1.bf16.msra.mxu0 0
        %1828 = vmatprep.subr.bf16.mxu0 0
        %1829 = vmatpush1.bf16.msra.mxu0 0
        %1830 = vmatprep.subr.bf16.mxu0 0
        %1831 = vmatpush1.bf16.msra.mxu0 0
        %1832 = vmatprep.subr.bf16.mxu0 0
        %1833 = vmatpush1.bf16.msra.mxu0 0
        %1834 = vmatprep.mubr.bf16.mxu0 0
        %1835 = vmatmul.mubr.bf16.gmra.mrb[0].mxu0 %v1800
        %v1836 = vpop.f32.mrb[0].mxu0
        %v1837 = vadd.f32 0.0, %v1836
        %v1838 = vpop.f32.mrb[0].mxu0
        %v1839 = vpop.f32.mrb[0].mxu0
        %v1840 = vadd.f32 0.0, %v1839
        %v1841 = vpop.f32.mrb[0].mxu0
        %1842 = vdwg.mxu0
        %v1843 = vadd.f32 %v1738, %v1837
        %v1844 = vadd.f32 %v1739, %v1840
        %v1845 = vld [vmem:[%s9] sm:$0x1]
        %v1847 = vlaneseq
        %v1848 = vshrl.u32 %v1847, 7
        %v1849 = vsub.s32 0, %v1848
        %v1850 = vrot.slane %v1845, %v1849
        %v1852 = vadd.f32 %v1843, %v1850
        %v1853 = vadd.f32 %v1844, %v1850
        %v1855 = vsel %vm602, %v1852, 0
        %v1858 = vsel %vm602, %v1853, 0
        %1860 = vmatprep.subr.mxu0 0.0
        %1861 = vmatpush1.msra.mxu0 %v468
        %1862 = vmatprep.subr.mxu0 0.0
        %1863 = vmatpush1.msra.mxu0 %v469
        %1864 = vmatprep.subr.mxu0 0.0
        %1865 = vmatpush1.msra.mxu0 %v470
        %1866 = vmatprep.subr.mxu0 0.0
        %1867 = vmatpush1.msra.mxu0 %v471
        %1868 = vmatprep.subr.mxu0 0.0
        %1869 = vmatpush1.msra.mxu0 0.0
        %1870 = vmatprep.subr.mxu0 0.0
        %1871 = vmatpush1.msra.mxu0 0.0
        %1872 = vmatprep.subr.mxu0 0.0
        %1873 = vmatpush1.msra.mxu0 0.0
        %1874 = vmatprep.subr.mxu0 0.0
        %1875 = vmatpush1.msra.mxu0 0.0
        %1876 = vmatprep.subr.mxu0 0.0
        %1877 = vmatpush1.msra.mxu0 0.0
        %1878 = vmatprep.subr.mxu0 0.0
        %1879 = vmatpush1.msra.mxu0 0.0
        %1880 = vmatprep.subr.mxu0 0.0
        %1881 = vmatpush1.msra.mxu0 0.0
        %1882 = vmatprep.subr.mxu0 0.0
        %1883 = vmatpush1.msra.mxu0 0.0
        %1884 = vmatprep.subr.mxu0 0.0
        %1885 = vmatpush1.msra.mxu0 0.0
        %1886 = vmatprep.subr.mxu0 0.0
        %1887 = vmatpush1.msra.mxu0 0.0
        %1888 = vmatprep.subr.mxu0 0.0
        %1889 = vmatpush1.msra.mxu0 0.0
        %1890 = vmatprep.subr.mxu0 0.0
        %1891 = vmatpush1.msra.mxu0 0.0
        %1892 = vmatprep.subr.mxu0 0.0
        %1893 = vmatpush1.msra.mxu0 0.0
        %1894 = vmatprep.subr.mxu0 0.0
        %1895 = vmatpush1.msra.mxu0 0.0
        %1896 = vmatprep.subr.mxu0 0.0
        %1897 = vmatpush1.msra.mxu0 0.0
        %1898 = vmatprep.subr.mxu0 0.0
        %1899 = vmatpush1.msra.mxu0 0.0
        %1900 = vmatprep.subr.mxu0 0.0
        %1901 = vmatpush1.msra.mxu0 0.0
        %1902 = vmatprep.subr.mxu0 0.0
        %1903 = vmatpush1.msra.mxu0 0.0
        %1904 = vmatprep.subr.mxu0 0.0
        %1905 = vmatpush1.msra.mxu0 0.0
        %1906 = vmatprep.subr.mxu0 0.0
        %1907 = vmatpush1.msra.mxu0 0.0
        %1908 = vmatprep.subr.mxu0 0.0
        %1909 = vmatpush1.msra.mxu0 0.0
        %1910 = vmatprep.subr.mxu0 0.0
        %1911 = vmatpush1.msra.mxu0 0.0
        %1912 = vmatprep.subr.mxu0 0.0
        %1913 = vmatpush1.msra.mxu0 0.0
        %1914 = vmatprep.subr.mxu0 0.0
        %1915 = vmatpush1.msra.mxu0 0.0
        %1916 = vmatprep.subr.mxu0 0.0
        %1917 = vmatpush1.msra.mxu0 0.0
        %1918 = vmatprep.subr.mxu0 0.0
        %1919 = vmatpush1.msra.mxu0 0.0
        %1920 = vmatprep.subr.mxu0 0.0
        %1921 = vmatpush1.msra.mxu0 0.0
        %1922 = vmatprep.subr.mxu0 0.0
        %1923 = vmatpush1.msra.mxu0 0.0
        %1924 = vmatprep.mubr.f32.mxu0 0.0
        %1925 = vmatmul.mubr.f32.gmra.mrb[0].mxu0 %v1855
        %v1926 = vpop.f32.mrb[0].mxu0
        %v1927 = vadd.f32 0.0, %v1926
        %v1928 = vpop.f32.mrb[0].mxu0
        %1929 = vmatprep.mubr.f32.mxu0 0.0
        %1930 = vmatmul.mubr.f32.gmra.mrb[0].mxu0 %v1858
        %v1931 = vpop.f32.mrb[0].mxu0
        %v1932 = vadd.f32 0.0, %v1931
        %v1933 = vpop.f32.mrb[0].mxu0
        %1934 = vdwg.mxu0
        %v1935 = vsel %vm602, %v1927, 0.0
        %v1936 = vsel %vm602, %v1932, 0.0
        %v1937 = vadd.f32 %v1935, %v1936
        %v1938 = vrot.slane %v1937, 4
        %v1939 = vadd.f32 %v1937, %v1938
        %v1940 = vrot.slane %v1939, 2
        %v1941 = vadd.f32 %v1939, %v1940
        %v1942 = vrot.slane %v1941, 1
        %v1943 = vadd.f32 %v1941, %v1942
        %v1944 = vsub.f32 %v1852, %v1943
        %v1945 = vsub.f32 %v1853, %v1943
        %v1946 = vmul.f32 %v1944, %v1944
        %v1947 = vmul.f32 %v1945, %v1945
        %v1949 = vsel %vm602, %v1946, 0
        %v1952 = vsel %vm602, %v1947, 0
        %1954 = vmatprep.subr.mxu0 0.0
        %1955 = vmatpush1.msra.mxu0 %v468
        %1956 = vmatprep.subr.mxu0 0.0
        %1957 = vmatpush1.msra.mxu0 %v469
        %1958 = vmatprep.subr.mxu0 0.0
        %1959 = vmatpush1.msra.mxu0 %v470
        %1960 = vmatprep.subr.mxu0 0.0
        %1961 = vmatpush1.msra.mxu0 %v471
        %1962 = vmatprep.subr.mxu0 0.0
        %1963 = vmatpush1.msra.mxu0 0.0
        %1964 = vmatprep.subr.mxu0 0.0
        %1965 = vmatpush1.msra.mxu0 0.0
        %1966 = vmatprep.subr.mxu0 0.0
        %1967 = vmatpush1.msra.mxu0 0.0
        %1968 = vmatprep.subr.mxu0 0.0
        %1969 = vmatpush1.msra.mxu0 0.0
        %1970 = vmatprep.subr.mxu0 0.0
        %1971 = vmatpush1.msra.mxu0 0.0
        %1972 = vmatprep.subr.mxu0 0.0
        %1973 = vmatpush1.msra.mxu0 0.0
        %1974 = vmatprep.subr.mxu0 0.0
        %1975 = vmatpush1.msra.mxu0 0.0
        %1976 = vmatprep.subr.mxu0 0.0
        %1977 = vmatpush1.msra.mxu0 0.0
        %1978 = vmatprep.subr.mxu0 0.0
        %1979 = vmatpush1.msra.mxu0 0.0
        %1980 = vmatprep.subr.mxu0 0.0
        %1981 = vmatpush1.msra.mxu0 0.0
        %1982 = vmatprep.subr.mxu0 0.0
        %1983 = vmatpush1.msra.mxu0 0.0
        %1984 = vmatprep.subr.mxu0 0.0
        %1985 = vmatpush1.msra.mxu0 0.0
        %1986 = vmatprep.subr.mxu0 0.0
        %1987 = vmatpush1.msra.mxu0 0.0
        %1988 = vmatprep.subr.mxu0 0.0
        %1989 = vmatpush1.msra.mxu0 0.0
        %1990 = vmatprep.subr.mxu0 0.0
        %1991 = vmatpush1.msra.mxu0 0.0
        %1992 = vmatprep.subr.mxu0 0.0
        %1993 = vmatpush1.msra.mxu0 0.0
        %1994 = vmatprep.subr.mxu0 0.0
        %1995 = vmatpush1.msra.mxu0 0.0
        %1996 = vmatprep.subr.mxu0 0.0
        %1997 = vmatpush1.msra.mxu0 0.0
        %1998 = vmatprep.subr.mxu0 0.0
        %1999 = vmatpush1.msra.mxu0 0.0
        %2000 = vmatprep.subr.mxu0 0.0
        %2001 = vmatpush1.msra.mxu0 0.0
        %2002 = vmatprep.subr.mxu0 0.0
        %2003 = vmatpush1.msra.mxu0 0.0
        %2004 = vmatprep.subr.mxu0 0.0
        %2005 = vmatpush1.msra.mxu0 0.0
        %2006 = vmatprep.subr.mxu0 0.0
        %2007 = vmatpush1.msra.mxu0 0.0
        %2008 = vmatprep.subr.mxu0 0.0
        %2009 = vmatpush1.msra.mxu0 0.0
        %2010 = vmatprep.subr.mxu0 0.0
        %2011 = vmatpush1.msra.mxu0 0.0
        %2012 = vmatprep.subr.mxu0 0.0
        %2013 = vmatpush1.msra.mxu0 0.0
        %2014 = vmatprep.subr.mxu0 0.0
        %2015 = vmatpush1.msra.mxu0 0.0
        %2016 = vmatprep.subr.mxu0 0.0
        %2017 = vmatpush1.msra.mxu0 0.0
        %2018 = vmatprep.mubr.f32.mxu0 0.0
        %2019 = vmatmul.mubr.f32.gmra.mrb[0].mxu0 %v1949
        %v2020 = vpop.f32.mrb[0].mxu0
        %v2021 = vadd.f32 0.0, %v2020
        %v2022 = vpop.f32.mrb[0].mxu0
        %2023 = vmatprep.mubr.f32.mxu0 0.0
        %2024 = vmatmul.mubr.f32.gmra.mrb[0].mxu0 %v1952
        %v2025 = vpop.f32.mrb[0].mxu0
        %v2026 = vadd.f32 0.0, %v2025
        %v2027 = vpop.f32.mrb[0].mxu0
        %2028 = vdwg.mxu0
        %v2029 = vsel %vm602, %v2021, 0.0
        %v2030 = vsel %vm602, %v2026, 0.0
        %v2031 = vadd.f32 %v2029, %v2030
        %v2032 = vrot.slane %v2031, 4
        %v2033 = vadd.f32 %v2031, %v2032
        %v2034 = vrot.slane %v2033, 2
        %v2035 = vadd.f32 %v2033, %v2034
        %v2036 = vrot.slane %v2035, 1
        %v2037 = vadd.f32 %v2035, %v2036
        %v2038 = vadd.f32 %v2037, 1e-05
        %v2039 = vrsqrt.pop %v2038
        %v2040 = vmul.f32 %v1944, %v2039
        %v2041 = vmul.f32 %v1945, %v2039
        %v2042 = vld [vmem:[%s10] sm:$0x1]
        %v2044 = vlaneseq
        %v2045 = vshrl.u32 %v2044, 7
        %v2046 = vsub.s32 0, %v2045
        %v2047 = vrot.slane %v2042, %v2046
        %v2049 = vmul.f32 %v2040, %v2047
        %v2050 = vmul.f32 %v2041, %v2047
        %v2051 = vld [vmem:[%s11] sm:$0x1]
        %v2053 = vlaneseq
        %v2054 = vshrl.u32 %v2053, 7
        %v2055 = vsub.s32 0, %v2054
        %v2056 = vrot.slane %v2051, %v2055
        %v2058 = vadd.f32 %v2049, %v2056
        %v2059 = vadd.f32 %v2050, %v2056
        %v2060 = vmax.f32 %v2058, 0.0
        %v2061 = vmax.f32 %v2059, 0.0
        %vm2062 = vcmp.ne.f32.partialorder %v2058, %v2058
        %vm2063 = vcmp.ne.f32.partialorder %v2059, %v2059
        %v2064 = vadd.f32 %v2058, 0.0
        %v2065 = vadd.f32 %v2059, 0.0
        %v2066 = vand.u32 2147483647, %v2058
        %v2067 = vand.u32 2147483647, %v2059
        %v2068 = vsub.f32 0.0, %v2066
        %v2069 = vsub.f32 0.0, %v2067
        %v2070 = vmul.f32 %v2068, 1.442695
        %v2071 = vpow.pop %v2070
        %v2072 = vmul.f32 %v2069, 1.442695
        %v2073 = vpow.pop %v2072
        %v2074 = vadd.f32 %v2071, 1.0
        %v2075 = vlog2.pop %v2074
        %v2076 = vmul.f32 %v2075, 0.6931472
        %v2077 = vmul.f32 -0.5, %v2071
        %v2078 = vadd.f32 %v2077, 1.0
        %v2079 = vmul.f32 %v2078, %v2071
        %v2080 = vand.u32 2147483647, %v2071
        %vm2081 = vcmp.lt.f32.partialorder %v2080, 0.0004427343
        %v2082 = vsel %vm2081, %v2079, %v2076
        %v2083 = vadd.f32 %v2073, 1.0
        %v2084 = vlog2.pop %v2083
        %v2085 = vmul.f32 %v2084, 0.6931472
        %v2086 = vmul.f32 -0.5, %v2073
        %v2087 = vadd.f32 %v2086, 1.0
        %v2088 = vmul.f32 %v2087, %v2073
        %v2089 = vand.u32 2147483647, %v2073
        %vm2090 = vcmp.lt.f32.partialorder %v2089, 0.0004427343
        %v2091 = vsel %vm2090, %v2088, %v2085
        %v2092 = vadd.f32 %v2060, %v2082
        %v2093 = vadd.f32 %v2061, %v2091
        %v2094 = vsel %vm2062, %v2064, %v2092
        %v2095 = vsel %vm2063, %v2065, %v2093
        %v2096 = vtanh.pop %v2094
        %v2097 = vtanh.pop %v2095
        %v2098 = vmul.f32 %v2058, %v2096
        %v2099 = vmul.f32 %v2059, %v2097
        %v2100 = vadd.f32 %v2098, %v472
        %v2101 = vadd.f32 %v2099, %v473
        %2102 = vst.msk [vmem:[%s455] sm:$0xff] %vm602, %v2100
        %2103 = vst.msk [vmem:[%s455 + $0x8] sm:$0xff] %vm602, %v2101
        %s2104 = sand.u32 %s323, 1
        %s2105 = scalar_lea.sflag [#allocation3], %s2104
        %s2106 = sand.u32 %s323, 1
        %s2107 = smul.addr %s2106, 16
        %s2108 = scalar_lea.vmem [#allocation2], %s2107
        // Predicated region
        $region73: #{_lambda_.3} parent=71 // pred_check
          %p2109 = pneg %p333
        $region74: #{_lambda_.3} parent=71 // pred_check_branch
          %2111 = sbr.rel (%p2109) target = $region76
        $region75: #{_lambda_.3} parent=71 // pred_region
          %s2113 = ssub.s32 256, 256
          %2114 = vsyncadd %s2105, %s2113
          %s2115 = smul.addr %s27, 2
          %s2116 = smul.addr %s2115, 128
          %s2117 = scalar_lea.hbm %s13, %s2116
          %s2118 = sshll.u32 %s2108, 4
          %s2119 = int_to_ptr.vmem [resolvable:$true] %s2118
          %2124 = dma.vmem_to_hbm [thread:$0]  %s2119, 256, %s2117, %s2105, 128, 128, 8
        $region76: #{_lambda_.3} parent=71 // pred_fallthru
          _
      $region72: #{_lambda_.3} parent=5 // pred_fallthru
        _
      %p2125 = scmp.le.s32.totalorder 2, %s22
      // Predicated region
      $region77: #{_lambda_.3} parent=5 // pred_check
        %p2126 = pneg %p2125
      $region78: #{_lambda_.3} parent=5 // pred_check_branch
        %2128 = sbr.rel (%p2126) target = $region80
      $region79: #{_lambda_.3} parent=5 // pred_region
        %s2129 = ssub.s32 %s22, 2
        // Predicated region
        $region81: #{_lambda_.3} parent=79 // pred_check
          %p2130 = pneg %p339
        $region82: #{_lambda_.3} parent=79 // pred_check_branch
          %2132 = sbr.rel (%p2130) target = $region84
        $region83: #{_lambda_.3} parent=79 // pred_region
          %s2133 = sand.u32 %s324, 1
          %s2134 = scalar_lea.sflag [#allocation3], %s2133
          %s2135 = sand.u32 %s324, 1
          %s2136 = smul.addr %s2135, 16
          %s2137 = scalar_lea.vmem [#allocation2], %s2136
          %2138 = dma.done %s2134, 256
        $region84: #{_lambda_.3} parent=79 // pred_fallthru
          _
      $region80: #{_lambda_.3} parent=5 // pred_fallthru
        _
    $region6: #{_lambda_.3} parent=1 // loop_footer
      %s26 = sadd.s32 1, %s22
    $region7: #{_lambda_.3} parent=1 // loop_footer_branch
      %21 = sbr.rel target = $region3
    $region8: #{_lambda_.3} parent=1 // loop_exit
      _
    %2139 = vsyncpa [#allocation3], 1
    %s2140 = scalar_lea.sflag [#allocation3], 1
    %2141 = vsyncpa %s2140, 1

// kernel: _lambda_.2
$region0: #{_lambda_.2}
  #allocation0 [shape = 'u32[]', space=smem, size = 0x4, offset = 0x4, fixed_abs, tag = 'smem constant byte address 0x4 - core index']
  #allocation1 [shape = 'u32[144,128]{1,0:T(1,128)}', space=vmem, size = 0x12000, scoped, tag = 'internal scratch']
  %s0 = inlined_call_operand.vmem [shape: f32[2,16,4], index: 0, kind: input, shape index: {}]
  %s1 = inlined_call_operand.vmem [shape: bf16[5,16,16], index: 1, kind: input, shape index: {}]
  %s2 = inlined_call_operand.vmem [shape: bf16[5,4,32], index: 2, kind: input, shape index: {}]
  %s3 = inlined_call_operand.vmem [shape: f32[1,32], index: 3, kind: input, shape index: {}]
  %s4 = inlined_call_operand.vmem [shape: f32[1,32], index: 4, kind: input, shape index: {}]
  %s5 = inlined_call_operand.vmem [shape: f32[1,32], index: 5, kind: input, shape index: {}]
  %s6 = inlined_call_operand.vmem [shape: f32[2,1,32], index: 6, kind: input, shape index: {}]
  %s7 = inlined_call_operand.vmem [shape: f32[2,1,32], index: 7, kind: input, shape index: {}]
  %s8 = inlined_call_operand.vmem [shape: bf16[5,32,32], index: 8, kind: input, shape index: {}]
  %s9 = inlined_call_operand.vmem [shape: f32[1,32], index: 9, kind: input, shape index: {}]
  %s10 = inlined_call_operand.vmem [shape: f32[1,32], index: 10, kind: input, shape index: {}]
  %s11 = inlined_call_operand.vmem [shape: f32[1,32], index: 11, kind: input, shape index: {}]
  %s12 = inlined_call_operand.vmem [shape: f32[32,32], index: 12, kind: input, shape index: {}]
  %s13 = inlined_call_operand.vmem [shape: bf16[4,32], index: 13, kind: input, shape index: {}]
  %s14 = inlined_call_operand.vmem [shape: f32[1,32], index: 14, kind: input, shape index: {}]
  %s15 = inlined_call_operand.vmem [shape: f32[2,16,32], index: 15, kind: output, shape index: {}]
  %s16 = sld [smem:[#allocation0]]
  $region93: #{_lambda_.2} parent=0
    _
  %s18 = ssub.s32 1, %s16
  %s19 = scalar_select 0, %s18, %s16
  loop: start=0, step=1, limit=4
  $region2: #{_lambda_.2} parent=0 // loop_pre_header
    _
  $region3: #{_lambda_.2} parent=0 // loop_header
    %s21 = sphi 0, %s25
    %p22 = scmp.ge.s32.totalorder %s21, 4
    %s31 = sphi 0, %s33
    %s34 = sphi 0, %s31
    %s35 = sphi 0, %s34
    %s51 = sphi 0, %s35
    %s55 = sphi 0, %s55
    %s57 = sphi 0, %s55
    %s58 = sphi 0, %s57
    %s72 = sphi 0, %s58
    %s76 = sphi 0, %s76
    %s78 = sphi 0, %s76
    %s79 = sphi 0, %s78
    %s93 = sphi 0, %s79
    %s97 = sphi 0, %s97
    %s99 = sphi 0, %s97
    %s100 = sphi 0, %s99
    %s114 = sphi 0, %s100
    %s118 = sphi 0, %s118
    %s120 = sphi 0, %s118
    %s121 = sphi 0, %s120
    %s135 = sphi 0, %s121
    %s139 = sphi 0, %s139
    %s141 = sphi 0, %s139
    %s142 = sphi 0, %s141
    %s156 = sphi 0, %s142
    %s162 = sphi 0, %s164
    %s165 = sphi 0, %s162
    %s166 = sphi 0, %s165
    %s182 = sphi 0, %s166
    %s188 = sphi 0, %s190
    %s191 = sphi 0, %s188
    %s192 = sphi 0, %s191
    %s208 = sphi 0, %s192
    %s212 = sphi 0, %s212
    %s214 = sphi 0, %s212
    %s215 = sphi 0, %s214
    %s229 = sphi 0, %s215
    %s233 = sphi 0, %s233
    %s235 = sphi 0, %s233
    %s236 = sphi 0, %s235
    %s250 = sphi 0, %s236
    %s254 = sphi 0, %s254
    %s256 = sphi 0, %s254
    %s257 = sphi 0, %s256
    %s271 = sphi 0, %s257
    %s275 = sphi 0, %s275
    %s277 = sphi 0, %s275
    %s278 = sphi 0, %s277
    %s292 = sphi 0, %s278
    %s296 = sphi 0, %s296
    %s298 = sphi 0, %s296
    %s299 = sphi 0, %s298
    %s313 = sphi 0, %s299
    %s317 = sphi 0, %s317
    %s319 = sphi 0, %s317
    %s320 = sphi 0, %s319
    %s334 = sphi 0, %s320
    %s338 = sphi 0, %s338
    %s340 = sphi 0, %s338
    %s341 = sphi 0, %s340
    %s355 = sphi 0, %s341
    %s361 = sphi 0, %s363
    %s364 = sphi 0, %s361
    %s365 = sphi 0, %s364
    %s381 = sphi 0, %s365
  $region4: #{_lambda_.2} parent=0 // loop_header_branch
    %24 = sbr.rel (%p22) target = $region8
  $region5: #{_lambda_.2} parent=0 // loop_body
    %s26 = ssub.s32 %s21, 1
    %s27 = ssub.s32 %s21, 2
    %s28 = sadd.s32 %s21, 1
    %s29 = ssub.s32 %s21, %s28
    %p30 = scmp.eq.s32.totalorder %s29, 0
    %s32 = sadd.s32 %s31, 1
    %s33 = scalar_select %p30, %s31, %s32
    %p36 = pneg %p30
    %p37 = scmp.eq.s32.totalorder %s21, 1
    %p38 = por %p36, %p37
    %p39 = scmp.ne.s32.totalorder %s31, %s34
    %p40 = scmp.eq.s32.totalorder %s21, 0
    %p41 = por %p39, %p40
    %p42 = scmp.ne.s32.totalorder %s31, %s34
    %p43 = scmp.eq.s32.totalorder %s26, 1
    %p44 = por %p42, %p43
    %p45 = scmp.ne.s32.totalorder %s34, %s35
    %p46 = scmp.eq.s32.totalorder %s26, 0
    %p47 = por %p45, %p46
    %p48 = scmp.ne.s32.totalorder %s34, %s35
    %p49 = scmp.eq.s32.totalorder %s27, 1
    %p50 = por %p48, %p49
    %p52 = scmp.ne.s32.totalorder %s35, %s51
    %p53 = scmp.eq.s32.totalorder %s27, 0
    %p54 = por %p52, %p53
    %s56 = sadd.s32 %s55, 1
    %p59 = scmp.eq.s32.totalorder %s21, 1
    %p60 = scmp.ne.s32.totalorder %s55, %s57
    %p61 = scmp.eq.s32.totalorder %s21, 0
    %p62 = por %p60, %p61
    %p63 = scmp.ne.s32.totalorder %s55, %s57
    %p64 = scmp.eq.s32.totalorder %s26, 1
    %p65 = por %p63, %p64
    %p66 = scmp.ne.s32.totalorder %s57, %s58
    %p67 = scmp.eq.s32.totalorder %s26, 0
    %p68 = por %p66, %p67
    %p69 = scmp.ne.s32.totalorder %s57, %s58
    %p70 = scmp.eq.s32.totalorder %s27, 1
    %p71 = por %p69, %p70
    %p73 = scmp.ne.s32.totalorder %s58, %s72
    %p74 = scmp.eq.s32.totalorder %s27, 0
    %p75 = por %p73, %p74
    %s77 = sadd.s32 %s76, 1
    %p80 = scmp.eq.s32.totalorder %s21, 1
    %p81 = scmp.ne.s32.totalorder %s76, %s78
    %p82 = scmp.eq.s32.totalorder %s21, 0
    %p83 = por %p81, %p82
    %p84 = scmp.ne.s32.totalorder %s76, %s78
    %p85 = scmp.eq.s32.totalorder %s26, 1
    %p86 = por %p84, %p85
    %p87 = scmp.ne.s32.totalorder %s78, %s79
    %p88 = scmp.eq.s32.totalorder %s26, 0
    %p89 = por %p87, %p88
    %p90 = scmp.ne.s32.totalorder %s78, %s79
    %p91 = scmp.eq.s32.totalorder %s27, 1
    %p92 = por %p90, %p91
    %p94 = scmp.ne.s32.totalorder %s79, %s93
    %p95 = scmp.eq.s32.totalorder %s27, 0
    %p96 = por %p94, %p95
    %s98 = sadd.s32 %s97, 1
    %p101 = scmp.eq.s32.totalorder %s21, 1
    %p102 = scmp.ne.s32.totalorder %s97, %s99
    %p103 = scmp.eq.s32.totalorder %s21, 0
    %p104 = por %p102, %p103
    %p105 = scmp.ne.s32.totalorder %s97, %s99
    %p106 = scmp.eq.s32.totalorder %s26, 1
    %p107 = por %p105, %p106
    %p108 = scmp.ne.s32.totalorder %s99, %s100
    %p109 = scmp.eq.s32.totalorder %s26, 0
    %p110 = por %p108, %p109
    %p111 = scmp.ne.s32.totalorder %s99, %s100
    %p112 = scmp.eq.s32.totalorder %s27, 1
    %p113 = por %p111, %p112
    %p115 = scmp.ne.s32.totalorder %s100, %s114
    %p116 = scmp.eq.s32.totalorder %s27, 0
    %p117 = por %p115, %p116
    %s119 = sadd.s32 %s118, 1
    %p122 = scmp.eq.s32.totalorder %s21, 1
    %p123 = scmp.ne.s32.totalorder %s118, %s120
    %p124 = scmp.eq.s32.totalorder %s21, 0
    %p125 = por %p123, %p124
    %p126 = scmp.ne.s32.totalorder %s118, %s120
    %p127 = scmp.eq.s32.totalorder %s26, 1
    %p128 = por %p126, %p127
    %p129 = scmp.ne.s32.totalorder %s120, %s121
    %p130 = scmp.eq.s32.totalorder %s26, 0
    %p131 = por %p129, %p130
    %p132 = scmp.ne.s32.totalorder %s120, %s121
    %p133 = scmp.eq.s32.totalorder %s27, 1
    %p134 = por %p132, %p133
    %p136 = scmp.ne.s32.totalorder %s121, %s135
    %p137 = scmp.eq.s32.totalorder %s27, 0
    %p138 = por %p136, %p137
    %s140 = sadd.s32 %s139, 1
    %p143 = scmp.eq.s32.totalorder %s21, 1
    %p144 = scmp.ne.s32.totalorder %s139, %s141
    %p145 = scmp.eq.s32.totalorder %s21, 0
    %p146 = por %p144, %p145
    %p147 = scmp.ne.s32.totalorder %s139, %s141
    %p148 = scmp.eq.s32.totalorder %s26, 1
    %p149 = por %p147, %p148
    %p150 = scmp.ne.s32.totalorder %s141, %s142
    %p151 = scmp.eq.s32.totalorder %s26, 0
    %p152 = por %p150, %p151
    %p153 = scmp.ne.s32.totalorder %s141, %s142
    %p154 = scmp.eq.s32.totalorder %s27, 1
    %p155 = por %p153, %p154
    %p157 = scmp.ne.s32.totalorder %s142, %s156
    %p158 = scmp.eq.s32.totalorder %s27, 0
    %p159 = por %p157, %p158
    %s160 = ssub.s32 %s21, %s28
    %p161 = scmp.eq.s32.totalorder %s160, 0
    %s163 = sadd.s32 %s162, 1
    %s164 = scalar_select %p161, %s162, %s163
    %p167 = pneg %p161
    %p168 = scmp.eq.s32.totalorder %s21, 1
    %p169 = por %p167, %p168
    %p170 = scmp.ne.s32.totalorder %s162, %s165
    %p171 = scmp.eq.s32.totalorder %s21, 0
    %p172 = por %p170, %p171
    %p173 = scmp.ne.s32.totalorder %s162, %s165
    %p174 = scmp.eq.s32.totalorder %s26, 1
    %p175 = por %p173, %p174
    %p176 = scmp.ne.s32.totalorder %s165, %s166
    %p177 = scmp.eq.s32.totalorder %s26, 0
    %p178 = por %p176, %p177
    %p179 = scmp.ne.s32.totalorder %s165, %s166
    %p180 = scmp.eq.s32.totalorder %s27, 1
    %p181 = por %p179, %p180
    %p183 = scmp.ne.s32.totalorder %s166, %s182
    %p184 = scmp.eq.s32.totalorder %s27, 0
    %p185 = por %p183, %p184
    %s186 = ssub.s32 %s21, %s28
    %p187 = scmp.eq.s32.totalorder %s186, 0
    %s189 = sadd.s32 %s188, 1
    %s190 = scalar_select %p187, %s188, %s189
    %p193 = pneg %p187
    %p194 = scmp.eq.s32.totalorder %s21, 1
    %p195 = por %p193, %p194
    %p196 = scmp.ne.s32.totalorder %s188, %s191
    %p197 = scmp.eq.s32.totalorder %s21, 0
    %p198 = por %p196, %p197
    %p199 = scmp.ne.s32.totalorder %s188, %s191
    %p200 = scmp.eq.s32.totalorder %s26, 1
    %p201 = por %p199, %p200
    %p202 = scmp.ne.s32.totalorder %s191, %s192
    %p203 = scmp.eq.s32.totalorder %s26, 0
    %p204 = por %p202, %p203
    %p205 = scmp.ne.s32.totalorder %s191, %s192
    %p206 = scmp.eq.s32.totalorder %s27, 1
    %p207 = por %p205, %p206
    %p209 = scmp.ne.s32.totalorder %s192, %s208
    %p210 = scmp.eq.s32.totalorder %s27, 0
    %p211 = por %p209, %p210
    %s213 = sadd.s32 %s212, 1
    %p216 = scmp.eq.s32.totalorder %s21, 1
    %p217 = scmp.ne.s32.totalorder %s212, %s214
    %p218 = scmp.eq.s32.totalorder %s21, 0
    %p219 = por %p217, %p218
    %p220 = scmp.ne.s32.totalorder %s212, %s214
    %p221 = scmp.eq.s32.totalorder %s26, 1
    %p222 = por %p220, %p221
    %p223 = scmp.ne.s32.totalorder %s214, %s215
    %p224 = scmp.eq.s32.totalorder %s26, 0
    %p225 = por %p223, %p224
    %p226 = scmp.ne.s32.totalorder %s214, %s215
    %p227 = scmp.eq.s32.totalorder %s27, 1
    %p228 = por %p226, %p227
    %p230 = scmp.ne.s32.totalorder %s215, %s229
    %p231 = scmp.eq.s32.totalorder %s27, 0
    %p232 = por %p230, %p231
    %s234 = sadd.s32 %s233, 1
    %p237 = scmp.eq.s32.totalorder %s21, 1
    %p238 = scmp.ne.s32.totalorder %s233, %s235
    %p239 = scmp.eq.s32.totalorder %s21, 0
    %p240 = por %p238, %p239
    %p241 = scmp.ne.s32.totalorder %s233, %s235
    %p242 = scmp.eq.s32.totalorder %s26, 1
    %p243 = por %p241, %p242
    %p244 = scmp.ne.s32.totalorder %s235, %s236
    %p245 = scmp.eq.s32.totalorder %s26, 0
    %p246 = por %p244, %p245
    %p247 = scmp.ne.s32.totalorder %s235, %s236
    %p248 = scmp.eq.s32.totalorder %s27, 1
    %p249 = por %p247, %p248
    %p251 = scmp.ne.s32.totalorder %s236, %s250
    %p252 = scmp.eq.s32.totalorder %s27, 0
    %p253 = por %p251, %p252
    %s255 = sadd.s32 %s254, 1
    %p258 = scmp.eq.s32.totalorder %s21, 1
    %p259 = scmp.ne.s32.totalorder %s254, %s256
    %p260 = scmp.eq.s32.totalorder %s21, 0
    %p261 = por %p259, %p260
    %p262 = scmp.ne.s32.totalorder %s254, %s256
    %p263 = scmp.eq.s32.totalorder %s26, 1
    %p264 = por %p262, %p263
    %p265 = scmp.ne.s32.totalorder %s256, %s257
    %p266 = scmp.eq.s32.totalorder %s26, 0
    %p267 = por %p265, %p266
    %p268 = scmp.ne.s32.totalorder %s256, %s257
    %p269 = scmp.eq.s32.totalorder %s27, 1
    %p270 = por %p268, %p269
    %p272 = scmp.ne.s32.totalorder %s257, %s271
    %p273 = scmp.eq.s32.totalorder %s27, 0
    %p274 = por %p272, %p273
    %s276 = sadd.s32 %s275, 1
    %p279 = scmp.eq.s32.totalorder %s21, 1
    %p280 = scmp.ne.s32.totalorder %s275, %s277
    %p281 = scmp.eq.s32.totalorder %s21, 0
    %p282 = por %p280, %p281
    %p283 = scmp.ne.s32.totalorder %s275, %s277
    %p284 = scmp.eq.s32.totalorder %s26, 1
    %p285 = por %p283, %p284
    %p286 = scmp.ne.s32.totalorder %s277, %s278
    %p287 = scmp.eq.s32.totalorder %s26, 0
    %p288 = por %p286, %p287
    %p289 = scmp.ne.s32.totalorder %s277, %s278
    %p290 = scmp.eq.s32.totalorder %s27, 1
    %p291 = por %p289, %p290
    %p293 = scmp.ne.s32.totalorder %s278, %s292
    %p294 = scmp.eq.s32.totalorder %s27, 0
    %p295 = por %p293, %p294
    %s297 = sadd.s32 %s296, 1
    %p300 = scmp.eq.s32.totalorder %s21, 1
    %p301 = scmp.ne.s32.totalorder %s296, %s298
    %p302 = scmp.eq.s32.totalorder %s21, 0
    %p303 = por %p301, %p302
    %p304 = scmp.ne.s32.totalorder %s296, %s298
    %p305 = scmp.eq.s32.totalorder %s26, 1
    %p306 = por %p304, %p305
    %p307 = scmp.ne.s32.totalorder %s298, %s299
    %p308 = scmp.eq.s32.totalorder %s26, 0
    %p309 = por %p307, %p308
    %p310 = scmp.ne.s32.totalorder %s298, %s299
    %p311 = scmp.eq.s32.totalorder %s27, 1
    %p312 = por %p310, %p311
    %p314 = scmp.ne.s32.totalorder %s299, %s313
    %p315 = scmp.eq.s32.totalorder %s27, 0
    %p316 = por %p314, %p315
    %s318 = sadd.s32 %s317, 1
    %p321 = scmp.eq.s32.totalorder %s21, 1
    %p322 = scmp.ne.s32.totalorder %s317, %s319
    %p323 = scmp.eq.s32.totalorder %s21, 0
    %p324 = por %p322, %p323
    %p325 = scmp.ne.s32.totalorder %s317, %s319
    %p326 = scmp.eq.s32.totalorder %s26, 1
    %p327 = por %p325, %p326
    %p328 = scmp.ne.s32.totalorder %s319, %s320
    %p329 = scmp.eq.s32.totalorder %s26, 0
    %p330 = por %p328, %p329
    %p331 = scmp.ne.s32.totalorder %s319, %s320
    %p332 = scmp.eq.s32.totalorder %s27, 1
    %p333 = por %p331, %p332
    %p335 = scmp.ne.s32.totalorder %s320, %s334
    %p336 = scmp.eq.s32.totalorder %s27, 0
    %p337 = por %p335, %p336
    %s339 = sadd.s32 %s338, 1
    %p342 = scmp.eq.s32.totalorder %s21, 1
    %p343 = scmp.ne.s32.totalorder %s338, %s340
    %p344 = scmp.eq.s32.totalorder %s21, 0
    %p345 = por %p343, %p344
    %p346 = scmp.ne.s32.totalorder %s338, %s340
    %p347 = scmp.eq.s32.totalorder %s26, 1
    %p348 = por %p346, %p347
    %p349 = scmp.ne.s32.totalorder %s340, %s341
    %p350 = scmp.eq.s32.totalorder %s26, 0
    %p351 = por %p349, %p350
    %p352 = scmp.ne.s32.totalorder %s340, %s341
    %p353 = scmp.eq.s32.totalorder %s27, 1
    %p354 = por %p352, %p353
    %p356 = scmp.ne.s32.totalorder %s341, %s355
    %p357 = scmp.eq.s32.totalorder %s27, 0
    %p358 = por %p356, %p357
    %s359 = ssub.s32 %s21, %s28
    %p360 = scmp.eq.s32.totalorder %s359, 0
    %s362 = sadd.s32 %s361, 1
    %s363 = scalar_select %p360, %s361, %s362
    %p366 = pneg %p360
    %p367 = scmp.eq.s32.totalorder %s21, 1
    %p368 = por %p366, %p367
    %p369 = scmp.ne.s32.totalorder %s361, %s364
    %p370 = scmp.eq.s32.totalorder %s21, 0
    %p371 = por %p369, %p370
    %p372 = scmp.ne.s32.totalorder %s361, %s364
    %p373 = scmp.eq.s32.totalorder %s26, 1
    %p374 = por %p372, %p373
    %p375 = scmp.ne.s32.totalorder %s364, %s365
    %p376 = scmp.eq.s32.totalorder %s26, 0
    %p377 = por %p375, %p376
    %p378 = scmp.ne.s32.totalorder %s364, %s365
    %p379 = scmp.eq.s32.totalorder %s27, 1
    %p380 = por %p378, %p379
    %p382 = scmp.ne.s32.totalorder %s365, %s381
    %p383 = scmp.eq.s32.totalorder %s27, 0
    %p384 = por %p382, %p383
    %p385 = scmp.le.s32.totalorder 1, %s21
    %p386 = scmp.lt.s32.totalorder %s21, 3
    %p387 = pnand %p385, %p386
    %p388 = pneg %p387
    // Predicated region
    $region9: #{_lambda_.2} parent=5 // pred_check
      _
    $region10: #{_lambda_.2} parent=5 // pred_check_branch
      %390 = sbr.rel (%p387) target = $region12
    $region11: #{_lambda_.2} parent=5 // pred_region
      %s391 = ssub.s32 %s21, 1
      // Predicated region
      $region13: #{_lambda_.2} parent=11 // pred_check
        %p392 = pneg %p68
      $region14: #{_lambda_.2} parent=11 // pred_check_branch
        %394 = sbr.rel (%p392) target = $region16
      $region15: #{_lambda_.2} parent=11 // pred_region
        _
      $region16: #{_lambda_.2} parent=11 // pred_fallthru
        _
      // Predicated region
      $region17: #{_lambda_.2} parent=11 // pred_check
        %p395 = pneg %p89
      $region18: #{_lambda_.2} parent=11 // pred_check_branch
        %397 = sbr.rel (%p395) target = $region20
      $region19: #{_lambda_.2} parent=11 // pred_region
        _
      $region20: #{_lambda_.2} parent=11 // pred_fallthru
        _
      // Predicated region
      $region21: #{_lambda_.2} parent=11 // pred_check
        %p398 = pneg %p110
      $region22: #{_lambda_.2} parent=11 // pred_check_branch
        %400 = sbr.rel (%p398) target = $region24
      $region23: #{_lambda_.2} parent=11 // pred_region
        _
      $region24: #{_lambda_.2} parent=11 // pred_fallthru
        _
      // Predicated region
      $region25: #{_lambda_.2} parent=11 // pred_check
        %p401 = pneg %p131
      $region26: #{_lambda_.2} parent=11 // pred_check_branch
        %403 = sbr.rel (%p401) target = $region28
      $region27: #{_lambda_.2} parent=11 // pred_region
        _
      $region28: #{_lambda_.2} parent=11 // pred_fallthru
        _
      // Predicated region
      $region29: #{_lambda_.2} parent=11 // pred_check
        %p404 = pneg %p152
      $region30: #{_lambda_.2} parent=11 // pred_check_branch
        %406 = sbr.rel (%p404) target = $region32
      $region31: #{_lambda_.2} parent=11 // pred_region
        _
      $region32: #{_lambda_.2} parent=11 // pred_fallthru
        _
      // Predicated region
      $region33: #{_lambda_.2} parent=11 // pred_check
        %p407 = pneg %p225
      $region34: #{_lambda_.2} parent=11 // pred_check_branch
        %409 = sbr.rel (%p407) target = $region36
      $region35: #{_lambda_.2} parent=11 // pred_region
        _
      $region36: #{_lambda_.2} parent=11 // pred_fallthru
        _
      // Predicated region
      $region37: #{_lambda_.2} parent=11 // pred_check
        %p410 = pneg %p246
      $region38: #{_lambda_.2} parent=11 // pred_check_branch
        %412 = sbr.rel (%p410) target = $region40
      $region39: #{_lambda_.2} parent=11 // pred_region
        _
      $region40: #{_lambda_.2} parent=11 // pred_fallthru
        _
      // Predicated region
      $region41: #{_lambda_.2} parent=11 // pred_check
        %p413 = pneg %p267
      $region42: #{_lambda_.2} parent=11 // pred_check_branch
        %415 = sbr.rel (%p413) target = $region44
      $region43: #{_lambda_.2} parent=11 // pred_region
        _
      $region44: #{_lambda_.2} parent=11 // pred_fallthru
        _
      // Predicated region
      $region45: #{_lambda_.2} parent=11 // pred_check
        %p416 = pneg %p288
      $region46: #{_lambda_.2} parent=11 // pred_check_branch
        %418 = sbr.rel (%p416) target = $region48
      $region47: #{_lambda_.2} parent=11 // pred_region
        _
      $region48: #{_lambda_.2} parent=11 // pred_fallthru
        _
      // Predicated region
      $region49: #{_lambda_.2} parent=11 // pred_check
        %p419 = pneg %p309
      $region50: #{_lambda_.2} parent=11 // pred_check_branch
        %421 = sbr.rel (%p419) target = $region52
      $region51: #{_lambda_.2} parent=11 // pred_region
        _
      $region52: #{_lambda_.2} parent=11 // pred_fallthru
        _
      // Predicated region
      $region53: #{_lambda_.2} parent=11 // pred_check
        %p422 = pneg %p330
      $region54: #{_lambda_.2} parent=11 // pred_check_branch
        %424 = sbr.rel (%p422) target = $region56
      $region55: #{_lambda_.2} parent=11 // pred_region
        _
      $region56: #{_lambda_.2} parent=11 // pred_fallthru
        _
      // Predicated region
      $region57: #{_lambda_.2} parent=11 // pred_check
        %p425 = pneg %p351
      $region58: #{_lambda_.2} parent=11 // pred_check_branch
        %427 = sbr.rel (%p425) target = $region60
      $region59: #{_lambda_.2} parent=11 // pred_region
        _
      $region60: #{_lambda_.2} parent=11 // pred_fallthru
        _
    $region12: #{_lambda_.2} parent=5 // pred_fallthru
      _
    %p428 = scmp.lt.s32.totalorder %s21, 2
    // Predicated region
    $region61: #{_lambda_.2} parent=5 // pred_check
      %p429 = pneg %p428
    $region62: #{_lambda_.2} parent=5 // pred_check_branch
      %431 = sbr.rel (%p429) target = $region64
    $region63: #{_lambda_.2} parent=5 // pred_region
      // Predicated region
      $region65: #{_lambda_.2} parent=63 // pred_check
        %p432 = pneg %p41
      $region66: #{_lambda_.2} parent=63 // pred_check_branch
        %434 = sbr.rel (%p432) target = $region68
      $region67: #{_lambda_.2} parent=63 // pred_region
        %p435 = scmp.lt.s32.totalorder %s21, 1
        %s436 = scalar_select %p435, %s21, 1
        %s437 = smul.addr %s436, 2
        %s438 = smul.addr %s437, 8
        %s439 = scalar_lea.vmem %s0, %s438
      $region68: #{_lambda_.2} parent=63 // pred_fallthru
        _
      // Predicated region
      $region69: #{_lambda_.2} parent=63 // pred_check
        %p440 = pneg %p172
      $region70: #{_lambda_.2} parent=63 // pred_check_branch
        %442 = sbr.rel (%p440) target = $region72
      $region71: #{_lambda_.2} parent=63 // pred_region
        %p443 = scmp.lt.s32.totalorder %s21, 1
        %s444 = scalar_select %p443, %s21, 1
        %s445 = scalar_lea.vmem %s6, %s444
      $region72: #{_lambda_.2} parent=63 // pred_fallthru
        _
      // Predicated region
      $region73: #{_lambda_.2} parent=63 // pred_check
        %p446 = pneg %p198
      $region74: #{_lambda_.2} parent=63 // pred_check_branch
        %448 = sbr.rel (%p446) target = $region76
      $region75: #{_lambda_.2} parent=63 // pred_region
        %p449 = scmp.lt.s32.totalorder %s21, 1
        %s450 = scalar_select %p449, %s21, 1
        %s451 = scalar_lea.vmem %s7, %s450
      $region76: #{_lambda_.2} parent=63 // pred_fallthru
        _
    $region64: #{_lambda_.2} parent=5 // pred_fallthru
      _
    %p452 = scmp.le.s32.totalorder 1, %s21
    %p453 = scmp.lt.s32.totalorder %s21, 3
    %p454 = pnand %p452, %p453
    %p455 = pneg %p454
    // Predicated region
    $region77: #{_lambda_.2} parent=5 // pred_check
      _
    $region78: #{_lambda_.2} parent=5 // pred_check_branch
      %457 = sbr.rel (%p454) target = $region80
    $region79: #{_lambda_.2} parent=5 // pred_region
      %s458 = ssub.s32 %s21, 1
      %p459 = scmp.lt.s32.totalorder %s26, 1
      %s460 = scalar_select %p459, %s26, 1
      %s461 = smul.addr %s460, 2
      %s462 = smul.addr %s461, 8
      %s463 = scalar_lea.vmem %s0, %s462
      %p464 = pneg %p47
      %p465 = pneg %p44
      %p466 = pneg %p68
      %p467 = pneg %p65
      %p468 = pneg %p89
      %p469 = pneg %p86
      %p470 = pneg %p110
      %p471 = pneg %p107
      %p472 = pneg %p131
      %p473 = pneg %p128
      %p474 = pneg %p152
      %p475 = pneg %p149
      %p476 = scmp.lt.s32.totalorder %s26, 1
      %s477 = scalar_select %p476, %s26, 1
      %s478 = scalar_lea.vmem %s6, %s477
      %p479 = pneg %p178
      %p480 = pneg %p175
      %p481 = scmp.lt.s32.totalorder %s26, 1
      %s482 = scalar_select %p481, %s26, 1
      %s483 = scalar_lea.vmem %s7, %s482
      %p484 = pneg %p204
      %p485 = pneg %p201
      %p486 = pneg %p225
      %p487 = pneg %p222
      %p488 = pneg %p246
      %p489 = pneg %p243
      %p490 = pneg %p267
      %p491 = pneg %p264
      %p492 = pneg %p288
      %p493 = pneg %p285
      %p494 = pneg %p309
      %p495 = pneg %p306
      %p496 = pneg %p330
      %p497 = pneg %p327
      %p498 = pneg %p351
      %p499 = pneg %p348
      %p500 = pneg %p377
      %p501 = pneg %p374
      %p502 = scmp.lt.s32.totalorder %s26, 1
      %s503 = scalar_select %p502, %s26, 1
      %s504 = smul.addr %s503, 2
      %s505 = smul.addr %s504, 8
      %s506 = scalar_lea.vmem %s15, %s505
      %p507 = scmp.lt.s32.totalorder %s26, 1
      %s508 = scalar_select %p507, %s26, 1
      %s509 = smul.addr %s508, 2
      %s510 = smul.addr %s509, 8
      %s511 = scalar_lea.vmem %s0, %s510
      %p512 = scmp.lt.s32.totalorder %s26, 1
      %s513 = scalar_select %p512, %s26, 1
      %s514 = scalar_lea.vmem %s6, %s513
      %p515 = scmp.lt.s32.totalorder %s26, 1
      %s516 = scalar_select %p515, %s26, 1
      %s517 = scalar_lea.vmem %s7, %s516
      %p518 = scmp.lt.s32.totalorder %s26, 1
      %s519 = scalar_select %p518, %s26, 1
      %s520 = smul.addr %s519, 2
      %s521 = smul.addr %s520, 8
      %s522 = scalar_lea.vmem %s15, %s521
      %v524 = vld [vmem:[%s12] sm:$0xff]
      %v525 = vld [vmem:[%s12 + $0x8] sm:$0xff]
      %v526 = vld [vmem:[%s12 + $0x10] sm:$0xff]
      %v527 = vld [vmem:[%s12 + $0x18] sm:$0xff]
      %v528 = vld [vmem:[%s511] sm:$0xff]
      %v529 = vld [vmem:[%s511 + $0x8] sm:$0xff]
      %v530 = vpack.c.bf16 %v529, %v528
      %v531 = vld [vmem:[%s1] sm:$0xf]
      %v532 = vld [vmem:[%s1 + $0x4] sm:$0xf]
      %v535 = vunpack.c.l.b16 %v531
      %v536 = vunpack.c.l.b16 %v532
      %v537 = vpack.c.b16 %v536, %v535
      %vm538 = vcmask 130048
      %v540 = vsel %vm538, %v537, 0
      %542 = vmatprep.subr.bf16.mxu0 0
      %543 = vmatpush1.bf16.msra.mxu0 %v530
      %544 = vmatprep.subr.bf16.mxu0 0
      %545 = vmatpush1.bf16.msra.mxu0 0
      %546 = vmatprep.subr.bf16.mxu0 0
      %547 = vmatpush1.bf16.msra.mxu0 0
      %548 = vmatprep.subr.bf16.mxu0 0
      %549 = vmatpush1.bf16.msra.mxu0 0
      %550 = vmatprep.subr.bf16.mxu0 0
      %551 = vmatpush1.bf16.msra.mxu0 0
      %552 = vmatprep.subr.bf16.mxu0 0
      %553 = vmatpush1.bf16.msra.mxu0 0
      %554 = vmatprep.subr.bf16.mxu0 0
      %555 = vmatpush1.bf16.msra.mxu0 0
      %556 = vmatprep.subr.bf16.mxu0 0
      %557 = vmatpush1.bf16.msra.mxu0 0
      %558 = vmatprep.subr.bf16.mxu0 0
      %559 = vmatpush1.bf16.msra.mxu0 0
      %560 = vmatprep.subr.bf16.mxu0 0
      %561 = vmatpush1.bf16.msra.mxu0 0
      %562 = vmatprep.subr.bf16.mxu0 0
      %563 = vmatpush1.bf16.msra.mxu0 0
      %564 = vmatprep.subr.bf16.mxu0 0
      %565 = vmatpush1.bf16.msra.mxu0 0
      %566 = vmatprep.subr.bf16.mxu0 0
      %567 = vmatpush1.bf16.msra.mxu0 0
      %568 = vmatprep.subr.bf16.mxu0 0
      %569 = vmatpush1.bf16.msra.mxu0 0
      %570 = vmatprep.subr.bf16.mxu0 0
      %571 = vmatpush1.bf16.msra.mxu0 0
      %572 = vmatprep.subr.bf16.mxu0 0
      %573 = vmatpush1.bf16.msra.mxu0 0
      %574 = vmatprep.mubr.bf16.mxu0 0
      %575 = vmatmul.mubr.bf16.gmra.mrb[0].mxu0 %v540
      %v576 = vpop.f32.mrb[0].mxu0
      %v577 = vadd.f32 0.0, %v576
      %v578 = vpop.f32.mrb[0].mxu0
      %v579 = vpop.f32.mrb[0].mxu0
      %v580 = vadd.f32 0.0, %v579
      %v581 = vpop.f32.mrb[0].mxu0
      %582 = vdwg.mxu0
      %v583 = vpack.c.bf16 %v580, %v577
      %v584 = vld [vmem:[%s2] sm:$0x3]
      %s585 = scalar_lea.vmem %s1, 8
      %v586 = vld [vmem:[%s585] sm:$0xf]
      %v587 = vld [vmem:[%s585 + $0x4] sm:$0xf]
      %v590 = vunpack.c.l.b16 %v586
      %v591 = vunpack.c.l.b16 %v587
      %v592 = vpack.c.b16 %v591, %v590
      %v594 = vsel %vm538, %v592, 0
      %596 = vmatprep.subr.bf16.mxu0 0
      %597 = vmatpush1.bf16.msra.mxu0 %v530
      %598 = vmatprep.subr.bf16.mxu0 0
      %599 = vmatpush1.bf16.msra.mxu0 0
      %600 = vmatprep.subr.bf16.mxu0 0
      %601 = vmatpush1.bf16.msra.mxu0 0
      %602 = vmatprep.subr.bf16.mxu0 0
      %603 = vmatpush1.bf16.msra.mxu0 0
      %604 = vmatprep.subr.bf16.mxu0 0
      %605 = vmatpush1.bf16.msra.mxu0 0
      %606 = vmatprep.subr.bf16.mxu0 0
      %607 = vmatpush1.bf16.msra.mxu0 0
      %608 = vmatprep.subr.bf16.mxu0 0
      %609 = vmatpush1.bf16.msra.mxu0 0
      %610 = vmatprep.subr.bf16.mxu0 0
      %611 = vmatpush1.bf16.msra.mxu0 0
      %612 = vmatprep.subr.bf16.mxu0 0
      %613 = vmatpush1.bf16.msra.mxu0 0
      %614 = vmatprep.subr.bf16.mxu0 0
      %615 = vmatpush1.bf16.msra.mxu0 0
      %616 = vmatprep.subr.bf16.mxu0 0
      %617 = vmatpush1.bf16.msra.mxu0 0
      %618 = vmatprep.subr.bf16.mxu0 0
      %619 = vmatpush1.bf16.msra.mxu0 0
      %620 = vmatprep.subr.bf16.mxu0 0
      %621 = vmatpush1.bf16.msra.mxu0 0
      %622 = vmatprep.subr.bf16.mxu0 0
      %623 = vmatpush1.bf16.msra.mxu0 0
      %624 = vmatprep.subr.bf16.mxu0 0
      %625 = vmatpush1.bf16.msra.mxu0 0
      %626 = vmatprep.subr.bf16.mxu0 0
      %627 = vmatpush1.bf16.msra.mxu0 0
      %628 = vmatprep.mubr.bf16.mxu0 0
      %629 = vmatmul.mubr.bf16.gmra.mrb[0].mxu0 %v594
      %v630 = vpop.f32.mrb[0].mxu0
      %v631 = vadd.f32 0.0, %v630
      %v632 = vpop.f32.mrb[0].mxu0
      %v633 = vpop.f32.mrb[0].mxu0
      %v634 = vadd.f32 0.0, %v633
      %v635 = vpop.f32.mrb[0].mxu0
      %636 = vdwg.mxu0
      %v637 = vpack.c.bf16 %v634, %v631
      %s638 = scalar_lea.vmem %s2, 2
      %v639 = vld [vmem:[%s638] sm:$0x3]
      %vm640 = vcmask 31744
      %v642 = vsel %vm640, %v637, 0
      %vm644 = vcmask 1041408
      %v646 = vsel %vm644, %v639, 0
      %648 = vmatprep.subr.bf16.mxu0 0
      %649 = vmatpush1.bf16.msra.mxu0 %v646
      %650 = vmatprep.subr.bf16.mxu0 0
      %651 = vmatpush1.bf16.msra.mxu0 0
      %652 = vmatprep.subr.bf16.mxu0 0
      %653 = vmatpush1.bf16.msra.mxu0 0
      %654 = vmatprep.subr.bf16.mxu0 0
      %655 = vmatpush1.bf16.msra.mxu0 0
      %656 = vmatprep.subr.bf16.mxu0 0
      %657 = vmatpush1.bf16.msra.mxu0 0
      %658 = vmatprep.subr.bf16.mxu0 0
      %659 = vmatpush1.bf16.msra.mxu0 0
      %660 = vmatprep.subr.bf16.mxu0 0
      %661 = vmatpush1.bf16.msra.mxu0 0
      %662 = vmatprep.subr.bf16.mxu0 0
      %663 = vmatpush1.bf16.msra.mxu0 0
      %664 = vmatprep.subr.bf16.mxu0 0
      %665 = vmatpush1.bf16.msra.mxu0 0
      %666 = vmatprep.subr.bf16.mxu0 0
      %667 = vmatpush1.bf16.msra.mxu0 0
      %668 = vmatprep.subr.bf16.mxu0 0
      %669 = vmatpush1.bf16.msra.mxu0 0
      %670 = vmatprep.subr.bf16.mxu0 0
      %671 = vmatpush1.bf16.msra.mxu0 0
      %672 = vmatprep.subr.bf16.mxu0 0
      %673 = vmatpush1.bf16.msra.mxu0 0
      %674 = vmatprep.subr.bf16.mxu0 0
      %675 = vmatpush1.bf16.msra.mxu0 0
      %676 = vmatprep.subr.bf16.mxu0 0
      %677 = vmatpush1.bf16.msra.mxu0 0
      %678 = vmatprep.subr.bf16.mxu0 0
      %679 = vmatpush1.bf16.msra.mxu0 0
      %680 = vmatprep.mubr.bf16.mxu0 0
      %681 = vmatmul.mubr.bf16.gmra.mrb[0].mxu0 %v642
      %v682 = vpop.f32.mrb[0].mxu0
      %v683 = vadd.f32 0.0, %v682
      %v684 = vpop.f32.mrb[0].mxu0
      %v685 = vpop.f32.mrb[0].mxu0
      %v686 = vadd.f32 0.0, %v685
      %v687 = vpop.f32.mrb[0].mxu0
      %688 = vdwg.mxu0
      %v690 = vsel %vm640, %v583, 0
      %v693 = vsel %vm644, %v584, 0
      %695 = vmatprep.subr.bf16.mxu0 0
      %696 = vmatpush1.bf16.msra.mxu0 %v693
      %697 = vmatprep.subr.bf16.mxu0 0
      %698 = vmatpush1.bf16.msra.mxu0 0
      %699 = vmatprep.subr.bf16.mxu0 0
      %700 = vmatpush1.bf16.msra.mxu0 0
      %701 = vmatprep.subr.bf16.mxu0 0
      %702 = vmatpush1.bf16.msra.mxu0 0
      %703 = vmatprep.subr.bf16.mxu0 0
      %704 = vmatpush1.bf16.msra.mxu0 0
      %705 = vmatprep.subr.bf16.mxu0 0
      %706 = vmatpush1.bf16.msra.mxu0 0
      %707 = vmatprep.subr.bf16.mxu0 0
      %708 = vmatpush1.bf16.msra.mxu0 0
      %709 = vmatprep.subr.bf16.mxu0 0
      %710 = vmatpush1.bf16.msra.mxu0 0
      %711 = vmatprep.subr.bf16.mxu0 0
      %712 = vmatpush1.bf16.msra.mxu0 0
      %713 = vmatprep.subr.bf16.mxu0 0
      %714 = vmatpush1.bf16.msra.mxu0 0
      %715 = vmatprep.subr.bf16.mxu0 0
      %716 = vmatpush1.bf16.msra.mxu0 0
      %717 = vmatprep.subr.bf16.mxu0 0
      %718 = vmatpush1.bf16.msra.mxu0 0
      %719 = vmatprep.subr.bf16.mxu0 0
      %720 = vmatpush1.bf16.msra.mxu0 0
      %721 = vmatprep.subr.bf16.mxu0 0
      %722 = vmatpush1.bf16.msra.mxu0 0
      %723 = vmatprep.subr.bf16.mxu0 0
      %724 = vmatpush1.bf16.msra.mxu0 0
      %725 = vmatprep.subr.bf16.mxu0 0
      %726 = vmatpush1.bf16.msra.mxu0 0
      %727 = vmatprep.mubr.bf16.mxu0 0
      %728 = vmatmul.mubr.bf16.gmra.mrb[0].mxu0 %v690
      %v729 = vpop.f32.mrb[0].mxu0
      %v730 = vadd.f32 %v683, %v729
      %v731 = vpop.f32.mrb[0].mxu0
      %v732 = vpop.f32.mrb[0].mxu0
      %v733 = vadd.f32 %v686, %v732
      %v734 = vpop.f32.mrb[0].mxu0
      %735 = vdwg.mxu0
      %s736 = scalar_lea.vmem %s1, 16
      %v737 = vld [vmem:[%s736] sm:$0xf]
      %v738 = vld [vmem:[%s736 + $0x4] sm:$0xf]
      %v741 = vunpack.c.l.b16 %v737
      %v742 = vunpack.c.l.b16 %v738
      %v743 = vpack.c.b16 %v742, %v741
      %v745 = vsel %vm538, %v743, 0
      %747 = vmatprep.subr.bf16.mxu0 0
      %748 = vmatpush1.bf16.msra.mxu0 %v530
      %749 = vmatprep.subr.bf16.mxu0 0
      %750 = vmatpush1.bf16.msra.mxu0 0
      %751 = vmatprep.subr.bf16.mxu0 0
      %752 = vmatpush1.bf16.msra.mxu0 0
      %753 = vmatprep.subr.bf16.mxu0 0
      %754 = vmatpush1.bf16.msra.mxu0 0
      %755 = vmatprep.subr.bf16.mxu0 0
      %756 = vmatpush1.bf16.msra.mxu0 0
      %757 = vmatprep.subr.bf16.mxu0 0
      %758 = vmatpush1.bf16.msra.mxu0 0
      %759 = vmatprep.subr.bf16.mxu0 0
      %760 = vmatpush1.bf16.msra.mxu0 0
      %761 = vmatprep.subr.bf16.mxu0 0
      %762 = vmatpush1.bf16.msra.mxu0 0
      %763 = vmatprep.subr.bf16.mxu0 0
      %764 = vmatpush1.bf16.msra.mxu0 0
      %765 = vmatprep.subr.bf16.mxu0 0
      %766 = vmatpush1.bf16.msra.mxu0 0
      %767 = vmatprep.subr.bf16.mxu0 0
      %768 = vmatpush1.bf16.msra.mxu0 0
      %769 = vmatprep.subr.bf16.mxu0 0
      %770 = vmatpush1.bf16.msra.mxu0 0
      %771 = vmatprep.subr.bf16.mxu0 0
      %772 = vmatpush1.bf16.msra.mxu0 0
      %773 = vmatprep.subr.bf16.mxu0 0
      %774 = vmatpush1.bf16.msra.mxu0 0
      %775 = vmatprep.subr.bf16.mxu0 0
      %776 = vmatpush1.bf16.msra.mxu0 0
      %777 = vmatprep.subr.bf16.mxu0 0
      %778 = vmatpush1.bf16.msra.mxu0 0
      %779 = vmatprep.mubr.bf16.mxu0 0
      %780 = vmatmul.mubr.bf16.gmra.mrb[0].mxu0 %v745
      %v781 = vpop.f32.mrb[0].mxu0
      %v782 = vadd.f32 0.0, %v781
      %v783 = vpop.f32.mrb[0].mxu0
      %v784 = vpop.f32.mrb[0].mxu0
      %v785 = vadd.f32 0.0, %v784
      %v786 = vpop.f32.mrb[0].mxu0
      %787 = vdwg.mxu0
      %v788 = vpack.c.bf16 %v785, %v782
      %s789 = scalar_lea.vmem %s2, 4
      %v790 = vld [vmem:[%s789] sm:$0x3]
      %v792 = vsel %vm640, %v788, 0
      %v795 = vsel %vm644, %v790, 0
      %797 = vmatprep.subr.bf16.mxu0 0
      %798 = vmatpush1.bf16.msra.mxu0 %v795
      %799 = vmatprep.subr.bf16.mxu0 0
      %800 = vmatpush1.bf16.msra.mxu0 0
      %801 = vmatprep.subr.bf16.mxu0 0
      %802 = vmatpush1.bf16.msra.mxu0 0
      %803 = vmatprep.subr.bf16.mxu0 0
      %804 = vmatpush1.bf16.msra.mxu0 0
      %805 = vmatprep.subr.bf16.mxu0 0
      %806 = vmatpush1.bf16.msra.mxu0 0
      %807 = vmatprep.subr.bf16.mxu0 0
      %808 = vmatpush1.bf16.msra.mxu0 0
      %809 = vmatprep.subr.bf16.mxu0 0
      %810 = vmatpush1.bf16.msra.mxu0 0
      %811 = vmatprep.subr.bf16.mxu0 0
      %812 = vmatpush1.bf16.msra.mxu0 0
      %813 = vmatprep.subr.bf16.mxu0 0
      %814 = vmatpush1.bf16.msra.mxu0 0
      %815 = vmatprep.subr.bf16.mxu0 0
      %816 = vmatpush1.bf16.msra.mxu0 0
      %817 = vmatprep.subr.bf16.mxu0 0
      %818 = vmatpush1.bf16.msra.mxu0 0
      %819 = vmatprep.subr.bf16.mxu0 0
      %820 = vmatpush1.bf16.msra.mxu0 0
      %821 = vmatprep.subr.bf16.mxu0 0
      %822 = vmatpush1.bf16.msra.mxu0 0
      %823 = vmatprep.subr.bf16.mxu0 0
      %824 = vmatpush1.bf16.msra.mxu0 0
      %825 = vmatprep.subr.bf16.mxu0 0
      %826 = vmatpush1.bf16.msra.mxu0 0
      %827 = vmatprep.subr.bf16.mxu0 0
      %828 = vmatpush1.bf16.msra.mxu0 0
      %829 = vmatprep.mubr.bf16.mxu0 0
      %830 = vmatmul.mubr.bf16.gmra.mrb[0].mxu0 %v792
      %v831 = vpop.f32.mrb[0].mxu0
      %v832 = vadd.f32 0.0, %v831
      %v833 = vpop.f32.mrb[0].mxu0
      %v834 = vpop.f32.mrb[0].mxu0
      %v835 = vadd.f32 0.0, %v834
      %v836 = vpop.f32.mrb[0].mxu0
      %837 = vdwg.mxu0
      %v838 = vadd.f32 %v730, %v832
      %v839 = vadd.f32 %v733, %v835
      %s840 = scalar_lea.vmem %s1, 24
      %v841 = vld [vmem:[%s840] sm:$0xf]
      %v842 = vld [vmem:[%s840 + $0x4] sm:$0xf]
      %v845 = vunpack.c.l.b16 %v841
      %v846 = vunpack.c.l.b16 %v842
      %v847 = vpack.c.b16 %v846, %v845
      %v849 = vsel %vm538, %v847, 0
      %851 = vmatprep.subr.bf16.mxu0 0
      %852 = vmatpush1.bf16.msra.mxu0 %v530
      %853 = vmatprep.subr.bf16.mxu0 0
      %854 = vmatpush1.bf16.msra.mxu0 0
      %855 = vmatprep.subr.bf16.mxu0 0
      %856 = vmatpush1.bf16.msra.mxu0 0
      %857 = vmatprep.subr.bf16.mxu0 0
      %858 = vmatpush1.bf16.msra.mxu0 0
      %859 = vmatprep.subr.bf16.mxu0 0
      %860 = vmatpush1.bf16.msra.mxu0 0
      %861 = vmatprep.subr.bf16.mxu0 0
      %862 = vmatpush1.bf16.msra.mxu0 0
      %863 = vmatprep.subr.bf16.mxu0 0
      %864 = vmatpush1.bf16.msra.mxu0 0
      %865 = vmatprep.subr.bf16.mxu0 0
      %866 = vmatpush1.bf16.msra.mxu0 0
      %867 = vmatprep.subr.bf16.mxu0 0
      %868 = vmatpush1.bf16.msra.mxu0 0
      %869 = vmatprep.subr.bf16.mxu0 0
      %870 = vmatpush1.bf16.msra.mxu0 0
      %871 = vmatprep.subr.bf16.mxu0 0
      %872 = vmatpush1.bf16.msra.mxu0 0
      %873 = vmatprep.subr.bf16.mxu0 0
      %874 = vmatpush1.bf16.msra.mxu0 0
      %875 = vmatprep.subr.bf16.mxu0 0
      %876 = vmatpush1.bf16.msra.mxu0 0
      %877 = vmatprep.subr.bf16.mxu0 0
      %878 = vmatpush1.bf16.msra.mxu0 0
      %879 = vmatprep.subr.bf16.mxu0 0
      %880 = vmatpush1.bf16.msra.mxu0 0
      %881 = vmatprep.subr.bf16.mxu0 0
      %882 = vmatpush1.bf16.msra.mxu0 0
      %883 = vmatprep.mubr.bf16.mxu0 0
      %884 = vmatmul.mubr.bf16.gmra.mrb[0].mxu0 %v849
      %v885 = vpop.f32.mrb[0].mxu0
      %v886 = vadd.f32 0.0, %v885
      %v887 = vpop.f32.mrb[0].mxu0
      %v888 = vpop.f32.mrb[0].mxu0
      %v889 = vadd.f32 0.0, %v888
      %v890 = vpop.f32.mrb[0].mxu0
      %891 = vdwg.mxu0
      %v892 = vpack.c.bf16 %v889, %v886
      %s893 = scalar_lea.vmem %s2, 6
      %v894 = vld [vmem:[%s893] sm:$0x3]
      %v896 = vsel %vm640, %v892, 0
      %v899 = vsel %vm644, %v894, 0
      %901 = vmatprep.subr.bf16.mxu0 0
      %902 = vmatpush1.bf16.msra.mxu0 %v899
      %903 = vmatprep.subr.bf16.mxu0 0
      %904 = vmatpush1.bf16.msra.mxu0 0
      %905 = vmatprep.subr.bf16.mxu0 0
      %906 = vmatpush1.bf16.msra.mxu0 0
      %907 = vmatprep.subr.bf16.mxu0 0
      %908 = vmatpush1.bf16.msra.mxu0 0
      %909 = vmatprep.subr.bf16.mxu0 0
      %910 = vmatpush1.bf16.msra.mxu0 0
      %911 = vmatprep.subr.bf16.mxu0 0
      %912 = vmatpush1.bf16.msra.mxu0 0
      %913 = vmatprep.subr.bf16.mxu0 0
      %914 = vmatpush1.bf16.msra.mxu0 0
      %915 = vmatprep.subr.bf16.mxu0 0
      %916 = vmatpush1.bf16.msra.mxu0 0
      %917 = vmatprep.subr.bf16.mxu0 0
      %918 = vmatpush1.bf16.msra.mxu0 0
      %919 = vmatprep.subr.bf16.mxu0 0
      %920 = vmatpush1.bf16.msra.mxu0 0
      %921 = vmatprep.subr.bf16.mxu0 0
      %922 = vmatpush1.bf16.msra.mxu0 0
      %923 = vmatprep.subr.bf16.mxu0 0
      %924 = vmatpush1.bf16.msra.mxu0 0
      %925 = vmatprep.subr.bf16.mxu0 0
      %926 = vmatpush1.bf16.msra.mxu0 0
      %927 = vmatprep.subr.bf16.mxu0 0
      %928 = vmatpush1.bf16.msra.mxu0 0
      %929 = vmatprep.subr.bf16.mxu0 0
      %930 = vmatpush1.bf16.msra.mxu0 0
      %931 = vmatprep.subr.bf16.mxu0 0
      %932 = vmatpush1.bf16.msra.mxu0 0
      %933 = vmatprep.mubr.bf16.mxu0 0
      %934 = vmatmul.mubr.bf16.gmra.mrb[0].mxu0 %v896
      %v935 = vpop.f32.mrb[0].mxu0
      %v936 = vadd.f32 0.0, %v935
      %v937 = vpop.f32.mrb[0].mxu0
      %v938 = vpop.f32.mrb[0].mxu0
      %v939 = vadd.f32 0.0, %v938
      %v940 = vpop.f32.mrb[0].mxu0
      %941 = vdwg.mxu0
      %v942 = vadd.f32 %v838, %v936
      %v943 = vadd.f32 %v839, %v939
      %s944 = scalar_lea.vmem %s1, 32
      %v945 = vld [vmem:[%s944] sm:$0xf]
      %v946 = vld [vmem:[%s944 + $0x4] sm:$0xf]
      %v949 = vunpack.c.l.b16 %v945
      %v950 = vunpack.c.l.b16 %v946
      %v951 = vpack.c.b16 %v950, %v949
      %v953 = vsel %vm538, %v951, 0
      %955 = vmatprep.subr.bf16.mxu0 0
      %956 = vmatpush1.bf16.msra.mxu0 %v530
      %957 = vmatprep.subr.bf16.mxu0 0
      %958 = vmatpush1.bf16.msra.mxu0 0
      %959 = vmatprep.subr.bf16.mxu0 0
      %960 = vmatpush1.bf16.msra.mxu0 0
      %961 = vmatprep.subr.bf16.mxu0 0
      %962 = vmatpush1.bf16.msra.mxu0 0
      %963 = vmatprep.subr.bf16.mxu0 0
      %964 = vmatpush1.bf16.msra.mxu0 0
      %965 = vmatprep.subr.bf16.mxu0 0
      %966 = vmatpush1.bf16.msra.mxu0 0
      %967 = vmatprep.subr.bf16.mxu0 0
      %968 = vmatpush1.bf16.msra.mxu0 0
      %969 = vmatprep.subr.bf16.mxu0 0
      %970 = vmatpush1.bf16.msra.mxu0 0
      %971 = vmatprep.subr.bf16.mxu0 0
      %972 = vmatpush1.bf16.msra.mxu0 0
      %973 = vmatprep.subr.bf16.mxu0 0
      %974 = vmatpush1.bf16.msra.mxu0 0
      %975 = vmatprep.subr.bf16.mxu0 0
      %976 = vmatpush1.bf16.msra.mxu0 0
      %977 = vmatprep.subr.bf16.mxu0 0
      %978 = vmatpush1.bf16.msra.mxu0 0
      %979 = vmatprep.subr.bf16.mxu0 0
      %980 = vmatpush1.bf16.msra.mxu0 0
      %981 = vmatprep.subr.bf16.mxu0 0
      %982 = vmatpush1.bf16.msra.mxu0 0
      %983 = vmatprep.subr.bf16.mxu0 0
      %984 = vmatpush1.bf16.msra.mxu0 0
      %985 = vmatprep.subr.bf16.mxu0 0
      %986 = vmatpush1.bf16.msra.mxu0 0
      %987 = vmatprep.mubr.bf16.mxu0 0
      %988 = vmatmul.mubr.bf16.gmra.mrb[0].mxu0 %v953
      %v989 = vpop.f32.mrb[0].mxu0
      %v990 = vadd.f32 0.0, %v989
      %v991 = vpop.f32.mrb[0].mxu0
      %v992 = vpop.f32.mrb[0].mxu0
      %v993 = vadd.f32 0.0, %v992
      %v994 = vpop.f32.mrb[0].mxu0
      %995 = vdwg.mxu0
      %v996 = vpack.c.bf16 %v993, %v990
      %s997 = scalar_lea.vmem %s2, 8
      %v998 = vld [vmem:[%s997] sm:$0x3]
      %v1000 = vsel %vm640, %v996, 0
      %v1003 = vsel %vm644, %v998, 0
      %1005 = vmatprep.subr.bf16.mxu0 0
      %1006 = vmatpush1.bf16.msra.mxu0 %v1003
      %1007 = vmatprep.subr.bf16.mxu0 0
      %1008 = vmatpush1.bf16.msra.mxu0 0
      %1009 = vmatprep.subr.bf16.mxu0 0
      %1010 = vmatpush1.bf16.msra.mxu0 0
      %1011 = vmatprep.subr.bf16.mxu0 0
      %1012 = vmatpush1.bf16.msra.mxu0 0
      %1013 = vmatprep.subr.bf16.mxu0 0
      %1014 = vmatpush1.bf16.msra.mxu0 0
      %1015 = vmatprep.subr.bf16.mxu0 0
      %1016 = vmatpush1.bf16.msra.mxu0 0
      %1017 = vmatprep.subr.bf16.mxu0 0
      %1018 = vmatpush1.bf16.msra.mxu0 0
      %1019 = vmatprep.subr.bf16.mxu0 0
      %1020 = vmatpush1.bf16.msra.mxu0 0
      %1021 = vmatprep.subr.bf16.mxu0 0
      %1022 = vmatpush1.bf16.msra.mxu0 0
      %1023 = vmatprep.subr.bf16.mxu0 0
      %1024 = vmatpush1.bf16.msra.mxu0 0
      %1025 = vmatprep.subr.bf16.mxu0 0
      %1026 = vmatpush1.bf16.msra.mxu0 0
      %1027 = vmatprep.subr.bf16.mxu0 0
      %1028 = vmatpush1.bf16.msra.mxu0 0
      %1029 = vmatprep.subr.bf16.mxu0 0
      %1030 = vmatpush1.bf16.msra.mxu0 0
      %1031 = vmatprep.subr.bf16.mxu0 0
      %1032 = vmatpush1.bf16.msra.mxu0 0
      %1033 = vmatprep.subr.bf16.mxu0 0
      %1034 = vmatpush1.bf16.msra.mxu0 0
      %1035 = vmatprep.subr.bf16.mxu0 0
      %1036 = vmatpush1.bf16.msra.mxu0 0
      %1037 = vmatprep.mubr.bf16.mxu0 0
      %1038 = vmatmul.mubr.bf16.gmra.mrb[0].mxu0 %v1000
      %v1039 = vpop.f32.mrb[0].mxu0
      %v1040 = vadd.f32 0.0, %v1039
      %v1041 = vpop.f32.mrb[0].mxu0
      %v1042 = vpop.f32.mrb[0].mxu0
      %v1043 = vadd.f32 0.0, %v1042
      %v1044 = vpop.f32.mrb[0].mxu0
      %1045 = vdwg.mxu0
      %v1046 = vadd.f32 %v942, %v1040
      %v1047 = vadd.f32 %v943, %v1043
      %v1048 = vld [vmem:[%s3] sm:$0x1]
      %v1050 = vlaneseq
      %v1051 = vshrl.u32 %v1050, 7
      %v1052 = vsub.s32 0, %v1051
      %v1053 = vrot.slane %v1048, %v1052
      %v1055 = vadd.f32 %v1046, %v1053
      %v1056 = vadd.f32 %v1047, %v1053
      %vm1057 = vcmask 261120
      %v1059 = vsel %vm1057, %v1055, 0
      %v1062 = vsel %vm1057, %v1056, 0
      %1064 = vmatprep.subr.mxu0 0.0
      %1065 = vmatpush1.msra.mxu0 %v524
      %1066 = vmatprep.subr.mxu0 0.0
      %1067 = vmatpush1.msra.mxu0 %v525
      %1068 = vmatprep.subr.mxu0 0.0
      %1069 = vmatpush1.msra.mxu0 %v526
      %1070 = vmatprep.subr.mxu0 0.0
      %1071 = vmatpush1.msra.mxu0 %v527
      %1072 = vmatprep.subr.mxu0 0.0
      %1073 = vmatpush1.msra.mxu0 0.0
      %1074 = vmatprep.subr.mxu0 0.0
      %1075 = vmatpush1.msra.mxu0 0.0
      %1076 = vmatprep.subr.mxu0 0.0
      %1077 = vmatpush1.msra.mxu0 0.0
      %1078 = vmatprep.subr.mxu0 0.0
      %1079 = vmatpush1.msra.mxu0 0.0
      %1080 = vmatprep.subr.mxu0 0.0
      %1081 = vmatpush1.msra.mxu0 0.0
      %1082 = vmatprep.subr.mxu0 0.0
      %1083 = vmatpush1.msra.mxu0 0.0
      %1084 = vmatprep.subr.mxu0 0.0
      %1085 = vmatpush1.msra.mxu0 0.0
      %1086 = vmatprep.subr.mxu0 0.0
      %1087 = vmatpush1.msra.mxu0 0.0
      %1088 = vmatprep.subr.mxu0 0.0
      %1089 = vmatpush1.msra.mxu0 0.0
      %1090 = vmatprep.subr.mxu0 0.0
      %1091 = vmatpush1.msra.mxu0 0.0
      %1092 = vmatprep.subr.mxu0 0.0
      %1093 = vmatpush1.msra.mxu0 0.0
      %1094 = vmatprep.subr.mxu0 0.0
      %1095 = vmatpush1.msra.mxu0 0.0
      %1096 = vmatprep.subr.mxu0 0.0
      %1097 = vmatpush1.msra.mxu0 0.0
      %1098 = vmatprep.subr.mxu0 0.0
      %1099 = vmatpush1.msra.mxu0 0.0
      %1100 = vmatprep.subr.mxu0 0.0
      %1101 = vmatpush1.msra.mxu0 0.0
      %1102 = vmatprep.subr.mxu0 0.0
      %1103 = vmatpush1.msra.mxu0 0.0
      %1104 = vmatprep.subr.mxu0 0.0
      %1105 = vmatpush1.msra.mxu0 0.0
      %1106 = vmatprep.subr.mxu0 0.0
      %1107 = vmatpush1.msra.mxu0 0.0
      %1108 = vmatprep.subr.mxu0 0.0
      %1109 = vmatpush1.msra.mxu0 0.0
      %1110 = vmatprep.subr.mxu0 0.0
      %1111 = vmatpush1.msra.mxu0 0.0
      %1112 = vmatprep.subr.mxu0 0.0
      %1113 = vmatpush1.msra.mxu0 0.0
      %1114 = vmatprep.subr.mxu0 0.0
      %1115 = vmatpush1.msra.mxu0 0.0
      %1116 = vmatprep.subr.mxu0 0.0
      %1117 = vmatpush1.msra.mxu0 0.0
      %1118 = vmatprep.subr.mxu0 0.0
      %1119 = vmatpush1.msra.mxu0 0.0
      %1120 = vmatprep.subr.mxu0 0.0
      %1121 = vmatpush1.msra.mxu0 0.0
      %1122 = vmatprep.subr.mxu0 0.0
      %1123 = vmatpush1.msra.mxu0 0.0
      %1124 = vmatprep.subr.mxu0 0.0
      %1125 = vmatpush1.msra.mxu0 0.0
      %1126 = vmatprep.subr.mxu0 0.0
      %1127 = vmatpush1.msra.mxu0 0.0
      %1128 = vmatprep.mubr.f32.mxu0 0.0
      %1129 = vmatmul.mubr.f32.gmra.mrb[0].mxu0 %v1059
      %v1130 = vpop.f32.mrb[0].mxu0
      %v1131 = vadd.f32 0.0, %v1130
      %v1132 = vpop.f32.mrb[0].mxu0
      %1133 = vmatprep.mubr.f32.mxu0 0.0
      %1134 = vmatmul.mubr.f32.gmra.mrb[0].mxu0 %v1062
      %v1135 = vpop.f32.mrb[0].mxu0
      %v1136 = vadd.f32 0.0, %v1135
      %v1137 = vpop.f32.mrb[0].mxu0
      %1138 = vdwg.mxu0
      %v1139 = vsel %vm1057, %v1131, 0.0
      %v1140 = vsel %vm1057, %v1136, 0.0
      %v1141 = vadd.f32 %v1139, %v1140
      %v1142 = vrot.slane %v1141, 4
      %v1143 = vadd.f32 %v1141, %v1142
      %v1144 = vrot.slane %v1143, 2
      %v1145 = vadd.f32 %v1143, %v1144
      %v1146 = vrot.slane %v1145, 1
      %v1147 = vadd.f32 %v1145, %v1146
      %v1148 = vsub.f32 %v1055, %v1147
      %v1149 = vsub.f32 %v1056, %v1147
      %v1150 = vmul.f32 %v1148, %v1148
      %v1151 = vmul.f32 %v1149, %v1149
      %v1153 = vsel %vm1057, %v1150, 0
      %v1156 = vsel %vm1057, %v1151, 0
      %1158 = vmatprep.subr.mxu0 0.0
      %1159 = vmatpush1.msra.mxu0 %v524
      %1160 = vmatprep.subr.mxu0 0.0
      %1161 = vmatpush1.msra.mxu0 %v525
      %1162 = vmatprep.subr.mxu0 0.0
      %1163 = vmatpush1.msra.mxu0 %v526
      %1164 = vmatprep.subr.mxu0 0.0
      %1165 = vmatpush1.msra.mxu0 %v527
      %1166 = vmatprep.subr.mxu0 0.0
      %1167 = vmatpush1.msra.mxu0 0.0
      %1168 = vmatprep.subr.mxu0 0.0
      %1169 = vmatpush1.msra.mxu0 0.0
      %1170 = vmatprep.subr.mxu0 0.0
      %1171 = vmatpush1.msra.mxu0 0.0
      %1172 = vmatprep.subr.mxu0 0.0
      %1173 = vmatpush1.msra.mxu0 0.0
      %1174 = vmatprep.subr.mxu0 0.0
      %1175 = vmatpush1.msra.mxu0 0.0
      %1176 = vmatprep.subr.mxu0 0.0
      %1177 = vmatpush1.msra.mxu0 0.0
      %1178 = vmatprep.subr.mxu0 0.0
      %1179 = vmatpush1.msra.mxu0 0.0
      %1180 = vmatprep.subr.mxu0 0.0
      %1181 = vmatpush1.msra.mxu0 0.0
      %1182 = vmatprep.subr.mxu0 0.0
      %1183 = vmatpush1.msra.mxu0 0.0
      %1184 = vmatprep.subr.mxu0 0.0
      %1185 = vmatpush1.msra.mxu0 0.0
      %1186 = vmatprep.subr.mxu0 0.0
      %1187 = vmatpush1.msra.mxu0 0.0
      %1188 = vmatprep.subr.mxu0 0.0
      %1189 = vmatpush1.msra.mxu0 0.0
      %1190 = vmatprep.subr.mxu0 0.0
      %1191 = vmatpush1.msra.mxu0 0.0
      %1192 = vmatprep.subr.mxu0 0.0
      %1193 = vmatpush1.msra.mxu0 0.0
      %1194 = vmatprep.subr.mxu0 0.0
      %1195 = vmatpush1.msra.mxu0 0.0
      %1196 = vmatprep.subr.mxu0 0.0
      %1197 = vmatpush1.msra.mxu0 0.0
      %1198 = vmatprep.subr.mxu0 0.0
      %1199 = vmatpush1.msra.mxu0 0.0
      %1200 = vmatprep.subr.mxu0 0.0
      %1201 = vmatpush1.msra.mxu0 0.0
      %1202 = vmatprep.subr.mxu0 0.0
      %1203 = vmatpush1.msra.mxu0 0.0
      %1204 = vmatprep.subr.mxu0 0.0
      %1205 = vmatpush1.msra.mxu0 0.0
      %1206 = vmatprep.subr.mxu0 0.0
      %1207 = vmatpush1.msra.mxu0 0.0
      %1208 = vmatprep.subr.mxu0 0.0
      %1209 = vmatpush1.msra.mxu0 0.0
      %1210 = vmatprep.subr.mxu0 0.0
      %1211 = vmatpush1.msra.mxu0 0.0
      %1212 = vmatprep.subr.mxu0 0.0
      %1213 = vmatpush1.msra.mxu0 0.0
      %1214 = vmatprep.subr.mxu0 0.0
      %1215 = vmatpush1.msra.mxu0 0.0
      %1216 = vmatprep.subr.mxu0 0.0
      %1217 = vmatpush1.msra.mxu0 0.0
      %1218 = vmatprep.subr.mxu0 0.0
      %1219 = vmatpush1.msra.mxu0 0.0
      %1220 = vmatprep.subr.mxu0 0.0
      %1221 = vmatpush1.msra.mxu0 0.0
      %1222 = vmatprep.mubr.f32.mxu0 0.0
      %1223 = vmatmul.mubr.f32.gmra.mrb[0].mxu0 %v1153
      %v1224 = vpop.f32.mrb[0].mxu0
      %v1225 = vadd.f32 0.0, %v1224
      %v1226 = vpop.f32.mrb[0].mxu0
      %1227 = vmatprep.mubr.f32.mxu0 0.0
      %1228 = vmatmul.mubr.f32.gmra.mrb[0].mxu0 %v1156
      %v1229 = vpop.f32.mrb[0].mxu0
      %v1230 = vadd.f32 0.0, %v1229
      %v1231 = vpop.f32.mrb[0].mxu0
      %1232 = vdwg.mxu0
      %v1233 = vsel %vm1057, %v1225, 0.0
      %v1234 = vsel %vm1057, %v1230, 0.0
      %v1235 = vadd.f32 %v1233, %v1234
      %v1236 = vrot.slane %v1235, 4
      %v1237 = vadd.f32 %v1235, %v1236
      %v1238 = vrot.slane %v1237, 2
      %v1239 = vadd.f32 %v1237, %v1238
      %v1240 = vrot.slane %v1239, 1
      %v1241 = vadd.f32 %v1239, %v1240
      %v1242 = vadd.f32 %v1241, 1e-05
      %v1243 = vrsqrt.pop %v1242
      %v1244 = vmul.f32 %v1148, %v1243
      %v1245 = vmul.f32 %v1149, %v1243
      %v1246 = vld [vmem:[%s4] sm:$0x1]
      %v1248 = vlaneseq
      %v1249 = vshrl.u32 %v1248, 7
      %v1250 = vsub.s32 0, %v1249
      %v1251 = vrot.slane %v1246, %v1250
      %v1253 = vmul.f32 %v1244, %v1251
      %v1254 = vmul.f32 %v1245, %v1251
      %v1255 = vld [vmem:[%s5] sm:$0x1]
      %v1257 = vlaneseq
      %v1258 = vshrl.u32 %v1257, 7
      %v1259 = vsub.s32 0, %v1258
      %v1260 = vrot.slane %v1255, %v1259
      %v1262 = vadd.f32 %v1253, %v1260
      %v1263 = vadd.f32 %v1254, %v1260
      %v1264 = vmax.f32 %v1262, 0.0
      %v1265 = vmax.f32 %v1263, 0.0
      %vm1266 = vcmp.ne.f32.partialorder %v1262, %v1262
      %vm1267 = vcmp.ne.f32.partialorder %v1263, %v1263
      %v1268 = vadd.f32 %v1262, 0.0
      %v1269 = vadd.f32 %v1263, 0.0
      %v1270 = vand.u32 2147483647, %v1262
      %v1271 = vand.u32 2147483647, %v1263
      %v1272 = vsub.f32 0.0, %v1270
      %v1273 = vsub.f32 0.0, %v1271
      %v1274 = vmul.f32 %v1272, 1.442695
      %v1275 = vpow.pop %v1274
      %v1276 = vmul.f32 %v1273, 1.442695
      %v1277 = vpow.pop %v1276
      %v1278 = vadd.f32 %v1275, 1.0
      %v1279 = vlog2.pop %v1278
      %v1280 = vmul.f32 %v1279, 0.6931472
      %v1281 = vmul.f32 -0.5, %v1275
      %v1282 = vadd.f32 %v1281, 1.0
      %v1283 = vmul.f32 %v1282, %v1275
      %v1284 = vand.u32 2147483647, %v1275
      %vm1285 = vcmp.lt.f32.partialorder %v1284, 0.0004427343
      %v1286 = vsel %vm1285, %v1283, %v1280
      %v1287 = vadd.f32 %v1277, 1.0
      %v1288 = vlog2.pop %v1287
      %v1289 = vmul.f32 %v1288, 0.6931472
      %v1290 = vmul.f32 -0.5, %v1277
      %v1291 = vadd.f32 %v1290, 1.0
      %v1292 = vmul.f32 %v1291, %v1277
      %v1293 = vand.u32 2147483647, %v1277
      %vm1294 = vcmp.lt.f32.partialorder %v1293, 0.0004427343
      %v1295 = vsel %vm1294, %v1292, %v1289
      %v1296 = vadd.f32 %v1264, %v1286
      %v1297 = vadd.f32 %v1265, %v1295
      %v1298 = vsel %vm1266, %v1268, %v1296
      %v1299 = vsel %vm1267, %v1269, %v1297
      %v1300 = vtanh.pop %v1298
      %v1301 = vtanh.pop %v1299
      %v1302 = vmul.f32 %v1262, %v1300
      %v1303 = vmul.f32 %v1263, %v1301
      %v1304 = vld [vmem:[%s514] sm:$0x1]
      %v1306 = vlaneseq
      %v1307 = vshrl.u32 %v1306, 7
      %v1308 = vsub.s32 0, %v1307
      %v1309 = vrot.slane %v1304, %v1308
      %v1311 = vmul.f32 %v1309, %v1302
      %v1312 = vmul.f32 %v1309, %v1303
      %v1313 = vld [vmem:[%s517] sm:$0x1]
      %v1315 = vlaneseq
      %v1316 = vshrl.u32 %v1315, 7
      %v1317 = vsub.s32 0, %v1316
      %v1318 = vrot.slane %v1313, %v1317
      %v1320 = vadd.f32 %v1311, %v1318
      %v1321 = vadd.f32 %v1312, %v1318
      %v1322 = vpack.c.bf16 %v1321, %v1320
      %1323 = vmatprep.subr.bf16.mxu0 0
      %1324 = vmatpush1.bf16.msra.mxu0 %v1322
      %1325 = vmatprep.subr.bf16.mxu0 0
      %1326 = vmatpush1.bf16.msra.mxu0 0
      %1327 = vmatprep.subr.bf16.mxu0 0
      %1328 = vmatpush1.bf16.msra.mxu0 0
      %1329 = vmatprep.subr.bf16.mxu0 0
      %1330 = vmatpush1.bf16.msra.mxu0 0
      %1331 = vmatprep.subr.bf16.mxu0 0
      %1332 = vmatpush1.bf16.msra.mxu0 0
      %1333 = vmatprep.subr.bf16.mxu0 0
      %1334 = vmatpush1.bf16.msra.mxu0 0
      %1335 = vmatprep.subr.bf16.mxu0 0
      %1336 = vmatpush1.bf16.msra.mxu0 0
      %1337 = vmatprep.subr.bf16.mxu0 0
      %1338 = vmatpush1.bf16.msra.mxu0 0
      %1339 = vmatprep.subr.bf16.mxu0 0
      %1340 = vmatpush1.bf16.msra.mxu0 0
      %1341 = vmatprep.subr.bf16.mxu0 0
      %1342 = vmatpush1.bf16.msra.mxu0 0
      %1343 = vmatprep.subr.bf16.mxu0 0
      %1344 = vmatpush1.bf16.msra.mxu0 0
      %1345 = vmatprep.subr.bf16.mxu0 0
      %1346 = vmatpush1.bf16.msra.mxu0 0
      %1347 = vmatprep.subr.bf16.mxu0 0
      %1348 = vmatpush1.bf16.msra.mxu0 0
      %1349 = vmatprep.subr.bf16.mxu0 0
      %1350 = vmatpush1.bf16.msra.mxu0 0
      %1351 = vmatprep.subr.bf16.mxu0 0
      %1352 = vmatpush1.bf16.msra.mxu0 0
      %1353 = vmatprep.subr.bf16.mxu0 0
      %1354 = vmatpush1.bf16.msra.mxu0 0
      %1355 = vmatprep.mubr.bf16.mxu0 0
      %1356 = vmatmul.mubr.bf16.gmra.mrb[0].mxu0 %v540
      %v1357 = vpop.f32.mrb[0].mxu0
      %v1358 = vadd.f32 0.0, %v1357
      %v1359 = vpop.f32.mrb[0].mxu0
      %v1360 = vpop.f32.mrb[0].mxu0
      %v1361 = vadd.f32 0.0, %v1360
      %v1362 = vpop.f32.mrb[0].mxu0
      %1363 = vdwg.mxu0
      %v1364 = vpack.c.bf16 %v1361, %v1358
      %v1365 = vld [vmem:[%s8] sm:$0xf]
      %v1366 = vld [vmem:[%s8 + $0x4] sm:$0xf]
      %v1367 = vld [vmem:[%s8 + $0x8] sm:$0xf]
      %v1368 = vld [vmem:[%s8 + $0xc] sm:$0xf]
      %1369 = vmatprep.subr.bf16.mxu0 0
      %1370 = vmatpush1.bf16.msra.mxu0 %v1322
      %1371 = vmatprep.subr.bf16.mxu0 0
      %1372 = vmatpush1.bf16.msra.mxu0 0
      %1373 = vmatprep.subr.bf16.mxu0 0
      %1374 = vmatpush1.bf16.msra.mxu0 0
      %1375 = vmatprep.subr.bf16.mxu0 0
      %1376 = vmatpush1.bf16.msra.mxu0 0
      %1377 = vmatprep.subr.bf16.mxu0 0
      %1378 = vmatpush1.bf16.msra.mxu0 0
      %1379 = vmatprep.subr.bf16.mxu0 0
      %1380 = vmatpush1.bf16.msra.mxu0 0
      %1381 = vmatprep.subr.bf16.mxu0 0
      %1382 = vmatpush1.bf16.msra.mxu0 0
      %1383 = vmatprep.subr.bf16.mxu0 0
      %1384 = vmatpush1.bf16.msra.mxu0 0
      %1385 = vmatprep.subr.bf16.mxu0 0
      %1386 = vmatpush1.bf16.msra.mxu0 0
      %1387 = vmatprep.subr.bf16.mxu0 0
      %1388 = vmatpush1.bf16.msra.mxu0 0
      %1389 = vmatprep.subr.bf16.mxu0 0
      %1390 = vmatpush1.bf16.msra.mxu0 0
      %1391 = vmatprep.subr.bf16.mxu0 0
      %1392 = vmatpush1.bf16.msra.mxu0 0
      %1393 = vmatprep.subr.bf16.mxu0 0
      %1394 = vmatpush1.bf16.msra.mxu0 0
      %1395 = vmatprep.subr.bf16.mxu0 0
      %1396 = vmatpush1.bf16.msra.mxu0 0
      %1397 = vmatprep.subr.bf16.mxu0 0
      %1398 = vmatpush1.bf16.msra.mxu0 0
      %1399 = vmatprep.subr.bf16.mxu0 0
      %1400 = vmatpush1.bf16.msra.mxu0 0
      %1401 = vmatprep.mubr.bf16.mxu0 0
      %1402 = vmatmul.mubr.bf16.gmra.mrb[0].mxu0 %v594
      %v1403 = vpop.f32.mrb[0].mxu0
      %v1404 = vadd.f32 0.0, %v1403
      %v1405 = vpop.f32.mrb[0].mxu0
      %v1406 = vpop.f32.mrb[0].mxu0
      %v1407 = vadd.f32 0.0, %v1406
      %v1408 = vpop.f32.mrb[0].mxu0
      %1409 = vdwg.mxu0
      %v1410 = vpack.c.bf16 %v1407, %v1404
      %s1411 = scalar_lea.vmem %s8, 16
      %v1412 = vld [vmem:[%s1411] sm:$0xf]
      %v1413 = vld [vmem:[%s1411 + $0x4] sm:$0xf]
      %v1414 = vld [vmem:[%s1411 + $0x8] sm:$0xf]
      %v1415 = vld [vmem:[%s1411 + $0xc] sm:$0xf]
      %v1420 = vunpack.c.l.b16 %v1412
      %v1421 = vunpack.c.l.b16 %v1413
      %v1422 = vunpack.c.l.b16 %v1414
      %v1423 = vunpack.c.l.b16 %v1415
      %v1424 = vpack.c.b16 %v1421, %v1420
      %v1425 = vpack.c.b16 %v1423, %v1422
      %v1429 = vsel %vm1057, %v1410, 0
      %1431 = vmatprep.subr.bf16.mxu0 0
      %1432 = vmatpush1.bf16.msra.mxu0 %v1424
      %1433 = vmatprep.subr.bf16.mxu0 0
      %1434 = vmatpush1.bf16.msra.mxu0 %v1425
      %1435 = vmatprep.subr.bf16.mxu0 0
      %1436 = vmatpush1.bf16.msra.mxu0 0
      %1437 = vmatprep.subr.bf16.mxu0 0
      %1438 = vmatpush1.bf16.msra.mxu0 0
      %1439 = vmatprep.subr.bf16.mxu0 0
      %1440 = vmatpush1.bf16.msra.mxu0 0
      %1441 = vmatprep.subr.bf16.mxu0 0
      %1442 = vmatpush1.bf16.msra.mxu0 0
      %1443 = vmatprep.subr.bf16.mxu0 0
      %1444 = vmatpush1.bf16.msra.mxu0 0
      %1445 = vmatprep.subr.bf16.mxu0 0
      %1446 = vmatpush1.bf16.msra.mxu0 0
      %1447 = vmatprep.subr.bf16.mxu0 0
      %1448 = vmatpush1.bf16.msra.mxu0 0
      %1449 = vmatprep.subr.bf16.mxu0 0
      %1450 = vmatpush1.bf16.msra.mxu0 0
      %1451 = vmatprep.subr.bf16.mxu0 0
      %1452 = vmatpush1.bf16.msra.mxu0 0
      %1453 = vmatprep.subr.bf16.mxu0 0
      %1454 = vmatpush1.bf16.msra.mxu0 0
      %1455 = vmatprep.subr.bf16.mxu0 0
      %1456 = vmatpush1.bf16.msra.mxu0 0
      %1457 = vmatprep.subr.bf16.mxu0 0
      %1458 = vmatpush1.bf16.msra.mxu0 0
      %1459 = vmatprep.subr.bf16.mxu0 0
      %1460 = vmatpush1.bf16.msra.mxu0 0
      %1461 = vmatprep.subr.bf16.mxu0 0
      %1462 = vmatpush1.bf16.msra.mxu0 0
      %1463 = vmatprep.mubr.bf16.mxu0 0
      %1464 = vmatmul.mubr.bf16.gmra.mrb[0].mxu0 %v1429
      %v1465 = vpop.f32.mrb[0].mxu0
      %v1466 = vadd.f32 0.0, %v1465
      %v1467 = vpop.f32.mrb[0].mxu0
      %v1468 = vpop.f32.mrb[0].mxu0
      %v1469 = vadd.f32 0.0, %v1468
      %v1470 = vpop.f32.mrb[0].mxu0
      %1471 = vdwg.mxu0
      %v1476 = vunpack.c.l.b16 %v1365
      %v1477 = vunpack.c.l.b16 %v1366
      %v1478 = vunpack.c.l.b16 %v1367
      %v1479 = vunpack.c.l.b16 %v1368
      %v1480 = vpack.c.b16 %v1477, %v1476
      %v1481 = vpack.c.b16 %v1479, %v1478
      %v1485 = vsel %vm1057, %v1364, 0
      %1487 = vmatprep.subr.bf16.mxu0 0
      %1488 = vmatpush1.bf16.msra.mxu0 %v1480
      %1489 = vmatprep.subr.bf16.mxu0 0
      %1490 = vmatpush1.bf16.msra.mxu0 %v1481
      %1491 = vmatprep.subr.bf16.mxu0 0
      %1492 = vmatpush1.bf16.msra.mxu0 0
      %1493 = vmatprep.subr.bf16.mxu0 0
      %1494 = vmatpush1.bf16.msra.mxu0 0
      %1495 = vmatprep.subr.bf16.mxu0 0
      %1496 = vmatpush1.bf16.msra.mxu0 0
      %1497 = vmatprep.subr.bf16.mxu0 0
      %1498 = vmatpush1.bf16.msra.mxu0 0
      %1499 = vmatprep.subr.bf16.mxu0 0
      %1500 = vmatpush1.bf16.msra.mxu0 0
      %1501 = vmatprep.subr.bf16.mxu0 0
      %1502 = vmatpush1.bf16.msra.mxu0 0
      %1503 = vmatprep.subr.bf16.mxu0 0
      %1504 = vmatpush1.bf16.msra.mxu0 0
      %1505 = vmatprep.subr.bf16.mxu0 0
      %1506 = vmatpush1.bf16.msra.mxu0 0
      %1507 = vmatprep.subr.bf16.mxu0 0
      %1508 = vmatpush1.bf16.msra.mxu0 0
      %1509 = vmatprep.subr.bf16.mxu0 0
      %1510 = vmatpush1.bf16.msra.mxu0 0
      %1511 = vmatprep.subr.bf16.mxu0 0
      %1512 = vmatpush1.bf16.msra.mxu0 0
      %1513 = vmatprep.subr.bf16.mxu0 0
      %1514 = vmatpush1.bf16.msra.mxu0 0
      %1515 = vmatprep.subr.bf16.mxu0 0
      %1516 = vmatpush1.bf16.msra.mxu0 0
      %1517 = vmatprep.subr.bf16.mxu0 0
      %1518 = vmatpush1.bf16.msra.mxu0 0
      %1519 = vmatprep.mubr.bf16.mxu0 0
      %1520 = vmatmul.mubr.bf16.gmra.mrb[0].mxu0 %v1485
      %v1521 = vpop.f32.mrb[0].mxu0
      %v1522 = vadd.f32 %v1466, %v1521
      %v1523 = vpop.f32.mrb[0].mxu0
      %v1524 = vpop.f32.mrb[0].mxu0
      %v1525 = vadd.f32 %v1469, %v1524
      %v1526 = vpop.f32.mrb[0].mxu0
      %1527 = vdwg.mxu0
      %1528 = vmatprep.subr.bf16.mxu0 0
      %1529 = vmatpush1.bf16.msra.mxu0 %v1322
      %1530 = vmatprep.subr.bf16.mxu0 0
      %1531 = vmatpush1.bf16.msra.mxu0 0
      %1532 = vmatprep.subr.bf16.mxu0 0
      %1533 = vmatpush1.bf16.msra.mxu0 0
      %1534 = vmatprep.subr.bf16.mxu0 0
      %1535 = vmatpush1.bf16.msra.mxu0 0
      %1536 = vmatprep.subr.bf16.mxu0 0
      %1537 = vmatpush1.bf16.msra.mxu0 0
      %1538 = vmatprep.subr.bf16.mxu0 0
      %1539 = vmatpush1.bf16.msra.mxu0 0
      %1540 = vmatprep.subr.bf16.mxu0 0
      %1541 = vmatpush1.bf16.msra.mxu0 0
      %1542 = vmatprep.subr.bf16.mxu0 0
      %1543 = vmatpush1.bf16.msra.mxu0 0
      %1544 = vmatprep.subr.bf16.mxu0 0
      %1545 = vmatpush1.bf16.msra.mxu0 0
      %1546 = vmatprep.subr.bf16.mxu0 0
      %1547 = vmatpush1.bf16.msra.mxu0 0
      %1548 = vmatprep.subr.bf16.mxu0 0
      %1549 = vmatpush1.bf16.msra.mxu0 0
      %1550 = vmatprep.subr.bf16.mxu0 0
      %1551 = vmatpush1.bf16.msra.mxu0 0
      %1552 = vmatprep.subr.bf16.mxu0 0
      %1553 = vmatpush1.bf16.msra.mxu0 0
      %1554 = vmatprep.subr.bf16.mxu0 0
      %1555 = vmatpush1.bf16.msra.mxu0 0
      %1556 = vmatprep.subr.bf16.mxu0 0
      %1557 = vmatpush1.bf16.msra.mxu0 0
      %1558 = vmatprep.subr.bf16.mxu0 0
      %1559 = vmatpush1.bf16.msra.mxu0 0
      %1560 = vmatprep.mubr.bf16.mxu0 0
      %1561 = vmatmul.mubr.bf16.gmra.mrb[0].mxu0 %v745
      %v1562 = vpop.f32.mrb[0].mxu0
      %v1563 = vadd.f32 0.0, %v1562
      %v1564 = vpop.f32.mrb[0].mxu0
      %v1565 = vpop.f32.mrb[0].mxu0
      %v1566 = vadd.f32 0.0, %v1565
      %v1567 = vpop.f32.mrb[0].mxu0
      %1568 = vdwg.mxu0
      %v1569 = vpack.c.bf16 %v1566, %v1563
      %s1570 = scalar_lea.vmem %s8, 32
      %v1571 = vld [vmem:[%s1570] sm:$0xf]
      %v1572 = vld [vmem:[%s1570 + $0x4] sm:$0xf]
      %v1573 = vld [vmem:[%s1570 + $0x8] sm:$0xf]
      %v1574 = vld [vmem:[%s1570 + $0xc] sm:$0xf]
      %v1579 = vunpack.c.l.b16 %v1571
      %v1580 = vunpack.c.l.b16 %v1572
      %v1581 = vunpack.c.l.b16 %v1573
      %v1582 = vunpack.c.l.b16 %v1574
      %v1583 = vpack.c.b16 %v1580, %v1579
      %v1584 = vpack.c.b16 %v1582, %v1581
      %v1588 = vsel %vm1057, %v1569, 0
      %1590 = vmatprep.subr.bf16.mxu0 0
      %1591 = vmatpush1.bf16.msra.mxu0 %v1583
      %1592 = vmatprep.subr.bf16.mxu0 0
      %1593 = vmatpush1.bf16.msra.mxu0 %v1584
      %1594 = vmatprep.subr.bf16.mxu0 0
      %1595 = vmatpush1.bf16.msra.mxu0 0
      %1596 = vmatprep.subr.bf16.mxu0 0
      %1597 = vmatpush1.bf16.msra.mxu0 0
      %1598 = vmatprep.subr.bf16.mxu0 0
      %1599 = vmatpush1.bf16.msra.mxu0 0
      %1600 = vmatprep.subr.bf16.mxu0 0
      %1601 = vmatpush1.bf16.msra.mxu0 0
      %1602 = vmatprep.subr.bf16.mxu0 0
      %1603 = vmatpush1.bf16.msra.mxu0 0
      %1604 = vmatprep.subr.bf16.mxu0 0
      %1605 = vmatpush1.bf16.msra.mxu0 0
      %1606 = vmatprep.subr.bf16.mxu0 0
      %1607 = vmatpush1.bf16.msra.mxu0 0
      %1608 = vmatprep.subr.bf16.mxu0 0
      %1609 = vmatpush1.bf16.msra.mxu0 0
      %1610 = vmatprep.subr.bf16.mxu0 0
      %1611 = vmatpush1.bf16.msra.mxu0 0
      %1612 = vmatprep.subr.bf16.mxu0 0
      %1613 = vmatpush1.bf16.msra.mxu0 0
      %1614 = vmatprep.subr.bf16.mxu0 0
      %1615 = vmatpush1.bf16.msra.mxu0 0
      %1616 = vmatprep.subr.bf16.mxu0 0
      %1617 = vmatpush1.bf16.msra.mxu0 0
      %1618 = vmatprep.subr.bf16.mxu0 0
      %1619 = vmatpush1.bf16.msra.mxu0 0
      %1620 = vmatprep.subr.bf16.mxu0 0
      %1621 = vmatpush1.bf16.msra.mxu0 0
      %1622 = vmatprep.mubr.bf16.mxu0 0
      %1623 = vmatmul.mubr.bf16.gmra.mrb[0].mxu0 %v1588
      %v1624 = vpop.f32.mrb[0].mxu0
      %v1625 = vadd.f32 0.0, %v1624
      %v1626 = vpop.f32.mrb[0].mxu0
      %v1627 = vpop.f32.mrb[0].mxu0
      %v1628 = vadd.f32 0.0, %v1627
      %v1629 = vpop.f32.mrb[0].mxu0
      %1630 = vdwg.mxu0
      %v1631 = vadd.f32 %v1522, %v1625
      %v1632 = vadd.f32 %v1525, %v1628
      %1633 = vmatprep.subr.bf16.mxu0 0
      %1634 = vmatpush1.bf16.msra.mxu0 %v1322
      %1635 = vmatprep.subr.bf16.mxu0 0
      %1636 = vmatpush1.bf16.msra.mxu0 0
      %1637 = vmatprep.subr.bf16.mxu0 0
      %1638 = vmatpush1.bf16.msra.mxu0 0
      %1639 = vmatprep.subr.bf16.mxu0 0
      %1640 = vmatpush1.bf16.msra.mxu0 0
      %1641 = vmatprep.subr.bf16.mxu0 0
      %1642 = vmatpush1.bf16.msra.mxu0 0
      %1643 = vmatprep.subr.bf16.mxu0 0
      %1644 = vmatpush1.bf16.msra.mxu0 0
      %1645 = vmatprep.subr.bf16.mxu0 0
      %1646 = vmatpush1.bf16.msra.mxu0 0
      %1647 = vmatprep.subr.bf16.mxu0 0
      %1648 = vmatpush1.bf16.msra.mxu0 0
      %1649 = vmatprep.subr.bf16.mxu0 0
      %1650 = vmatpush1.bf16.msra.mxu0 0
      %1651 = vmatprep.subr.bf16.mxu0 0
      %1652 = vmatpush1.bf16.msra.mxu0 0
      %1653 = vmatprep.subr.bf16.mxu0 0
      %1654 = vmatpush1.bf16.msra.mxu0 0
      %1655 = vmatprep.subr.bf16.mxu0 0
      %1656 = vmatpush1.bf16.msra.mxu0 0
      %1657 = vmatprep.subr.bf16.mxu0 0
      %1658 = vmatpush1.bf16.msra.mxu0 0
      %1659 = vmatprep.subr.bf16.mxu0 0
      %1660 = vmatpush1.bf16.msra.mxu0 0
      %1661 = vmatprep.subr.bf16.mxu0 0
      %1662 = vmatpush1.bf16.msra.mxu0 0
      %1663 = vmatprep.subr.bf16.mxu0 0
      %1664 = vmatpush1.bf16.msra.mxu0 0
      %1665 = vmatprep.mubr.bf16.mxu0 0
      %1666 = vmatmul.mubr.bf16.gmra.mrb[0].mxu0 %v849
      %v1667 = vpop.f32.mrb[0].mxu0
      %v1668 = vadd.f32 0.0, %v1667
      %v1669 = vpop.f32.mrb[0].mxu0
      %v1670 = vpop.f32.mrb[0].mxu0
      %v1671 = vadd.f32 0.0, %v1670
      %v1672 = vpop.f32.mrb[0].mxu0
      %1673 = vdwg.mxu0
      %v1674 = vpack.c.bf16 %v1671, %v1668
      %s1675 = scalar_lea.vmem %s8, 48
      %v1676 = vld [vmem:[%s1675] sm:$0xf]
      %v1677 = vld [vmem:[%s1675 + $0x4] sm:$0xf]
      %v1678 = vld [vmem:[%s1675 + $0x8] sm:$0xf]
      %v1679 = vld [vmem:[%s1675 + $0xc] sm:$0xf]
      %v1684 = vunpack.c.l.b16 %v1676
      %v1685 = vunpack.c.l.b16 %v1677
      %v1686 = vunpack.c.l.b16 %v1678
      %v1687 = vunpack.c.l.b16 %v1679
      %v1688 = vpack.c.b16 %v1685, %v1684
      %v1689 = vpack.c.b16 %v1687, %v1686
      %v1693 = vsel %vm1057, %v1674, 0
      %1695 = vmatprep.subr.bf16.mxu0 0
      %1696 = vmatpush1.bf16.msra.mxu0 %v1688
      %1697 = vmatprep.subr.bf16.mxu0 0
      %1698 = vmatpush1.bf16.msra.mxu0 %v1689
      %1699 = vmatprep.subr.bf16.mxu0 0
      %1700 = vmatpush1.bf16.msra.mxu0 0
      %1701 = vmatprep.subr.bf16.mxu0 0
      %1702 = vmatpush1.bf16.msra.mxu0 0
      %1703 = vmatprep.subr.bf16.mxu0 0
      %1704 = vmatpush1.bf16.msra.mxu0 0
      %1705 = vmatprep.subr.bf16.mxu0 0
      %1706 = vmatpush1.bf16.msra.mxu0 0
      %1707 = vmatprep.subr.bf16.mxu0 0
      %1708 = vmatpush1.bf16.msra.mxu0 0
      %1709 = vmatprep.subr.bf16.mxu0 0
      %1710 = vmatpush1.bf16.msra.mxu0 0
      %1711 = vmatprep.subr.bf16.mxu0 0
      %1712 = vmatpush1.bf16.msra.mxu0 0
      %1713 = vmatprep.subr.bf16.mxu0 0
      %1714 = vmatpush1.bf16.msra.mxu0 0
      %1715 = vmatprep.subr.bf16.mxu0 0
      %1716 = vmatpush1.bf16.msra.mxu0 0
      %1717 = vmatprep.subr.bf16.mxu0 0
      %1718 = vmatpush1.bf16.msra.mxu0 0
      %1719 = vmatprep.subr.bf16.mxu0 0
      %1720 = vmatpush1.bf16.msra.mxu0 0
      %1721 = vmatprep.subr.bf16.mxu0 0
      %1722 = vmatpush1.bf16.msra.mxu0 0
      %1723 = vmatprep.subr.bf16.mxu0 0
      %1724 = vmatpush1.bf16.msra.mxu0 0
      %1725 = vmatprep.subr.bf16.mxu0 0
      %1726 = vmatpush1.bf16.msra.mxu0 0
      %1727 = vmatprep.mubr.bf16.mxu0 0
      %1728 = vmatmul.mubr.bf16.gmra.mrb[0].mxu0 %v1693
      %v1729 = vpop.f32.mrb[0].mxu0
      %v1730 = vadd.f32 0.0, %v1729
      %v1731 = vpop.f32.mrb[0].mxu0
      %v1732 = vpop.f32.mrb[0].mxu0
      %v1733 = vadd.f32 0.0, %v1732
      %v1734 = vpop.f32.mrb[0].mxu0
      %1735 = vdwg.mxu0
      %v1736 = vadd.f32 %v1631, %v1730
      %v1737 = vadd.f32 %v1632, %v1733
      %1738 = vmatprep.subr.bf16.mxu0 0
      %1739 = vmatpush1.bf16.msra.mxu0 %v1322
      %1740 = vmatprep.subr.bf16.mxu0 0
      %1741 = vmatpush1.bf16.msra.mxu0 0
      %1742 = vmatprep.subr.bf16.mxu0 0
      %1743 = vmatpush1.bf16.msra.mxu0 0
      %1744 = vmatprep.subr.bf16.mxu0 0
      %1745 = vmatpush1.bf16.msra.mxu0 0
      %1746 = vmatprep.subr.bf16.mxu0 0
      %1747 = vmatpush1.bf16.msra.mxu0 0
      %1748 = vmatprep.subr.bf16.mxu0 0
      %1749 = vmatpush1.bf16.msra.mxu0 0
      %1750 = vmatprep.subr.bf16.mxu0 0
      %1751 = vmatpush1.bf16.msra.mxu0 0
      %1752 = vmatprep.subr.bf16.mxu0 0
      %1753 = vmatpush1.bf16.msra.mxu0 0
      %1754 = vmatprep.subr.bf16.mxu0 0
      %1755 = vmatpush1.bf16.msra.mxu0 0
      %1756 = vmatprep.subr.bf16.mxu0 0
      %1757 = vmatpush1.bf16.msra.mxu0 0
      %1758 = vmatprep.subr.bf16.mxu0 0
      %1759 = vmatpush1.bf16.msra.mxu0 0
      %1760 = vmatprep.subr.bf16.mxu0 0
      %1761 = vmatpush1.bf16.msra.mxu0 0
      %1762 = vmatprep.subr.bf16.mxu0 0
      %1763 = vmatpush1.bf16.msra.mxu0 0
      %1764 = vmatprep.subr.bf16.mxu0 0
      %1765 = vmatpush1.bf16.msra.mxu0 0
      %1766 = vmatprep.subr.bf16.mxu0 0
      %1767 = vmatpush1.bf16.msra.mxu0 0
      %1768 = vmatprep.subr.bf16.mxu0 0
      %1769 = vmatpush1.bf16.msra.mxu0 0
      %1770 = vmatprep.mubr.bf16.mxu0 0
      %1771 = vmatmul.mubr.bf16.gmra.mrb[0].mxu0 %v953
      %v1772 = vpop.f32.mrb[0].mxu0
      %v1773 = vadd.f32 0.0, %v1772
      %v1774 = vpop.f32.mrb[0].mxu0
      %v1775 = vpop.f32.mrb[0].mxu0
      %v1776 = vadd.f32 0.0, %v1775
      %v1777 = vpop.f32.mrb[0].mxu0
      %1778 = vdwg.mxu0
      %v1779 = vpack.c.bf16 %v1776, %v1773
      %s1780 = scalar_lea.vmem %s8, 64
      %v1781 = vld [vmem:[%s1780] sm:$0xf]
      %v1782 = vld [vmem:[%s1780 + $0x4] sm:$0xf]
      %v1783 = vld [vmem:[%s1780 + $0x8] sm:$0xf]
      %v1784 = vld [vmem:[%s1780 + $0xc] sm:$0xf]
      %v1789 = vunpack.c.l.b16 %v1781
      %v1790 = vunpack.c.l.b16 %v1782
      %v1791 = vunpack.c.l.b16 %v1783
      %v1792 = vunpack.c.l.b16 %v1784
      %v1793 = vpack.c.b16 %v1790, %v1789
      %v1794 = vpack.c.b16 %v1792, %v1791
      %v1798 = vsel %vm1057, %v1779, 0
      %1800 = vmatprep.subr.bf16.mxu0 0
      %1801 = vmatpush1.bf16.msra.mxu0 %v1793
      %1802 = vmatprep.subr.bf16.mxu0 0
      %1803 = vmatpush1.bf16.msra.mxu0 %v1794
      %1804 = vmatprep.subr.bf16.mxu0 0
      %1805 = vmatpush1.bf16.msra.mxu0 0
      %1806 = vmatprep.subr.bf16.mxu0 0
      %1807 = vmatpush1.bf16.msra.mxu0 0
      %1808 = vmatprep.subr.bf16.mxu0 0
      %1809 = vmatpush1.bf16.msra.mxu0 0
      %1810 = vmatprep.subr.bf16.mxu0 0
      %1811 = vmatpush1.bf16.msra.mxu0 0
      %1812 = vmatprep.subr.bf16.mxu0 0
      %1813 = vmatpush1.bf16.msra.mxu0 0
      %1814 = vmatprep.subr.bf16.mxu0 0
      %1815 = vmatpush1.bf16.msra.mxu0 0
      %1816 = vmatprep.subr.bf16.mxu0 0
      %1817 = vmatpush1.bf16.msra.mxu0 0
      %1818 = vmatprep.subr.bf16.mxu0 0
      %1819 = vmatpush1.bf16.msra.mxu0 0
      %1820 = vmatprep.subr.bf16.mxu0 0
      %1821 = vmatpush1.bf16.msra.mxu0 0
      %1822 = vmatprep.subr.bf16.mxu0 0
      %1823 = vmatpush1.bf16.msra.mxu0 0
      %1824 = vmatprep.subr.bf16.mxu0 0
      %1825 = vmatpush1.bf16.msra.mxu0 0
      %1826 = vmatprep.subr.bf16.mxu0 0
      %1827 = vmatpush1.bf16.msra.mxu0 0
      %1828 = vmatprep.subr.bf16.mxu0 0
      %1829 = vmatpush1.bf16.msra.mxu0 0
      %1830 = vmatprep.subr.bf16.mxu0 0
      %1831 = vmatpush1.bf16.msra.mxu0 0
      %1832 = vmatprep.mubr.bf16.mxu0 0
      %1833 = vmatmul.mubr.bf16.gmra.mrb[0].mxu0 %v1798
      %v1834 = vpop.f32.mrb[0].mxu0
      %v1835 = vadd.f32 0.0, %v1834
      %v1836 = vpop.f32.mrb[0].mxu0
      %v1837 = vpop.f32.mrb[0].mxu0
      %v1838 = vadd.f32 0.0, %v1837
      %v1839 = vpop.f32.mrb[0].mxu0
      %1840 = vdwg.mxu0
      %v1841 = vadd.f32 %v1736, %v1835
      %v1842 = vadd.f32 %v1737, %v1838
      %v1843 = vld [vmem:[%s9] sm:$0x1]
      %v1845 = vlaneseq
      %v1846 = vshrl.u32 %v1845, 7
      %v1847 = vsub.s32 0, %v1846
      %v1848 = vrot.slane %v1843, %v1847
      %v1850 = vadd.f32 %v1841, %v1848
      %v1851 = vadd.f32 %v1842, %v1848
      %v1853 = vsel %vm1057, %v1850, 0
      %v1856 = vsel %vm1057, %v1851, 0
      %1858 = vmatprep.subr.mxu0 0.0
      %1859 = vmatpush1.msra.mxu0 %v524
      %1860 = vmatprep.subr.mxu0 0.0
      %1861 = vmatpush1.msra.mxu0 %v525
      %1862 = vmatprep.subr.mxu0 0.0
      %1863 = vmatpush1.msra.mxu0 %v526
      %1864 = vmatprep.subr.mxu0 0.0
      %1865 = vmatpush1.msra.mxu0 %v527
      %1866 = vmatprep.subr.mxu0 0.0
      %1867 = vmatpush1.msra.mxu0 0.0
      %1868 = vmatprep.subr.mxu0 0.0
      %1869 = vmatpush1.msra.mxu0 0.0
      %1870 = vmatprep.subr.mxu0 0.0
      %1871 = vmatpush1.msra.mxu0 0.0
      %1872 = vmatprep.subr.mxu0 0.0
      %1873 = vmatpush1.msra.mxu0 0.0
      %1874 = vmatprep.subr.mxu0 0.0
      %1875 = vmatpush1.msra.mxu0 0.0
      %1876 = vmatprep.subr.mxu0 0.0
      %1877 = vmatpush1.msra.mxu0 0.0
      %1878 = vmatprep.subr.mxu0 0.0
      %1879 = vmatpush1.msra.mxu0 0.0
      %1880 = vmatprep.subr.mxu0 0.0
      %1881 = vmatpush1.msra.mxu0 0.0
      %1882 = vmatprep.subr.mxu0 0.0
      %1883 = vmatpush1.msra.mxu0 0.0
      %1884 = vmatprep.subr.mxu0 0.0
      %1885 = vmatpush1.msra.mxu0 0.0
      %1886 = vmatprep.subr.mxu0 0.0
      %1887 = vmatpush1.msra.mxu0 0.0
      %1888 = vmatprep.subr.mxu0 0.0
      %1889 = vmatpush1.msra.mxu0 0.0
      %1890 = vmatprep.subr.mxu0 0.0
      %1891 = vmatpush1.msra.mxu0 0.0
      %1892 = vmatprep.subr.mxu0 0.0
      %1893 = vmatpush1.msra.mxu0 0.0
      %1894 = vmatprep.subr.mxu0 0.0
      %1895 = vmatpush1.msra.mxu0 0.0
      %1896 = vmatprep.subr.mxu0 0.0
      %1897 = vmatpush1.msra.mxu0 0.0
      %1898 = vmatprep.subr.mxu0 0.0
      %1899 = vmatpush1.msra.mxu0 0.0
      %1900 = vmatprep.subr.mxu0 0.0
      %1901 = vmatpush1.msra.mxu0 0.0
      %1902 = vmatprep.subr.mxu0 0.0
      %1903 = vmatpush1.msra.mxu0 0.0
      %1904 = vmatprep.subr.mxu0 0.0
      %1905 = vmatpush1.msra.mxu0 0.0
      %1906 = vmatprep.subr.mxu0 0.0
      %1907 = vmatpush1.msra.mxu0 0.0
      %1908 = vmatprep.subr.mxu0 0.0
      %1909 = vmatpush1.msra.mxu0 0.0
      %1910 = vmatprep.subr.mxu0 0.0
      %1911 = vmatpush1.msra.mxu0 0.0
      %1912 = vmatprep.subr.mxu0 0.0
      %1913 = vmatpush1.msra.mxu0 0.0
      %1914 = vmatprep.subr.mxu0 0.0
      %1915 = vmatpush1.msra.mxu0 0.0
      %1916 = vmatprep.subr.mxu0 0.0
      %1917 = vmatpush1.msra.mxu0 0.0
      %1918 = vmatprep.subr.mxu0 0.0
      %1919 = vmatpush1.msra.mxu0 0.0
      %1920 = vmatprep.subr.mxu0 0.0
      %1921 = vmatpush1.msra.mxu0 0.0
      %1922 = vmatprep.mubr.f32.mxu0 0.0
      %1923 = vmatmul.mubr.f32.gmra.mrb[0].mxu0 %v1853
      %v1924 = vpop.f32.mrb[0].mxu0
      %v1925 = vadd.f32 0.0, %v1924
      %v1926 = vpop.f32.mrb[0].mxu0
      %1927 = vmatprep.mubr.f32.mxu0 0.0
      %1928 = vmatmul.mubr.f32.gmra.mrb[0].mxu0 %v1856
      %v1929 = vpop.f32.mrb[0].mxu0
      %v1930 = vadd.f32 0.0, %v1929
      %v1931 = vpop.f32.mrb[0].mxu0
      %1932 = vdwg.mxu0
      %v1933 = vsel %vm1057, %v1925, 0.0
      %v1934 = vsel %vm1057, %v1930, 0.0
      %v1935 = vadd.f32 %v1933, %v1934
      %v1936 = vrot.slane %v1935, 4
      %v1937 = vadd.f32 %v1935, %v1936
      %v1938 = vrot.slane %v1937, 2
      %v1939 = vadd.f32 %v1937, %v1938
      %v1940 = vrot.slane %v1939, 1
      %v1941 = vadd.f32 %v1939, %v1940
      %v1942 = vsub.f32 %v1850, %v1941
      %v1943 = vsub.f32 %v1851, %v1941
      %v1944 = vmul.f32 %v1942, %v1942
      %v1945 = vmul.f32 %v1943, %v1943
      %v1947 = vsel %vm1057, %v1944, 0
      %v1950 = vsel %vm1057, %v1945, 0
      %1952 = vmatprep.subr.mxu0 0.0
      %1953 = vmatpush1.msra.mxu0 %v524
      %1954 = vmatprep.subr.mxu0 0.0
      %1955 = vmatpush1.msra.mxu0 %v525
      %1956 = vmatprep.subr.mxu0 0.0
      %1957 = vmatpush1.msra.mxu0 %v526
      %1958 = vmatprep.subr.mxu0 0.0
      %1959 = vmatpush1.msra.mxu0 %v527
      %1960 = vmatprep.subr.mxu0 0.0
      %1961 = vmatpush1.msra.mxu0 0.0
      %1962 = vmatprep.subr.mxu0 0.0
      %1963 = vmatpush1.msra.mxu0 0.0
      %1964 = vmatprep.subr.mxu0 0.0
      %1965 = vmatpush1.msra.mxu0 0.0
      %1966 = vmatprep.subr.mxu0 0.0
      %1967 = vmatpush1.msra.mxu0 0.0
      %1968 = vmatprep.subr.mxu0 0.0
      %1969 = vmatpush1.msra.mxu0 0.0
      %1970 = vmatprep.subr.mxu0 0.0
      %1971 = vmatpush1.msra.mxu0 0.0
      %1972 = vmatprep.subr.mxu0 0.0
      %1973 = vmatpush1.msra.mxu0 0.0
      %1974 = vmatprep.subr.mxu0 0.0
      %1975 = vmatpush1.msra.mxu0 0.0
      %1976 = vmatprep.subr.mxu0 0.0
      %1977 = vmatpush1.msra.mxu0 0.0
      %1978 = vmatprep.subr.mxu0 0.0
      %1979 = vmatpush1.msra.mxu0 0.0
      %1980 = vmatprep.subr.mxu0 0.0
      %1981 = vmatpush1.msra.mxu0 0.0
      %1982 = vmatprep.subr.mxu0 0.0
      %1983 = vmatpush1.msra.mxu0 0.0
      %1984 = vmatprep.subr.mxu0 0.0
      %1985 = vmatpush1.msra.mxu0 0.0
      %1986 = vmatprep.subr.mxu0 0.0
      %1987 = vmatpush1.msra.mxu0 0.0
      %1988 = vmatprep.subr.mxu0 0.0
      %1989 = vmatpush1.msra.mxu0 0.0
      %1990 = vmatprep.subr.mxu0 0.0
      %1991 = vmatpush1.msra.mxu0 0.0
      %1992 = vmatprep.subr.mxu0 0.0
      %1993 = vmatpush1.msra.mxu0 0.0
      %1994 = vmatprep.subr.mxu0 0.0
      %1995 = vmatpush1.msra.mxu0 0.0
      %1996 = vmatprep.subr.mxu0 0.0
      %1997 = vmatpush1.msra.mxu0 0.0
      %1998 = vmatprep.subr.mxu0 0.0
      %1999 = vmatpush1.msra.mxu0 0.0
      %2000 = vmatprep.subr.mxu0 0.0
      %2001 = vmatpush1.msra.mxu0 0.0
      %2002 = vmatprep.subr.mxu0 0.0
      %2003 = vmatpush1.msra.mxu0 0.0
      %2004 = vmatprep.subr.mxu0 0.0
      %2005 = vmatpush1.msra.mxu0 0.0
      %2006 = vmatprep.subr.mxu0 0.0
      %2007 = vmatpush1.msra.mxu0 0.0
      %2008 = vmatprep.subr.mxu0 0.0
      %2009 = vmatpush1.msra.mxu0 0.0
      %2010 = vmatprep.subr.mxu0 0.0
      %2011 = vmatpush1.msra.mxu0 0.0
      %2012 = vmatprep.subr.mxu0 0.0
      %2013 = vmatpush1.msra.mxu0 0.0
      %2014 = vmatprep.subr.mxu0 0.0
      %2015 = vmatpush1.msra.mxu0 0.0
      %2016 = vmatprep.mubr.f32.mxu0 0.0
      %2017 = vmatmul.mubr.f32.gmra.mrb[0].mxu0 %v1947
      %v2018 = vpop.f32.mrb[0].mxu0
      %v2019 = vadd.f32 0.0, %v2018
      %v2020 = vpop.f32.mrb[0].mxu0
      %2021 = vmatprep.mubr.f32.mxu0 0.0
      %2022 = vmatmul.mubr.f32.gmra.mrb[0].mxu0 %v1950
      %v2023 = vpop.f32.mrb[0].mxu0
      %v2024 = vadd.f32 0.0, %v2023
      %v2025 = vpop.f32.mrb[0].mxu0
      %2026 = vdwg.mxu0
      %v2027 = vsel %vm1057, %v2019, 0.0
      %v2028 = vsel %vm1057, %v2024, 0.0
      %v2029 = vadd.f32 %v2027, %v2028
      %v2030 = vrot.slane %v2029, 4
      %v2031 = vadd.f32 %v2029, %v2030
      %v2032 = vrot.slane %v2031, 2
      %v2033 = vadd.f32 %v2031, %v2032
      %v2034 = vrot.slane %v2033, 1
      %v2035 = vadd.f32 %v2033, %v2034
      %v2036 = vadd.f32 %v2035, 1e-05
      %v2037 = vrsqrt.pop %v2036
      %v2038 = vmul.f32 %v1942, %v2037
      %v2039 = vmul.f32 %v1943, %v2037
      %v2040 = vld [vmem:[%s10] sm:$0x1]
      %v2042 = vlaneseq
      %v2043 = vshrl.u32 %v2042, 7
      %v2044 = vsub.s32 0, %v2043
      %v2045 = vrot.slane %v2040, %v2044
      %v2047 = vmul.f32 %v2038, %v2045
      %v2048 = vmul.f32 %v2039, %v2045
      %v2049 = vld [vmem:[%s11] sm:$0x1]
      %v2051 = vlaneseq
      %v2052 = vshrl.u32 %v2051, 7
      %v2053 = vsub.s32 0, %v2052
      %v2054 = vrot.slane %v2049, %v2053
      %v2056 = vadd.f32 %v2047, %v2054
      %v2057 = vadd.f32 %v2048, %v2054
      %v2058 = vmax.f32 %v2056, 0.0
      %v2059 = vmax.f32 %v2057, 0.0
      %vm2060 = vcmp.ne.f32.partialorder %v2056, %v2056
      %vm2061 = vcmp.ne.f32.partialorder %v2057, %v2057
      %v2062 = vadd.f32 %v2056, 0.0
      %v2063 = vadd.f32 %v2057, 0.0
      %v2064 = vand.u32 2147483647, %v2056
      %v2065 = vand.u32 2147483647, %v2057
      %v2066 = vsub.f32 0.0, %v2064
      %v2067 = vsub.f32 0.0, %v2065
      %v2068 = vmul.f32 %v2066, 1.442695
      %v2069 = vpow.pop %v2068
      %v2070 = vmul.f32 %v2067, 1.442695
      %v2071 = vpow.pop %v2070
      %v2072 = vadd.f32 %v2069, 1.0
      %v2073 = vlog2.pop %v2072
      %v2074 = vmul.f32 %v2073, 0.6931472
      %v2075 = vmul.f32 -0.5, %v2069
      %v2076 = vadd.f32 %v2075, 1.0
      %v2077 = vmul.f32 %v2076, %v2069
      %v2078 = vand.u32 2147483647, %v2069
      %vm2079 = vcmp.lt.f32.partialorder %v2078, 0.0004427343
      %v2080 = vsel %vm2079, %v2077, %v2074
      %v2081 = vadd.f32 %v2071, 1.0
      %v2082 = vlog2.pop %v2081
      %v2083 = vmul.f32 %v2082, 0.6931472
      %v2084 = vmul.f32 -0.5, %v2071
      %v2085 = vadd.f32 %v2084, 1.0
      %v2086 = vmul.f32 %v2085, %v2071
      %v2087 = vand.u32 2147483647, %v2071
      %vm2088 = vcmp.lt.f32.partialorder %v2087, 0.0004427343
      %v2089 = vsel %vm2088, %v2086, %v2083
      %v2090 = vadd.f32 %v2058, %v2080
      %v2091 = vadd.f32 %v2059, %v2089
      %v2092 = vsel %vm2060, %v2062, %v2090
      %v2093 = vsel %vm2061, %v2063, %v2091
      %v2094 = vtanh.pop %v2092
      %v2095 = vtanh.pop %v2093
      %v2096 = vmul.f32 %v2056, %v2094
      %v2097 = vmul.f32 %v2057, %v2095
      %v2098 = vld [vmem:[%s13] sm:$0x3]
      %v2099 = vld [vmem:[%s14] sm:$0x1]
      %v2101 = vlaneseq
      %v2102 = vshrl.u32 %v2101, 7
      %v2103 = vsub.s32 0, %v2102
      %v2104 = vrot.slane %v2099, %v2103
      %v2107 = vsel %vm640, %v530, 0
      %v2110 = vsel %vm644, %v2098, 0
      %2112 = vmatprep.subr.bf16.mxu0 0
      %2113 = vmatpush1.bf16.msra.mxu0 %v2110
      %2114 = vmatprep.subr.bf16.mxu0 0
      %2115 = vmatpush1.bf16.msra.mxu0 0
      %2116 = vmatprep.subr.bf16.mxu0 0
      %2117 = vmatpush1.bf16.msra.mxu0 0
      %2118 = vmatprep.subr.bf16.mxu0 0
      %2119 = vmatpush1.bf16.msra.mxu0 0
      %2120 = vmatprep.subr.bf16.mxu0 0
      %2121 = vmatpush1.bf16.msra.mxu0 0
      %2122 = vmatprep.subr.bf16.mxu0 0
      %2123 = vmatpush1.bf16.msra.mxu0 0
      %2124 = vmatprep.subr.bf16.mxu0 0
      %2125 = vmatpush1.bf16.msra.mxu0 0
      %2126 = vmatprep.subr.bf16.mxu0 0
      %2127 = vmatpush1.bf16.msra.mxu0 0
      %2128 = vmatprep.subr.bf16.mxu0 0
      %2129 = vmatpush1.bf16.msra.mxu0 0
      %2130 = vmatprep.subr.bf16.mxu0 0
      %2131 = vmatpush1.bf16.msra.mxu0 0
      %2132 = vmatprep.subr.bf16.mxu0 0
      %2133 = vmatpush1.bf16.msra.mxu0 0
      %2134 = vmatprep.subr.bf16.mxu0 0
      %2135 = vmatpush1.bf16.msra.mxu0 0
      %2136 = vmatprep.subr.bf16.mxu0 0
      %2137 = vmatpush1.bf16.msra.mxu0 0
      %2138 = vmatprep.subr.bf16.mxu0 0
      %2139 = vmatpush1.bf16.msra.mxu0 0
      %2140 = vmatprep.subr.bf16.mxu0 0
      %2141 = vmatpush1.bf16.msra.mxu0 0
      %2142 = vmatprep.subr.bf16.mxu0 0
      %2143 = vmatpush1.bf16.msra.mxu0 0
      %2144 = vmatprep.mubr.bf16.mxu0 0
      %2145 = vmatmul.mubr.bf16.gmra.mrb[0].mxu0 %v2107
      %v2146 = vpop.f32.mrb[0].mxu0
      %v2147 = vadd.f32 %v2104, %v2146
      %v2148 = vpop.f32.mrb[0].mxu0
      %v2149 = vpop.f32.mrb[0].mxu0
      %v2150 = vadd.f32 %v2104, %v2149
      %v2151 = vpop.f32.mrb[0].mxu0
      %2152 = vdwg.mxu0
      %v2153 = vadd.f32 %v2096, %v2147
      %v2154 = vadd.f32 %v2097, %v2150
      %2155 = vst.msk [vmem:[%s522] sm:$0xff] %vm1057, %v2153
      %2156 = vst.msk [vmem:[%s522 + $0x8] sm:$0xff] %vm1057, %v2154
      %p2157 = scmp.lt.s32.totalorder %s26, 1
      %s2158 = scalar_select %p2157, %s26, 1
      %s2159 = smul.addr %s2158, 2
      %s2160 = smul.addr %s2159, 8
      %s2161 = scalar_lea.vmem %s15, %s2160
      // Predicated region
      $region81: #{_lambda_.2} parent=79 // pred_check
        %p2162 = pneg %p374
      $region82: #{_lambda_.2} parent=79 // pred_check_branch
        %2164 = sbr.rel (%p2162) target = $region84
      $region83: #{_lambda_.2} parent=79 // pred_region
        _
      $region84: #{_lambda_.2} parent=79 // pred_fallthru
        _
    $region80: #{_lambda_.2} parent=5 // pred_fallthru
      _
    %p2165 = scmp.le.s32.totalorder 2, %s21
    // Predicated region
    $region85: #{_lambda_.2} parent=5 // pred_check
      %p2166 = pneg %p2165
    $region86: #{_lambda_.2} parent=5 // pred_check_branch
      %2168 = sbr.rel (%p2166) target = $region88
    $region87: #{_lambda_.2} parent=5 // pred_region
      %s2169 = ssub.s32 %s21, 2
      // Predicated region
      $region89: #{_lambda_.2} parent=87 // pred_check
        %p2170 = pneg %p380
      $region90: #{_lambda_.2} parent=87 // pred_check_branch
        %2172 = sbr.rel (%p2170) target = $region92
      $region91: #{_lambda_.2} parent=87 // pred_region
        %p2173 = scmp.lt.s32.totalorder %s27, 1
        %s2174 = scalar_select %p2173, %s27, 1
        %s2175 = smul.addr %s2174, 2
        %s2176 = smul.addr %s2175, 8
        %s2177 = scalar_lea.vmem %s15, %s2176
      $region92: #{_lambda_.2} parent=87 // pred_fallthru
        _
    $region88: #{_lambda_.2} parent=5 // pred_fallthru
      _
  $region6: #{_lambda_.2} parent=0 // loop_footer
    %s25 = sadd.s32 1, %s21
  $region7: #{_lambda_.2} parent=0 // loop_footer_branch
    %20 = sbr.rel target = $region3
  $region8: #{_lambda_.2} parent=0 // loop_exit
    _

</llo_original>
